<compile_context>
chip_gen: v7x
topology: tpu7x:2x2x1
jax: 0.10.0
libtpu: 0.0.40
codegen_flags: <defaults>
</compile_context>

<pallas_src>
import functools

import jax
import jax.numpy as jnp
import numpy as np
from jax import lax
from jax.experimental import pallas as pl
from jax.experimental.pallas import tpu as pltpu

# TODO(synk): the original module reads config.route_iterations / config.sigma, which are
# not defined in the provided snippet; they are pinned here as compile-time constants.
ROUTE_ITERATIONS = 3
SIGMA = 1.0
_EPS = 1e-12  # deviation from torch: squash uses rsqrt(||s||^2 + eps); torch has no eps and
              # returns NaN for an exactly-zero capsule vector (kernel returns 0 instead).


def _squash_last(s):
    """squash(tensor, dim=-1) exactly as the torch reference (no eps) — used by the ref."""
    squared_norm = jnp.sum(s * s, axis=-1, keepdims=True)
    scale = squared_norm / (1.0 + squared_norm)
    return scale * s / jnp.sqrt(squared_norm)


def capsule_kernel(x_ref, w_ref, bias_ref, sel_ref, selt_ref, o_ref, priors_ref,
                   *, route_iterations, sigma):
    """One grid step = B_TILE batch elements; all NC capsules computed together.

    x_ref:      (NR, B_TILE, ID_pad)     pre-transposed poses (matches batched-dot LHS)
    w_ref:      (NR, ID_pad, NCOD_pad)   routing weights, capsules folded onto lanes
    bias_ref:   (1, NCOD_pad)            capsule biases (f32)
    sel_ref:    (NC, NCOD_pad)           0/1 capsule-group selector (host-built)
    selt_ref:   (NCOD_pad, NC)           its transpose
    o_ref:      (B_TILE, NCOD_pad)       lane-dense output block
    priors_ref: (B_TILE, NR, NCOD_pad)   explicit f32 VMEM scratch for priors
    """
    bt, nr, ncod_pad = priors_ref.shape
    nc = sel_ref.shape[0]
    inv_sigma2 = 1.0 / (sigma * sigma)

    # priors[b, r, l] = sum_i x[b, r, i] * w[r, i, l]
    # Route-node-batched MXU matmul with M = B_TILE (not M = 1).
    pnrb = lax.dot_general(
        x_ref[...], w_ref[...],
        dimension_numbers=(((2,), (1,)), ((0,), (0,))),
        preferred_element_type=jnp.float32)                       # (NR, B_TILE, NCOD_pad)

    # Relayout (NR, B_TILE, NCOD_pad) -> (B_TILE, NR, NCOD_pad) into the explicit scratch.
    # Done once per grid step as B_TILE unrolled sublane-slices to stay on the simplest
    # Mosaic relayout path (B_TILE is capped in the wrapper, so the unroll stays small).
    for b in range(bt):
        priors_ref[b] = pnrb[:, b, :]

    priors = priors_ref[...]                                       # (B_TILE, NR, NCOD_pad) f32
    sel = sel_ref[...]                                             # (NC, NCOD_pad) f32
    sel_t = selt_ref[...]                                          # (NCOD_pad, NC) f32
    bias = bias_ref[...].astype(jnp.float32)                       # (1, NCOD_pad)

    # ||p||^2 per (batch, capsule, route node), hoisted out of the routing loop and produced
    # directly in (NC, NR) orientation on the MXU.
    sel_b = jnp.broadcast_to(sel[None], (bt, nc, ncod_pad))        # hoisted (no per-iter bcast)
    psq = jnp.einsum('bcl,brl->bcr', sel_b, priors * priors,
                     preferred_element_type=jnp.float32)           # (B_TILE, NC, NR)

    # Routing state: route nodes on the lane axis -> softmax / reductions are lane ops.
    b_log = jnp.zeros((bt, nc, nr), jnp.float32)
    v = jnp.zeros((bt, ncod_pad), jnp.float32)

    for it in range(route_iterations):
        # softmax over route nodes (lane reductions), f32.
        m = jnp.max(b_log, axis=-1, keepdims=True)
        e = jnp.exp(b_log - m)
        probs = e / jnp.sum(e, axis=-1, keepdims=True)             # (B_TILE, NC, NR)

        # s[b, l] = sum_r probs[b, c(l), r] * priors[b, r, l]
        # One batched MXU matmul + block-diagonal mask (NC-fold redundant flops; the MXU is
        # otherwise idle here — revisit if num_capsules grows large).
        mixed = jnp.einsum('bcr,brl->bcl', probs, priors,
                           preferred_element_type=jnp.float32)     # (B_TILE, NC, NCOD_pad)
        s = jnp.sum(mixed * sel[None], axis=1)                     # (B_TILE, NCOD_pad)

        # squash per capsule: group norms via selector matmuls; rsqrt runs on the EUP.
        sq = jnp.dot(s * s, sel_t, preferred_element_type=jnp.float32)     # (B_TILE, NC)
        scale_c = sq / (1.0 + sq) * lax.rsqrt(sq + _EPS)                   # (B_TILE, NC)
        scale = jnp.dot(scale_c, sel, preferred_element_type=jnp.float32)  # (B_TILE, NCOD_pad)
        v = scale * s + bias                                               # (B_TILE, NCOD_pad)

        if it + 1 < route_iterations:
            # ||p - v||^2 = ||p||^2 - 2 p.v + ||v||^2, produced directly in (NC, NR)
            # orientation on the MXU: no per-iteration diff/square streams, no transposes.
            # (The torch loop also updates B on the last iteration, but that update is dead.)
            vw = v[:, None, :] * sel[None]                                  # (B_TILE, NC, NCOD_pad)
            pv = jnp.einsum('bcl,brl->bcr', vw, priors,
                            preferred_element_type=jnp.float32)             # (B_TILE, NC, NR)
            vsq = jnp.dot(v * v, sel_t, preferred_element_type=jnp.float32) # (B_TILE, NC)
            dist = psq - 2.0 * pv + vsq[:, :, None]
            b_log = b_log + jnp.exp(-dist * inv_sigma2)

    o_ref[...] = v.astype(o_ref.dtype)


def capsule_layer(x, route_weights, capsule_bias, *,
                  route_iterations=ROUTE_ITERATIONS, sigma=SIGMA,
                  matmul_dtype=jnp.bfloat16, b_tile=None):
    """Pallas CapsuleLayer forward. Returns (batch, num_capsules, output_dim)."""
    batch, nr, idim = x.shape
    nc, nr2, idim2, od = route_weights.shape
    assert (nr, idim) == (nr2, idim2)
    ncod = nc * od

    # Lane/sublane padding: capsules folded onto a lane-dense last dim padded to 128, or to a
    # multiple of 256 when NCOD > 128 so both 256-wide MXU tiles on v6e/v7x fill per pass.
    ncod_pad = 128 if ncod <= 128 else (-(-ncod // 256) * 256)
    id_pad = max(8, -(-idim // 8) * 8)    # weight-contraction (sublane) dim padding
    # TODO(synk): for very small input_dim (real CapsNet ID=8) padding ID to 128 would make
    # x loads fully lane-dense at the cost of 16x weight VMEM; kept at sublane padding here.

    # --- weight / bias / selector layout plumbing (host side, done once) ---
    w_folded = jnp.transpose(route_weights, (1, 2, 0, 3)).reshape(nr, idim, ncod)
    w_folded = jnp.pad(w_folded, ((0, 0), (0, id_pad - idim), (0, ncod_pad - ncod)))
    w_folded = w_folded.astype(matmul_dtype)
    bias_row = jnp.pad(capsule_bias.reshape(1, ncod),
                       ((0, 0), (0, ncod_pad - ncod))).astype(jnp.float32)

    sel_np = np.zeros((nc, ncod_pad), np.float32)      # hoisted out of the kernel: built once
    for c in range(nc):
        sel_np[c, c * od:(c + 1) * od] = 1.0
    sel = jnp.asarray(sel_np)
    sel_t = jnp.asarray(np.ascontiguousarray(sel_np.T))

    # --- VMEM budget (generation-aware) and batch-tile selection ---
    try:
        vmem_phys = int(pltpu.get_tpu_info().vmem_capacity_bytes)
    except Exception:
        vmem_phys = 64 << 20                            # conservative: v7x per-TC VMEM
    vmem_limit = min((vmem_phys * 3) // 4, 96 << 20)    # 96 MiB on v5e/v6e, 48 MiB on v7x

    w_isz = jnp.dtype(matmul_dtype).itemsize
    fixed_bytes = 2 * nr * id_pad * ncod_pad * w_isz            # double-buffered weights
    per_b_bytes = (4 * nr * ncod_pad * 4                        # priors scratch + live temps
                   + 2 * nr * id_pad * w_isz                    # double-buffered x tile
                   + 4 * ncod_pad * 4)                          # s / v / output row
    if b_tile is None:
        budget = max(vmem_limit // 2 - fixed_bytes, per_b_bytes)
        b_tile = int(max(1, min(batch, budget // per_b_bytes)))
        if batch >= 2:
            b_tile = min(b_tile, max(1, (batch + 1) // 2))      # grid >= 2: both v7x TCs busy
        b_tile = min(b_tile, 32)                                # keep the relayout unroll sane
    b_tile = max(1, min(int(b_tile), batch))
    g = -(-batch // b_tile)
    batch_p = g * b_tile

    # --- x layout: (NR, G, B_TILE, ID_pad), pre-transposed so the kernel's batched-dot LHS
    #     needs no in-kernel relayout; batch zero-padded to a multiple of B_TILE. ---
    xp = jnp.pad(x, ((0, batch_p - batch), (0, 0), (0, id_pad - idim))).astype(matmul_dtype)
    x_t = jnp.transpose(xp, (1, 0, 2)).reshape(nr, g, b_tile, id_pad)

    kernel = functools.partial(capsule_kernel,
                               route_iterations=route_iterations, sigma=sigma)

    out = pl.pallas_call(
        kernel,
        out_shape=jax.ShapeDtypeStruct((g, b_tile, ncod_pad), x.dtype),
        grid_spec=pltpu.PrefetchScalarGridSpec(
            num_scalar_prefetch=0,
            grid=(g,),                                           # one step per batch tile
            in_specs=[
                pl.BlockSpec((nr, None, b_tile, id_pad), lambda i: (0, i, 0, 0)),
                # Constant index maps: weights / bias / selectors are DMA'd once and stay
                # VMEM-resident across the whole grid.
                # TODO(synk): pipeline_mode=pl.Buffered(1) would single-buffer these constant
                # blocks and halve their footprint; left at the default double-buffering to
                # stay on the most conservative lowering path.
                pl.BlockSpec((nr, id_pad, ncod_pad), lambda i: (0, 0, 0)),
                pl.BlockSpec((1, ncod_pad), lambda i: (0, 0)),
                pl.BlockSpec((nc, ncod_pad), lambda i: (0, 0)),
                pl.BlockSpec((ncod_pad, nc), lambda i: (0, 0)),
            ],
            out_specs=pl.BlockSpec((None, b_tile, ncod_pad), lambda i: (i, 0, 0)),
            scratch_shapes=[pltpu.VMEM((b_tile, nr, ncod_pad), jnp.float32)],
        ),
        compiler_params=pltpu.CompilerParams(
            dimension_semantics=("parallel",),
            vmem_limit_bytes=int(vmem_limit)),
    )(x_t, w_folded, bias_row, sel, sel_t)

    out = out.reshape(batch_p, ncod_pad)[:batch, :ncod]
    return out.reshape(batch, nc, od)


def capsule_ref(x, route_weights, capsule_bias,
                route_iterations=ROUTE_ITERATIONS, sigma=SIGMA):
    """Pure-JAX reference mirroring the torch forward."""
    nc, _, _, od = route_weights.shape
    priors = jnp.einsum('bri,crio->bcro', x, route_weights,
                        precision=lax.Precision.HIGHEST)             # (B, NC, NR, OD)
    b_log = jnp.zeros(priors.shape[:3] + (1,), jnp.float32)
    outputs = None
    for _ in range(route_iterations):
        probs = jax.nn.softmax(b_log, axis=2)
        s = jnp.sum(priors * probs, axis=2, keepdims=True)           # (B, NC, 1, OD)
        outputs = _squash_last(s) + capsule_bias.reshape(1, nc, 1, od)
        dist = jnp.sum((priors - outputs) ** 2, axis=-1, keepdims=True)
        b_log = b_log + jnp.exp(-dist / (sigma ** 2))
    return jnp.squeeze(outputs, axis=2)                              # (B, NC, OD)


if __name__ == "__main__":
    key = jax.random.PRNGKey(0)
    batch, num_route_nodes, input_dim = 8, 8, 32
    num_capsules, output_dim = 4, 16

    k_x, k_w = jax.random.split(key)
    x = jax.random.normal(k_x, (batch, num_route_nodes, input_dim), jnp.float32)
    # nn.Parameter(torch.randn(...)) -> deterministic normal init here
    route_weights = jax.random.normal(
        k_w, (num_capsules, num_route_nodes, input_dim, output_dim), jnp.float32)
    # nn.Parameter(torch.zeros(...))
    capsule_bias = jnp.zeros((num_capsules, 1, 1, output_dim), jnp.float32)

    ref = capsule_ref(x, route_weights, capsule_bias)

    # f32 matmul path: tight check against the pure-JAX reference (MXU vs XLA accumulation
    # order only differs in rounding).
    out_f32 = capsule_layer(x, route_weights, capsule_bias, matmul_dtype=jnp.float32)
    jax.block_until_ready(out_f32)
    np.testing.assert_allclose(np.asarray(out_f32), np.asarray(ref), rtol=1e-3, atol=1e-3)

    # Default (production) path: bf16 weights/x feed the priors MXU matmul, routing math in
    # f32 — looser tolerance against the f32 reference per the bf16 inputs.
    out_bf16 = capsule_layer(x, route_weights, capsule_bias)
    jax.block_until_ready(out_bf16)
    np.testing.assert_allclose(np.asarray(out_bf16), np.asarray(ref), rtol=2e-2, atol=2e-2)

    print("KERNEL_OK")
</pallas_src>

<mosaic_0001>
module attributes {stable_mosaic.version = 11 : i64} {
  func.func @capsule_kernel(%arg0: i32, %arg1: memref<8x1x4x32xf32, #tpu.memory_space<vmem>>, %arg2: memref<8x32x128xf32, #tpu.memory_space<vmem>>, %arg3: memref<1x128xf32, #tpu.memory_space<vmem>>, %arg4: memref<4x128xf32, #tpu.memory_space<vmem>>, %arg5: memref<128x4xf32, #tpu.memory_space<vmem>>, %arg6: memref<1x4x128xf32, #tpu.memory_space<vmem>>, %arg7: memref<4x8x128xf32, #tpu.memory_space<vmem>>) attributes {dimension_semantics = [#tpu.dimension_semantics<parallel>], iteration_bounds = array<i64: 2>, scalar_prefetch = 0 : i64, scratch_operands = 1 : i64, tpu.core_type = #tpu.core_type<tc>, window_params = [{transform_indices = @transform_0, window_bounds = array<i64: 8, 1, 4, 32>}, {pipeline_mode = #tpu.pipeline_mode<synchronous>, transform_indices = @transform_1, window_bounds = array<i64: 8, 32, 128>}, {pipeline_mode = #tpu.pipeline_mode<synchronous>, transform_indices = @transform_2, window_bounds = array<i64: 1, 128>}, {pipeline_mode = #tpu.pipeline_mode<synchronous>, transform_indices = @transform_3, window_bounds = array<i64: 4, 128>}, {pipeline_mode = #tpu.pipeline_mode<synchronous>, transform_indices = @transform_4, window_bounds = array<i64: 128, 4>}, {transform_indices = @transform_5, window_bounds = array<i64: 1, 4, 128>}]} {
    %c0 = arith.constant 0 : index
    %c0_0 = arith.constant 0 : index
    %c0_1 = arith.constant 0 : index
    %c0_2 = arith.constant 0 : index
    %0 = vector.load %arg1[%c0, %c0_0, %c0_1, %c0_2] : memref<8x1x4x32xf32, #tpu.memory_space<vmem>>, vector<8x1x4x32xf32>
    %1 = vector.shape_cast %0 : vector<8x1x4x32xf32> to vector<8x4x32xf32>
    %c0_3 = arith.constant 0 : index
    %c0_4 = arith.constant 0 : index
    %c0_5 = arith.constant 0 : index
    %2 = vector.load %arg2[%c0_3, %c0_4, %c0_5] : memref<8x32x128xf32, #tpu.memory_space<vmem>>, vector<8x32x128xf32>
    %cst = arith.constant dense<0.000000e+00> : vector<8x4x128xf32>
    %3 = tpu.matmul %1, %2, %cst {dimension_numbers = #tpu.dot_dimension_numbers<[2], [1], [1], [2], [0, 0, 0, 1, 1, 2], [0], [0]>} : vector<8x4x32xf32>, vector<8x32x128xf32>, vector<8x4x128xf32> -> vector<8x4x128xf32>
    %4 = vector.extract_strided_slice %3 {offsets = [0, 0, 0], sizes = [8, 1, 128], strides = [1, 1, 1]} : vector<8x4x128xf32> to vector<8x1x128xf32>
    %5 = vector.shape_cast %4 : vector<8x1x128xf32> to vector<8x128xf32>
    %c0_6 = arith.constant 0 : index
    %c0_7 = arith.constant 0 : index
    %c0_8 = arith.constant 0 : index
    %6 = vector.load %arg7[%c0_6, %c0_7, %c0_8] : memref<4x8x128xf32, #tpu.memory_space<vmem>>, vector<1x8x128xf32>
    %7 = vector.shape_cast %6 : vector<1x8x128xf32> to vector<8x128xf32>
    %8 = vector.shape_cast %5 : vector<8x128xf32> to vector<1x8x128xf32>
    tpu.vector_store %arg7[%c0_6, %c0_7, %c0_8], %8 {strides = array<i32>} : memref<4x8x128xf32, #tpu.memory_space<vmem>>, vector<1x8x128xf32>,
    %9 = vector.extract_strided_slice %3 {offsets = [0, 1, 0], sizes = [8, 1, 128], strides = [1, 1, 1]} : vector<8x4x128xf32> to vector<8x1x128xf32>
    %10 = vector.shape_cast %9 : vector<8x1x128xf32> to vector<8x128xf32>
    %c1 = arith.constant 1 : index
    %c0_9 = arith.constant 0 : index
    %c0_10 = arith.constant 0 : index
    %11 = vector.load %arg7[%c1, %c0_9, %c0_10] : memref<4x8x128xf32, #tpu.memory_space<vmem>>, vector<1x8x128xf32>
    %12 = vector.shape_cast %11 : vector<1x8x128xf32> to vector<8x128xf32>
    %13 = vector.shape_cast %10 : vector<8x128xf32> to vector<1x8x128xf32>
    tpu.vector_store %arg7[%c1, %c0_9, %c0_10], %13 {strides = array<i32>} : memref<4x8x128xf32, #tpu.memory_space<vmem>>, vector<1x8x128xf32>,
    %14 = vector.extract_strided_slice %3 {offsets = [0, 2, 0], sizes = [8, 1, 128], strides = [1, 1, 1]} : vector<8x4x128xf32> to vector<8x1x128xf32>
    %15 = vector.shape_cast %14 : vector<8x1x128xf32> to vector<8x128xf32>
    %c2 = arith.constant 2 : index
    %c0_11 = arith.constant 0 : index
    %c0_12 = arith.constant 0 : index
    %16 = vector.load %arg7[%c2, %c0_11, %c0_12] : memref<4x8x128xf32, #tpu.memory_space<vmem>>, vector<1x8x128xf32>
    %17 = vector.shape_cast %16 : vector<1x8x128xf32> to vector<8x128xf32>
    %18 = vector.shape_cast %15 : vector<8x128xf32> to vector<1x8x128xf32>
    tpu.vector_store %arg7[%c2, %c0_11, %c0_12], %18 {strides = array<i32>} : memref<4x8x128xf32, #tpu.memory_space<vmem>>, vector<1x8x128xf32>,
    %19 = vector.extract_strided_slice %3 {offsets = [0, 3, 0], sizes = [8, 1, 128], strides = [1, 1, 1]} : vector<8x4x128xf32> to vector<8x1x128xf32>
    %20 = vector.shape_cast %19 : vector<8x1x128xf32> to vector<8x128xf32>
    %c3 = arith.constant 3 : index
    %c0_13 = arith.constant 0 : index
    %c0_14 = arith.constant 0 : index
    %21 = vector.load %arg7[%c3, %c0_13, %c0_14] : memref<4x8x128xf32, #tpu.memory_space<vmem>>, vector<1x8x128xf32>
    %22 = vector.shape_cast %21 : vector<1x8x128xf32> to vector<8x128xf32>
    %23 = vector.shape_cast %20 : vector<8x128xf32> to vector<1x8x128xf32>
    tpu.vector_store %arg7[%c3, %c0_13, %c0_14], %23 {strides = array<i32>} : memref<4x8x128xf32, #tpu.memory_space<vmem>>, vector<1x8x128xf32>,
    %c0_15 = arith.constant 0 : index
    %c0_16 = arith.constant 0 : index
    %c0_17 = arith.constant 0 : index
    %24 = vector.load %arg7[%c0_15, %c0_16, %c0_17] : memref<4x8x128xf32, #tpu.memory_space<vmem>>, vector<4x8x128xf32>
    %c0_18 = arith.constant 0 : index
    %c0_19 = arith.constant 0 : index
    %25 = vector.load %arg4[%c0_18, %c0_19] : memref<4x128xf32, #tpu.memory_space<vmem>>, vector<4x128xf32>
    %c0_20 = arith.constant 0 : index
    %c0_21 = arith.constant 0 : index
    %26 = vector.load %arg5[%c0_20, %c0_21] : memref<128x4xf32, #tpu.memory_space<vmem>>, vector<128x4xf32>
    %c0_22 = arith.constant 0 : index
    %c0_23 = arith.constant 0 : index
    %27 = vector.load %arg3[%c0_22, %c0_23] : memref<1x128xf32, #tpu.memory_space<vmem>>, vector<1x128xf32>
    %28 = vector.shape_cast %25 : vector<4x128xf32> to vector<1x4x128xf32>
    %29 = vector.shape_cast %28 : vector<1x4x128xf32> to vector<1x4x128xf32>
    %30 = vector.broadcast %29 : vector<1x4x128xf32> to vector<4x4x128xf32>
    %31 = arith.mulf %24, %24 : vector<4x8x128xf32>
    "tpu.trace_start"() <{level = 10 : i32, message = "bcl,brl->bcr"}> : () -> ()
    %cst_24 = arith.constant dense<0.000000e+00> : vector<4x4x8xf32>
    %32 = tpu.matmul %30, %31, %cst_24 {dimension_numbers = #tpu.dot_dimension_numbers<[2], [2], [1], [1], [0, 0, 0, 1, 1, 1], [0], [0]>} : vector<4x4x128xf32>, vector<4x8x128xf32>, vector<4x4x8xf32> -> vector<4x4x8xf32>
    %cst_25 = arith.constant 0.000000e+00 : f32
    "tpu.trace_stop"() : () -> ()
    %33 = vector.broadcast %cst_25 : f32 to vector<4x4x8xf32>
    %cst_26 = arith.constant dense<0xFF800000> : vector<4x4xf32>
    %34 = vector.multi_reduction <maximumf>, %33, %cst_26 [2] : vector<4x4x8xf32> to vector<4x4xf32>
    %35 = vector.shape_cast %34 : vector<4x4xf32> to vector<4x4x1xf32>
    %36 = vector.broadcast %35 : vector<4x4x1xf32> to vector<4x4x8xf32>
    %37 = arith.subf %33, %36 : vector<4x4x8xf32>
    %38 = math.exp %37 : vector<4x4x8xf32>
    %cst_27 = arith.constant dense<0.000000e+00> : vector<4x4xf32>
    %39 = vector.multi_reduction <add>, %38, %cst_27 [2] : vector<4x4x8xf32> to vector<4x4xf32>
    %40 = vector.shape_cast %39 : vector<4x4xf32> to vector<4x4x1xf32>
    %41 = vector.broadcast %40 : vector<4x4x1xf32> to vector<4x4x8xf32>
    %42 = arith.divf %38, %41 : vector<4x4x8xf32>
    "tpu.trace_start"() <{level = 10 : i32, message = "bcr,brl->bcl"}> : () -> ()
    %cst_28 = arith.constant dense<0.000000e+00> : vector<4x4x128xf32>
    %43 = tpu.matmul %42, %24, %cst_28 {dimension_numbers = #tpu.dot_dimension_numbers<[2], [1], [1], [2], [0, 0, 0, 1, 1, 2], [0], [0]>} : vector<4x4x8xf32>, vector<4x8x128xf32>, vector<4x4x128xf32> -> vector<4x4x128xf32>
    "tpu.trace_stop"() : () -> ()
    %44 = vector.shape_cast %25 : vector<4x128xf32> to vector<1x4x128xf32>
    %45 = vector.broadcast %44 : vector<1x4x128xf32> to vector<4x4x128xf32>
    %46 = arith.mulf %43, %45 : vector<4x4x128xf32>
    %cst_29 = arith.constant dense<0.000000e+00> : vector<4x128xf32>
    %47 = vector.multi_reduction <add>, %46, %cst_29 [1] : vector<4x4x128xf32> to vector<4x128xf32>
    %48 = arith.mulf %47, %47 : vector<4x128xf32>
    %cst_30 = arith.constant dense<0.000000e+00> : vector<4x4xf32>
    %49 = tpu.matmul %48, %26, %cst_30 {dimension_numbers = #tpu.dot_dimension_numbers<[1], [0], [0], [1], [0, 0, 1, 1], [], []>} : vector<4x128xf32>, vector<128x4xf32>, vector<4x4xf32> -> vector<4x4xf32>
    %cst_31 = arith.constant 1.000000e+00 : f32
    %50 = vector.broadcast %cst_31 : f32 to vector<4x4xf32>
    %51 = arith.addf %50, %49 : vector<4x4xf32>
    %52 = arith.divf %49, %51 : vector<4x4xf32>
    %cst_32 = arith.constant 9.99999996E-13 : f32
    %53 = vector.broadcast %cst_32 : f32 to vector<4x4xf32>
    %54 = arith.addf %49, %53 : vector<4x4xf32>
    %55 = math.rsqrt %54 : vector<4x4xf32>
    %56 = arith.mulf %52, %55 : vector<4x4xf32>
    %cst_33 = arith.constant dense<0.000000e+00> : vector<4x128xf32>
    %57 = tpu.matmul %56, %25, %cst_33 {dimension_numbers = #tpu.dot_dimension_numbers<[1], [0], [0], [1], [0, 0, 1, 1], [], []>} : vector<4x4xf32>, vector<4x128xf32>, vector<4x128xf32> -> vector<4x128xf32>
    %58 = arith.mulf %57, %47 : vector<4x128xf32>
    %59 = vector.broadcast %27 : vector<1x128xf32> to vector<4x128xf32>
    %60 = arith.addf %58, %59 : vector<4x128xf32>
    %61 = vector.shape_cast %60 : vector<4x128xf32> to vector<4x1x128xf32>
    %62 = vector.shape_cast %25 : vector<4x128xf32> to vector<1x4x128xf32>
    %63 = vector.broadcast %61 : vector<4x1x128xf32> to vector<4x4x128xf32>
    %64 = vector.broadcast %62 : vector<1x4x128xf32> to vector<4x4x128xf32>
    %65 = arith.mulf %63, %64 : vector<4x4x128xf32>
    "tpu.trace_start"() <{level = 10 : i32, message = "bcl,brl->bcr"}> : () -> ()
    %cst_34 = arith.constant dense<0.000000e+00> : vector<4x4x8xf32>
    %66 = tpu.matmul %65, %24, %cst_34 {dimension_numbers = #tpu.dot_dimension_numbers<[2], [2], [1], [1], [0, 0, 0, 1, 1, 1], [0], [0]>} : vector<4x4x128xf32>, vector<4x8x128xf32>, vector<4x4x8xf32> -> vector<4x4x8xf32>
    "tpu.trace_stop"() : () -> ()
    %67 = arith.mulf %60, %60 : vector<4x128xf32>
    %cst_35 = arith.constant dense<0.000000e+00> : vector<4x4xf32>
    %68 = tpu.matmul %67, %26, %cst_35 {dimension_numbers = #tpu.dot_dimension_numbers<[1], [0], [0], [1], [0, 0, 1, 1], [], []>} : vector<4x128xf32>, vector<128x4xf32>, vector<4x4xf32> -> vector<4x4xf32>
    %cst_36 = arith.constant 2.000000e+00 : f32
    %69 = vector.broadcast %cst_36 : f32 to vector<4x4x8xf32>
    %70 = arith.mulf %69, %66 : vector<4x4x8xf32>
    %71 = arith.subf %32, %70 : vector<4x4x8xf32>
    %72 = vector.shape_cast %68 : vector<4x4xf32> to vector<4x4x1xf32>
    %73 = vector.broadcast %72 : vector<4x4x1xf32> to vector<4x4x8xf32>
    %74 = arith.addf %71, %73 : vector<4x4x8xf32>
    %cst_37 = arith.constant 0.000000e+00 : f32
    %75 = vector.broadcast %cst_37 : f32 to vector<4x4x8xf32>
    %76 = arith.subf %75, %74 : vector<4x4x8xf32>
    %cst_38 = arith.constant 1.000000e+00 : f32
    %77 = vector.broadcast %cst_38 : f32 to vector<4x4x8xf32>
    %78 = arith.mulf %76, %77 : vector<4x4x8xf32>
    %79 = math.exp %78 : vector<4x4x8xf32>
    %80 = arith.addf %33, %79 : vector<4x4x8xf32>
    %cst_39 = arith.constant dense<0xFF800000> : vector<4x4xf32>
    %81 = vector.multi_reduction <maximumf>, %80, %cst_39 [2] : vector<4x4x8xf32> to vector<4x4xf32>
    %82 = vector.shape_cast %81 : vector<4x4xf32> to vector<4x4x1xf32>
    %83 = vector.broadcast %82 : vector<4x4x1xf32> to vector<4x4x8xf32>
    %84 = arith.subf %80, %83 : vector<4x4x8xf32>
    %85 = math.exp %84 : vector<4x4x8xf32>
    %cst_40 = arith.constant dense<0.000000e+00> : vector<4x4xf32>
    %86 = vector.multi_reduction <add>, %85, %cst_40 [2] : vector<4x4x8xf32> to vector<4x4xf32>
    %87 = vector.shape_cast %86 : vector<4x4xf32> to vector<4x4x1xf32>
    %88 = vector.broadcast %87 : vector<4x4x1xf32> to vector<4x4x8xf32>
    %89 = arith.divf %85, %88 : vector<4x4x8xf32>
    "tpu.trace_start"() <{level = 10 : i32, message = "bcr,brl->bcl"}> : () -> ()
    %cst_41 = arith.constant dense<0.000000e+00> : vector<4x4x128xf32>
    %90 = tpu.matmul %89, %24, %cst_41 {dimension_numbers = #tpu.dot_dimension_numbers<[2], [1], [1], [2], [0, 0, 0, 1, 1, 2], [0], [0]>} : vector<4x4x8xf32>, vector<4x8x128xf32>, vector<4x4x128xf32> -> vector<4x4x128xf32>
    "tpu.trace_stop"() : () -> ()
    %91 = vector.shape_cast %25 : vector<4x128xf32> to vector<1x4x128xf32>
    %92 = vector.broadcast %91 : vector<1x4x128xf32> to vector<4x4x128xf32>
    %93 = arith.mulf %90, %92 : vector<4x4x128xf32>
    %cst_42 = arith.constant dense<0.000000e+00> : vector<4x128xf32>
    %94 = vector.multi_reduction <add>, %93, %cst_42 [1] : vector<4x4x128xf32> to vector<4x128xf32>
    %95 = arith.mulf %94, %94 : vector<4x128xf32>
    %cst_43 = arith.constant dense<0.000000e+00> : vector<4x4xf32>
    %96 = tpu.matmul %95, %26, %cst_43 {dimension_numbers = #tpu.dot_dimension_numbers<[1], [0], [0], [1], [0, 0, 1, 1], [], []>} : vector<4x128xf32>, vector<128x4xf32>, vector<4x4xf32> -> vector<4x4xf32>
    %cst_44 = arith.constant 1.000000e+00 : f32
    %97 = vector.broadcast %cst_44 : f32 to vector<4x4xf32>
    %98 = arith.addf %97, %96 : vector<4x4xf32>
    %99 = arith.divf %96, %98 : vector<4x4xf32>
    %cst_45 = arith.constant 9.99999996E-13 : f32
    %100 = vector.broadcast %cst_45 : f32 to vector<4x4xf32>
    %101 = arith.addf %96, %100 : vector<4x4xf32>
    %102 = math.rsqrt %101 : vector<4x4xf32>
    %103 = arith.mulf %99, %102 : vector<4x4xf32>
    %cst_46 = arith.constant dense<0.000000e+00> : vector<4x128xf32>
    %104 = tpu.matmul %103, %25, %cst_46 {dimension_numbers = #tpu.dot_dimension_numbers<[1], [0], [0], [1], [0, 0, 1, 1], [], []>} : vector<4x4xf32>, vector<4x128xf32>, vector<4x128xf32> -> vector<4x128xf32>
    %105 = arith.mulf %104, %94 : vector<4x128xf32>
    %106 = vector.broadcast %27 : vector<1x128xf32> to vector<4x128xf32>
    %107 = arith.addf %105, %106 : vector<4x128xf32>
    %108 = vector.shape_cast %107 : vector<4x128xf32> to vector<4x1x128xf32>
    %109 = vector.shape_cast %25 : vector<4x128xf32> to vector<1x4x128xf32>
    %110 = vector.broadcast %108 : vector<4x1x128xf32> to vector<4x4x128xf32>
    %111 = vector.broadcast %109 : vector<1x4x128xf32> to vector<4x4x128xf32>
    %112 = arith.mulf %110, %111 : vector<4x4x128xf32>
    "tpu.trace_start"() <{level = 10 : i32, message = "bcl,brl->bcr"}> : () -> ()
    %cst_47 = arith.constant dense<0.000000e+00> : vector<4x4x8xf32>
    %113 = tpu.matmul %112, %24, %cst_47 {dimension_numbers = #tpu.dot_dimension_numbers<[2], [2], [1], [1], [0, 0, 0, 1, 1, 1], [0], [0]>} : vector<4x4x128xf32>, vector<4x8x128xf32>, vector<4x4x8xf32> -> vector<4x4x8xf32>
    "tpu.trace_stop"() : () -> ()
    %114 = arith.mulf %107, %107 : vector<4x128xf32>
    %cst_48 = arith.constant dense<0.000000e+00> : vector<4x4xf32>
    %115 = tpu.matmul %114, %26, %cst_48 {dimension_numbers = #tpu.dot_dimension_numbers<[1], [0], [0], [1], [0, 0, 1, 1], [], []>} : vector<4x128xf32>, vector<128x4xf32>, vector<4x4xf32> -> vector<4x4xf32>
    %cst_49 = arith.constant 2.000000e+00 : f32
    %116 = vector.broadcast %cst_49 : f32 to vector<4x4x8xf32>
    %117 = arith.mulf %116, %113 : vector<4x4x8xf32>
    %118 = arith.subf %32, %117 : vector<4x4x8xf32>
    %119 = vector.shape_cast %115 : vector<4x4xf32> to vector<4x4x1xf32>
    %120 = vector.broadcast %119 : vector<4x4x1xf32> to vector<4x4x8xf32>
    %121 = arith.addf %118, %120 : vector<4x4x8xf32>
    %cst_50 = arith.constant 0.000000e+00 : f32
    %122 = vector.broadcast %cst_50 : f32 to vector<4x4x8xf32>
    %123 = arith.subf %122, %121 : vector<4x4x8xf32>
    %cst_51 = arith.constant 1.000000e+00 : f32
    %124 = vector.broadcast %cst_51 : f32 to vector<4x4x8xf32>
    %125 = arith.mulf %123, %124 : vector<4x4x8xf32>
    %126 = math.exp %125 : vector<4x4x8xf32>
    %127 = arith.addf %80, %126 : vector<4x4x8xf32>
    %cst_52 = arith.constant dense<0xFF800000> : vector<4x4xf32>
    %128 = vector.multi_reduction <maximumf>, %127, %cst_52 [2] : vector<4x4x8xf32> to vector<4x4xf32>
    %129 = vector.shape_cast %128 : vector<4x4xf32> to vector<4x4x1xf32>
    %130 = vector.broadcast %129 : vector<4x4x1xf32> to vector<4x4x8xf32>
    %131 = arith.subf %127, %130 : vector<4x4x8xf32>
    %132 = math.exp %131 : vector<4x4x8xf32>
    %cst_53 = arith.constant dense<0.000000e+00> : vector<4x4xf32>
    %133 = vector.multi_reduction <add>, %132, %cst_53 [2] : vector<4x4x8xf32> to vector<4x4xf32>
    %134 = vector.shape_cast %133 : vector<4x4xf32> to vector<4x4x1xf32>
    %135 = vector.broadcast %134 : vector<4x4x1xf32> to vector<4x4x8xf32>
    %136 = arith.divf %132, %135 : vector<4x4x8xf32>
    "tpu.trace_start"() <{level = 10 : i32, message = "bcr,brl->bcl"}> : () -> ()
    %cst_54 = arith.constant dense<0.000000e+00> : vector<4x4x128xf32>
    %137 = tpu.matmul %136, %24, %cst_54 {dimension_numbers = #tpu.dot_dimension_numbers<[2], [1], [1], [2], [0, 0, 0, 1, 1, 2], [0], [0]>} : vector<4x4x8xf32>, vector<4x8x128xf32>, vector<4x4x128xf32> -> vector<4x4x128xf32>
    "tpu.trace_stop"() : () -> ()
    %138 = vector.shape_cast %25 : vector<4x128xf32> to vector<1x4x128xf32>
    %139 = vector.broadcast %138 : vector<1x4x128xf32> to vector<4x4x128xf32>
    %140 = arith.mulf %137, %139 : vector<4x4x128xf32>
    %cst_55 = arith.constant dense<0.000000e+00> : vector<4x128xf32>
    %141 = vector.multi_reduction <add>, %140, %cst_55 [1] : vector<4x4x128xf32> to vector<4x128xf32>
    %142 = arith.mulf %141, %141 : vector<4x128xf32>
    %cst_56 = arith.constant dense<0.000000e+00> : vector<4x4xf32>
    %143 = tpu.matmul %142, %26, %cst_56 {dimension_numbers = #tpu.dot_dimension_numbers<[1], [0], [0], [1], [0, 0, 1, 1], [], []>} : vector<4x128xf32>, vector<128x4xf32>, vector<4x4xf32> -> vector<4x4xf32>
    %cst_57 = arith.constant 1.000000e+00 : f32
    %144 = vector.broadcast %cst_57 : f32 to vector<4x4xf32>
    %145 = arith.addf %144, %143 : vector<4x4xf32>
    %146 = arith.divf %143, %145 : vector<4x4xf32>
    %cst_58 = arith.constant 9.99999996E-13 : f32
    %147 = vector.broadcast %cst_58 : f32 to vector<4x4xf32>
    %148 = arith.addf %143, %147 : vector<4x4xf32>
    %149 = math.rsqrt %148 : vector<4x4xf32>
    %150 = arith.mulf %146, %149 : vector<4x4xf32>
    %cst_59 = arith.constant dense<0.000000e+00> : vector<4x128xf32>
    %151 = tpu.matmul %150, %25, %cst_59 {dimension_numbers = #tpu.dot_dimension_numbers<[1], [0], [0], [1], [0, 0, 1, 1], [], []>} : vector<4x4xf32>, vector<4x128xf32>, vector<4x128xf32> -> vector<4x128xf32>
    %152 = arith.mulf %151, %141 : vector<4x128xf32>
    %153 = vector.broadcast %27 : vector<1x128xf32> to vector<4x128xf32>
    %154 = arith.addf %152, %153 : vector<4x128xf32>
    %c0_60 = arith.constant 0 : index
    %c0_61 = arith.constant 0 : index
    %c0_62 = arith.constant 0 : index
    %155 = vector.load %arg6[%c0_60, %c0_61, %c0_62] : memref<1x4x128xf32, #tpu.memory_space<vmem>>, vector<1x4x128xf32>
    %156 = vector.shape_cast %155 : vector<1x4x128xf32> to vector<4x128xf32>
    %157 = vector.shape_cast %154 : vector<4x128xf32> to vector<1x4x128xf32>
    tpu.vector_store %arg6[%c0_60, %c0_61, %c0_62], %157 {strides = array<i32>} : memref<1x4x128xf32, #tpu.memory_space<vmem>>, vector<1x4x128xf32>,
    return
  }
  func.func @transform_0(%arg0: i32) -> (i32, i32, i32, i32) {
    %c0_i32 = arith.constant 0 : i32
    %c0_i32_0 = arith.constant 0 : i32
    %c0_i32_1 = arith.constant 0 : i32
    %c0_i32_2 = arith.constant 0 : i32
    return %c0_i32, %arg0, %c0_i32_0, %c0_i32_1 : i32, i32, i32, i32
  }
  func.func @transform_1(%arg0: i32) -> (i32, i32, i32) {
    %c0_i32 = arith.constant 0 : i32
    %c0_i32_0 = arith.constant 0 : i32
    %c0_i32_1 = arith.constant 0 : i32
    %c0_i32_2 = arith.constant 0 : i32
    return %c0_i32, %c0_i32_0, %c0_i32_1 : i32, i32, i32
  }
  func.func @transform_2(%arg0: i32) -> (i32, i32) {
    %c0_i32 = arith.constant 0 : i32
    %c0_i32_0 = arith.constant 0 : i32
    %c0_i32_1 = arith.constant 0 : i32
    return %c0_i32, %c0_i32_0 : i32, i32
  }
  func.func @transform_3(%arg0: i32) -> (i32, i32) {
    %c0_i32 = arith.constant 0 : i32
    %c0_i32_0 = arith.constant 0 : i32
    %c0_i32_1 = arith.constant 0 : i32
    return %c0_i32, %c0_i32_0 : i32, i32
  }
  func.func @transform_4(%arg0: i32) -> (i32, i32) {
    %c0_i32 = arith.constant 0 : i32
    %c0_i32_0 = arith.constant 0 : i32
    %c0_i32_1 = arith.constant 0 : i32
    return %c0_i32, %c0_i32_0 : i32, i32
  }
  func.func @transform_5(%arg0: i32) -> (i32, i32, i32) {
    %c0_i32 = arith.constant 0 : i32
    %c0_i32_0 = arith.constant 0 : i32
    %c0_i32_1 = arith.constant 0 : i32
    return %arg0, %c0_i32, %c0_i32_0 : i32, i32, i32
  }
}

</mosaic_0001>

<llo_original>
// kernel: tpu_custom_call.1
$region0: #{tpu_custom_call.1}
  #allocation0 [shape = 'u32[]', space=smem, size = 0x4, offset = 0x4, fixed_abs, tag = 'smem constant byte address 0x4 - core index']
  #allocation1 [shape = 'u32[144,128]{1,0:T(1,128)}', space=vmem, size = 0x12000, scoped, tag = 'internal scratch']
  #allocation2 [shape = 'f32[4,8,128]{2,1,0:T(8,128)}', space=vmem, size = 0x4000, scoped, tag = 'scratch operand']
  %s0 = inlined_call_operand.vmem [shape: f32[8,2,4,32], index: 0, kind: input, shape index: {}]
  %s1 = inlined_call_operand.hbm [shape: f32[8,32,128], index: 1, kind: input, shape index: {}]
  %s2 = inlined_call_operand.vmem [shape: f32[1,128], index: 2, kind: input, shape index: {}]
  %s3 = inlined_call_operand.vmem [shape: f32[4,128], index: 3, kind: input, shape index: {}]
  %s4 = inlined_call_operand.vmem [shape: f32[128,4], index: 4, kind: input, shape index: {}]
  %s5 = inlined_call_operand.hbm [shape: f32[2,4,128], index: 5, kind: output, shape index: {}]
  %s6 = sld [smem:[#allocation0]]
  $region98: #{tpu_custom_call.1} parent=0
    _
  %s8 = ssub.s32 1, %s6
  %s9 = scalar_select 0, %s8, %s6
  $region1: #{tpu_custom_call.1} parent=0
    #allocation3 [shape = 'u8[32768]{0}', space=vmem, size = 0x8000, scoped, tag = 'input window, operand 0']
    #allocation4 [shape = 'u8[131072]{0}', space=vmem, size = 0x20000, scoped, tag = 'input window, operand 1, single buffered']
    #allocation5 [shape = 's32[2]{0}', space=sflag, size = 0x8, scoped, tag = 'scoped memory for tpu_custom_call.1']
    #allocation6 [shape = 's32[2]{0}', space=sflag, size = 0x8, scoped, tag = 'scoped memory for tpu_custom_call.1']
    #allocation7 [shape = 'u8[4096]{0}', space=vmem, size = 0x1000, scoped, tag = 'output window, operand 0']
    %10 = vsyncpa [#allocation5], 0
    %11 = vsyncpa [#allocation6], 0
    %s12 = scalar_lea.sflag [#allocation6], 1
    %13 = vsyncpa %s12, 0
    loop: start=0, step=1, limit=4
    $region2: #{tpu_custom_call.1} parent=1 // loop_pre_header
      _
    $region3: #{tpu_custom_call.1} parent=1 // loop_header
      %s15 = sphi 0, %s19
      %p16 = scmp.ge.s32.totalorder %s15, 4
      %s25 = sphi 0, %s27
      %s28 = sphi 0, %s25
      %s29 = sphi 0, %s28
      %s45 = sphi 0, %s29
      %s49 = sphi 0, %s49
      %s51 = sphi 0, %s49
      %s52 = sphi 0, %s51
      %s66 = sphi 0, %s52
      %s70 = sphi 0, %s70
      %s72 = sphi 0, %s70
      %s73 = sphi 0, %s72
      %s87 = sphi 0, %s73
      %s91 = sphi 0, %s91
      %s93 = sphi 0, %s91
      %s94 = sphi 0, %s93
      %s108 = sphi 0, %s94
      %s112 = sphi 0, %s112
      %s114 = sphi 0, %s112
      %s115 = sphi 0, %s114
      %s129 = sphi 0, %s115
      %s135 = sphi 0, %s137
      %s138 = sphi 0, %s135
      %s139 = sphi 0, %s138
      %s155 = sphi 0, %s139
    $region4: #{tpu_custom_call.1} parent=1 // loop_header_branch
      %18 = sbr.rel (%p16) target = $region8
    $region5: #{tpu_custom_call.1} parent=1 // loop_body
      %s20 = ssub.s32 %s15, 1
      %s21 = ssub.s32 %s15, 2
      %s22 = sadd.s32 %s15, 1
      %s23 = ssub.s32 %s15, %s22
      %p24 = scmp.eq.s32.totalorder %s23, 0
      %s26 = sadd.s32 %s25, 1
      %s27 = scalar_select %p24, %s25, %s26
      %p30 = pneg %p24
      %p31 = scmp.eq.s32.totalorder %s15, 1
      %p32 = por %p30, %p31
      %p33 = scmp.ne.s32.totalorder %s25, %s28
      %p34 = scmp.eq.s32.totalorder %s15, 0
      %p35 = por %p33, %p34
      %p36 = scmp.ne.s32.totalorder %s25, %s28
      %p37 = scmp.eq.s32.totalorder %s20, 1
      %p38 = por %p36, %p37
      %p39 = scmp.ne.s32.totalorder %s28, %s29
      %p40 = scmp.eq.s32.totalorder %s20, 0
      %p41 = por %p39, %p40
      %p42 = scmp.ne.s32.totalorder %s28, %s29
      %p43 = scmp.eq.s32.totalorder %s21, 1
      %p44 = por %p42, %p43
      %p46 = scmp.ne.s32.totalorder %s29, %s45
      %p47 = scmp.eq.s32.totalorder %s21, 0
      %p48 = por %p46, %p47
      %s50 = sadd.s32 %s49, 1
      %p53 = scmp.eq.s32.totalorder %s15, 1
      %p54 = scmp.ne.s32.totalorder %s49, %s51
      %p55 = scmp.eq.s32.totalorder %s15, 0
      %p56 = por %p54, %p55
      %p57 = scmp.ne.s32.totalorder %s49, %s51
      %p58 = scmp.eq.s32.totalorder %s20, 1
      %p59 = por %p57, %p58
      %p60 = scmp.ne.s32.totalorder %s51, %s52
      %p61 = scmp.eq.s32.totalorder %s20, 0
      %p62 = por %p60, %p61
      %p63 = scmp.ne.s32.totalorder %s51, %s52
      %p64 = scmp.eq.s32.totalorder %s21, 1
      %p65 = por %p63, %p64
      %p67 = scmp.ne.s32.totalorder %s52, %s66
      %p68 = scmp.eq.s32.totalorder %s21, 0
      %p69 = por %p67, %p68
      %s71 = sadd.s32 %s70, 1
      %p74 = scmp.eq.s32.totalorder %s15, 1
      %p75 = scmp.ne.s32.totalorder %s70, %s72
      %p76 = scmp.eq.s32.totalorder %s15, 0
      %p77 = por %p75, %p76
      %p78 = scmp.ne.s32.totalorder %s70, %s72
      %p79 = scmp.eq.s32.totalorder %s20, 1
      %p80 = por %p78, %p79
      %p81 = scmp.ne.s32.totalorder %s72, %s73
      %p82 = scmp.eq.s32.totalorder %s20, 0
      %p83 = por %p81, %p82
      %p84 = scmp.ne.s32.totalorder %s72, %s73
      %p85 = scmp.eq.s32.totalorder %s21, 1
      %p86 = por %p84, %p85
      %p88 = scmp.ne.s32.totalorder %s73, %s87
      %p89 = scmp.eq.s32.totalorder %s21, 0
      %p90 = por %p88, %p89
      %s92 = sadd.s32 %s91, 1
      %p95 = scmp.eq.s32.totalorder %s15, 1
      %p96 = scmp.ne.s32.totalorder %s91, %s93
      %p97 = scmp.eq.s32.totalorder %s15, 0
      %p98 = por %p96, %p97
      %p99 = scmp.ne.s32.totalorder %s91, %s93
      %p100 = scmp.eq.s32.totalorder %s20, 1
      %p101 = por %p99, %p100
      %p102 = scmp.ne.s32.totalorder %s93, %s94
      %p103 = scmp.eq.s32.totalorder %s20, 0
      %p104 = por %p102, %p103
      %p105 = scmp.ne.s32.totalorder %s93, %s94
      %p106 = scmp.eq.s32.totalorder %s21, 1
      %p107 = por %p105, %p106
      %p109 = scmp.ne.s32.totalorder %s94, %s108
      %p110 = scmp.eq.s32.totalorder %s21, 0
      %p111 = por %p109, %p110
      %s113 = sadd.s32 %s112, 1
      %p116 = scmp.eq.s32.totalorder %s15, 1
      %p117 = scmp.ne.s32.totalorder %s112, %s114
      %p118 = scmp.eq.s32.totalorder %s15, 0
      %p119 = por %p117, %p118
      %p120 = scmp.ne.s32.totalorder %s112, %s114
      %p121 = scmp.eq.s32.totalorder %s20, 1
      %p122 = por %p120, %p121
      %p123 = scmp.ne.s32.totalorder %s114, %s115
      %p124 = scmp.eq.s32.totalorder %s20, 0
      %p125 = por %p123, %p124
      %p126 = scmp.ne.s32.totalorder %s114, %s115
      %p127 = scmp.eq.s32.totalorder %s21, 1
      %p128 = por %p126, %p127
      %p130 = scmp.ne.s32.totalorder %s115, %s129
      %p131 = scmp.eq.s32.totalorder %s21, 0
      %p132 = por %p130, %p131
      %s133 = ssub.s32 %s15, %s22
      %p134 = scmp.eq.s32.totalorder %s133, 0
      %s136 = sadd.s32 %s135, 1
      %s137 = scalar_select %p134, %s135, %s136
      %p140 = pneg %p134
      %p141 = scmp.eq.s32.totalorder %s15, 1
      %p142 = por %p140, %p141
      %p143 = scmp.ne.s32.totalorder %s135, %s138
      %p144 = scmp.eq.s32.totalorder %s15, 0
      %p145 = por %p143, %p144
      %p146 = scmp.ne.s32.totalorder %s135, %s138
      %p147 = scmp.eq.s32.totalorder %s20, 1
      %p148 = por %p146, %p147
      %p149 = scmp.ne.s32.totalorder %s138, %s139
      %p150 = scmp.eq.s32.totalorder %s20, 0
      %p151 = por %p149, %p150
      %p152 = scmp.ne.s32.totalorder %s138, %s139
      %p153 = scmp.eq.s32.totalorder %s21, 1
      %p154 = por %p152, %p153
      %p156 = scmp.ne.s32.totalorder %s139, %s155
      %p157 = scmp.eq.s32.totalorder %s21, 0
      %p158 = por %p156, %p157
      %p159 = scmp.le.s32.totalorder 1, %s15
      %p160 = scmp.lt.s32.totalorder %s15, 3
      %p161 = pnand %p159, %p160
      %p162 = pneg %p161
      // Predicated region
      $region9: #{tpu_custom_call.1} parent=5 // pred_check
        _
      $region10: #{tpu_custom_call.1} parent=5 // pred_check_branch
        %164 = sbr.rel (%p161) target = $region12
      $region11: #{tpu_custom_call.1} parent=5 // pred_region
        %s165 = ssub.s32 %s15, 1
        // Predicated region
        $region13: #{tpu_custom_call.1} parent=11 // pred_check
          %p166 = pneg %p62
        $region14: #{tpu_custom_call.1} parent=11 // pred_check_branch
          %168 = sbr.rel (%p166) target = $region16
        $region15: #{tpu_custom_call.1} parent=11 // pred_region
          %s170 = ssub.s32 4096, 4096
          %171 = vsyncadd [#allocation5], %s170
          %s172 = sshll.u32 [#allocation4], 4
          %s173 = int_to_ptr.vmem [resolvable:$true] %s172
          %178 = dma.hbm_to_vmem [thread:$0]  %s1, 4096, %s173, [#allocation5], 128, 128, 8
        $region16: #{tpu_custom_call.1} parent=11 // pred_fallthru
          _
        // Predicated region
        $region17: #{tpu_custom_call.1} parent=11 // pred_check
          %p179 = pneg %p83
        $region18: #{tpu_custom_call.1} parent=11 // pred_check_branch
          %181 = sbr.rel (%p179) target = $region20
        $region19: #{tpu_custom_call.1} parent=11 // pred_region
          _
        $region20: #{tpu_custom_call.1} parent=11 // pred_fallthru
          _
        // Predicated region
        $region21: #{tpu_custom_call.1} parent=11 // pred_check
          %p182 = pneg %p104
        $region22: #{tpu_custom_call.1} parent=11 // pred_check_branch
          %184 = sbr.rel (%p182) target = $region24
        $region23: #{tpu_custom_call.1} parent=11 // pred_region
          _
        $region24: #{tpu_custom_call.1} parent=11 // pred_fallthru
          _
        // Predicated region
        $region25: #{tpu_custom_call.1} parent=11 // pred_check
          %p185 = pneg %p125
        $region26: #{tpu_custom_call.1} parent=11 // pred_check_branch
          %187 = sbr.rel (%p185) target = $region28
        $region27: #{tpu_custom_call.1} parent=11 // pred_region
          _
        $region28: #{tpu_custom_call.1} parent=11 // pred_fallthru
          _
      $region12: #{tpu_custom_call.1} parent=5 // pred_fallthru
        _
      %p188 = scmp.lt.s32.totalorder %s15, 2
      // Predicated region
      $region29: #{tpu_custom_call.1} parent=5 // pred_check
        %p189 = pneg %p188
      $region30: #{tpu_custom_call.1} parent=5 // pred_check_branch
        %191 = sbr.rel (%p189) target = $region32
      $region31: #{tpu_custom_call.1} parent=5 // pred_region
        // Predicated region
        $region33: #{tpu_custom_call.1} parent=31 // pred_check
          %p192 = pneg %p35
        $region34: #{tpu_custom_call.1} parent=31 // pred_check_branch
          %194 = sbr.rel (%p192) target = $region36
        $region35: #{tpu_custom_call.1} parent=31 // pred_region
          %s195 = sand.u32 %s25, 1
          %s196 = sand.u32 %s25, 1
          %s197 = smul.addr %s196, 32
          %s198 = scalar_lea.vmem [#allocation3], %s197
          %s199 = smul.addr %s15, 4
          %s200 = scalar_lea.vmem %s0, %s199
          // Predicated region
          $region37: #{tpu_custom_call.1} parent=35 // pred_check
            _
          $region38: #{tpu_custom_call.1} parent=35 // pred_check_branch
            %202 = sbr.rel (0) target = $region40
          $region39: #{tpu_custom_call.1} parent=35 // pred_region
            // Predicated region
            $region41: #{tpu_custom_call.1} parent=39 // pred_check
              _
            $region42: #{tpu_custom_call.1} parent=39 // pred_check_branch
              %204 = sbr.rel target = $region44
            $region43: #{tpu_custom_call.1} parent=39 // pred_region
              // Predicated region
              $region56: #{tpu_custom_call.1} parent=43 // pred_check
                _
              $region57: #{tpu_custom_call.1} parent=43 // pred_check_branch
                %233 = sbr.rel (0) target = $region59
              $region58: #{tpu_custom_call.1} parent=43 // pred_region
                loop: start=0, step=1, limit=1
                $region60: #{tpu_custom_call.1} parent=58 // loop_pre_header
                  _
                $region61: #{tpu_custom_call.1} parent=58 // loop_header
                  %s235 = sphi 0, %s239
                  %p236 = scmp.ge.s32.totalorder %s235, 1
                  %s240 = sphi %s200, %s200
                  %s241 = sphi %s198, %s198
                $region62: #{tpu_custom_call.1} parent=58 // loop_header_branch
                  %238 = sbr.rel (%p236) target = $region66
                $region63: #{tpu_custom_call.1} parent=58 // loop_body
                  _
                $region64: #{tpu_custom_call.1} parent=58 // loop_footer
                  %s239 = sadd.s32 1, %s235
                $region65: #{tpu_custom_call.1} parent=58 // loop_footer_branch
                  %234 = sbr.rel target = $region61
                $region66: #{tpu_custom_call.1} parent=58 // loop_exit
                  _
                loop: start=0, step=1, limit=1
                $region67: #{tpu_custom_call.1} parent=58 // loop_pre_header
                  _
                $region68: #{tpu_custom_call.1} parent=58 // loop_header
                  %s244 = sphi 0, %s248
                  %p245 = scmp.ge.s32.totalorder %s244, 1
                  %s249 = sphi %s200, %s200
                  %s250 = sphi %s198, %s198
                $region69: #{tpu_custom_call.1} parent=58 // loop_header_branch
                  %247 = sbr.rel (%p245) target = $region73
                $region70: #{tpu_custom_call.1} parent=58 // loop_body
                  %v251 = vld [vmem:[%s249] sm:$0xf]
                  %252 = vst [vmem:[%s250] sm:$0xf] %v251
                  %v253 = vld [vmem:[%s249 + $0x8] sm:$0xf]
                  %254 = vst [vmem:[%s250 + $0x4] sm:$0xf] %v253
                  %v255 = vld [vmem:[%s249 + $0x10] sm:$0xf]
                  %256 = vst [vmem:[%s250 + $0x8] sm:$0xf] %v255
                  %v257 = vld [vmem:[%s249 + $0x18] sm:$0xf]
                  %258 = vst [vmem:[%s250 + $0xc] sm:$0xf] %v257
                  %v259 = vld [vmem:[%s249 + $0x20] sm:$0xf]
                  %260 = vst [vmem:[%s250 + $0x10] sm:$0xf] %v259
                  %v261 = vld [vmem:[%s249 + $0x28] sm:$0xf]
                  %262 = vst [vmem:[%s250 + $0x14] sm:$0xf] %v261
                  %v263 = vld [vmem:[%s249 + $0x30] sm:$0xf]
                  %264 = vst [vmem:[%s250 + $0x18] sm:$0xf] %v263
                  %v265 = vld [vmem:[%s249 + $0x38] sm:$0xf]
                  %266 = vst [vmem:[%s250 + $0x1c] sm:$0xf] %v265
                $region71: #{tpu_custom_call.1} parent=58 // loop_footer
                  %s248 = sadd.s32 1, %s244
                $region72: #{tpu_custom_call.1} parent=58 // loop_footer_branch
                  %243 = sbr.rel target = $region68
                $region73: #{tpu_custom_call.1} parent=58 // loop_exit
                  _
              $region59: #{tpu_custom_call.1} parent=43 // pred_fallthru
                _
            $region44: #{tpu_custom_call.1} parent=39 // pred_fallthru
              _
            // Predicated region
            $region45: #{tpu_custom_call.1} parent=39 // pred_check
              _
            $region46: #{tpu_custom_call.1} parent=39 // pred_check_branch
              %206 = sbr.rel (0) target = $region48
            $region47: #{tpu_custom_call.1} parent=39 // pred_region
              loop: start=0, step=1, limit=1
              $region49: #{tpu_custom_call.1} parent=47 // loop_pre_header
                _
              $region50: #{tpu_custom_call.1} parent=47 // loop_header
                %s209 = sphi 0, %s213
                %p210 = scmp.ge.s32.totalorder %s209, 1
                %s214 = sphi %s200, %s200
                %s215 = sphi %s198, %s198
              $region51: #{tpu_custom_call.1} parent=47 // loop_header_branch
                %212 = sbr.rel (%p210) target = $region55
              $region52: #{tpu_custom_call.1} parent=47 // loop_body
                %v216 = vld [vmem:[%s214] sm:$0xf]
                %217 = vst [vmem:[%s215] sm:$0xf] %v216
                %v218 = vld [vmem:[%s214 + $0x8] sm:$0xf]
                %219 = vst [vmem:[%s215 + $0x4] sm:$0xf] %v218
                %v220 = vld [vmem:[%s214 + $0x10] sm:$0xf]
                %221 = vst [vmem:[%s215 + $0x8] sm:$0xf] %v220
                %v222 = vld [vmem:[%s214 + $0x18] sm:$0xf]
                %223 = vst [vmem:[%s215 + $0xc] sm:$0xf] %v222
                %v224 = vld [vmem:[%s214 + $0x20] sm:$0xf]
                %225 = vst [vmem:[%s215 + $0x10] sm:$0xf] %v224
                %v226 = vld [vmem:[%s214 + $0x28] sm:$0xf]
                %227 = vst [vmem:[%s215 + $0x14] sm:$0xf] %v226
                %v228 = vld [vmem:[%s214 + $0x30] sm:$0xf]
                %229 = vst [vmem:[%s215 + $0x18] sm:$0xf] %v228
                %v230 = vld [vmem:[%s214 + $0x38] sm:$0xf]
                %231 = vst [vmem:[%s215 + $0x1c] sm:$0xf] %v230
              $region53: #{tpu_custom_call.1} parent=47 // loop_footer
                %s213 = sadd.s32 1, %s209
              $region54: #{tpu_custom_call.1} parent=47 // loop_footer_branch
                %208 = sbr.rel target = $region50
              $region55: #{tpu_custom_call.1} parent=47 // loop_exit
                _
            $region48: #{tpu_custom_call.1} parent=39 // pred_fallthru
              _
          $region40: #{tpu_custom_call.1} parent=35 // pred_fallthru
            _
          %267 = vnop
        $region36: #{tpu_custom_call.1} parent=31 // pred_fallthru
          _
      $region32: #{tpu_custom_call.1} parent=5 // pred_fallthru
        _
      %p268 = scmp.le.s32.totalorder 1, %s15
      %p269 = scmp.lt.s32.totalorder %s15, 3
      %p270 = pnand %p268, %p269
      %p271 = pneg %p270
      // Predicated region
      $region74: #{tpu_custom_call.1} parent=5 // pred_check
        _
      $region75: #{tpu_custom_call.1} parent=5 // pred_check_branch
        %273 = sbr.rel (%p270) target = $region77
      $region76: #{tpu_custom_call.1} parent=5 // pred_region
        %s274 = ssub.s32 %s15, 1
        %s275 = sand.u32 %s28, 1
        %s276 = sand.u32 %s28, 1
        %s277 = smul.addr %s276, 32
        %s278 = scalar_lea.vmem [#allocation3], %s277
        // Predicated region
        $region78: #{tpu_custom_call.1} parent=76 // pred_check
          %p279 = pneg %p41
        $region79: #{tpu_custom_call.1} parent=76 // pred_check_branch
          %281 = sbr.rel (%p279) target = $region81
        $region80: #{tpu_custom_call.1} parent=76 // pred_region
          _
        $region81: #{tpu_custom_call.1} parent=76 // pred_fallthru
          _
        // Predicated region
        $region82: #{tpu_custom_call.1} parent=76 // pred_check
          %p282 = pneg %p62
        $region83: #{tpu_custom_call.1} parent=76 // pred_check_branch
          %284 = sbr.rel (%p282) target = $region85
        $region84: #{tpu_custom_call.1} parent=76 // pred_region
          %285 = dma.done [#allocation5], 4096
        $region85: #{tpu_custom_call.1} parent=76 // pred_fallthru
          _
        %s286 = sand.u32 %s28, 1
        %s287 = sand.u32 %s28, 1
        %s288 = smul.addr %s287, 32
        %s289 = scalar_lea.vmem [#allocation3], %s288
        %p290 = pneg %p41
        %p291 = pneg %p38
        %p292 = pneg %p62
        %p293 = pneg %p59
        %p294 = pneg %p83
        %p295 = pneg %p80
        %p296 = pneg %p104
        %p297 = pneg %p101
        %p298 = pneg %p125
        %p299 = pneg %p122
        %p300 = pneg %p151
        %p301 = pneg %p148
        %s302 = sand.u32 %s138, 1
        %s303 = scalar_lea.sflag [#allocation6], %s302
        %s304 = sand.u32 %s138, 1
        %s305 = smul.addr %s304, 4
        %s306 = scalar_lea.vmem [#allocation7], %s305
        %v307 = vld [vmem:[%s278] sm:$0xf]
        %v308 = vld [vmem:[%s278 + $0x4] sm:$0xf]
        %v309 = vld [vmem:[%s278 + $0x8] sm:$0xf]
        %v310 = vld [vmem:[%s278 + $0xc] sm:$0xf]
        %v311 = vld [vmem:[%s278 + $0x10] sm:$0xf]
        %v312 = vld [vmem:[%s278 + $0x14] sm:$0xf]
        %v313 = vld [vmem:[%s278 + $0x18] sm:$0xf]
        %v314 = vld [vmem:[%s278 + $0x1c] sm:$0xf]
        %v315 = vld [vmem:[#allocation4] sm:$0xff]
        %v316 = vld [vmem:[#allocation4 + $0x8] sm:$0xff]
        %v317 = vld [vmem:[#allocation4 + $0x10] sm:$0xff]
        %v318 = vld [vmem:[#allocation4 + $0x18] sm:$0xff]
        %v319 = vld [vmem:[#allocation4 + $0x20] sm:$0xff]
        %v320 = vld [vmem:[#allocation4 + $0x28] sm:$0xff]
        %v321 = vld [vmem:[#allocation4 + $0x30] sm:$0xff]
        %v322 = vld [vmem:[#allocation4 + $0x38] sm:$0xff]
        %v323 = vld [vmem:[#allocation4 + $0x40] sm:$0xff]
        %v324 = vld [vmem:[#allocation4 + $0x48] sm:$0xff]
        %v325 = vld [vmem:[#allocation4 + $0x50] sm:$0xff]
        %v326 = vld [vmem:[#allocation4 + $0x58] sm:$0xff]
        %v327 = vld [vmem:[#allocation4 + $0x60] sm:$0xff]
        %v328 = vld [vmem:[#allocation4 + $0x68] sm:$0xff]
        %v329 = vld [vmem:[#allocation4 + $0x70] sm:$0xff]
        %v330 = vld [vmem:[#allocation4 + $0x78] sm:$0xff]
        %v331 = vld [vmem:[#allocation4 + $0x80] sm:$0xff]
        %v332 = vld [vmem:[#allocation4 + $0x88] sm:$0xff]
        %v333 = vld [vmem:[#allocation4 + $0x90] sm:$0xff]
        %v334 = vld [vmem:[#allocation4 + $0x98] sm:$0xff]
        %v335 = vld [vmem:[#allocation4 + $0xa0] sm:$0xff]
        %v336 = vld [vmem:[#allocation4 + $0xa8] sm:$0xff]
        %v337 = vld [vmem:[#allocation4 + $0xb0] sm:$0xff]
        %v338 = vld [vmem:[#allocation4 + $0xb8] sm:$0xff]
        %v339 = vld [vmem:[#allocation4 + $0xc0] sm:$0xff]
        %v340 = vld [vmem:[#allocation4 + $0xc8] sm:$0xff]
        %v341 = vld [vmem:[#allocation4 + $0xd0] sm:$0xff]
        %v342 = vld [vmem:[#allocation4 + $0xd8] sm:$0xff]
        %v343 = vld [vmem:[#allocation4 + $0xe0] sm:$0xff]
        %v344 = vld [vmem:[#allocation4 + $0xe8] sm:$0xff]
        %v345 = vld [vmem:[#allocation4 + $0xf0] sm:$0xff]
        %v346 = vld [vmem:[#allocation4 + $0xf8] sm:$0xff]
        %vm347 = vcmask 261120
        %v349 = vsel %vm347, %v307, 0
        %351 = vmatprep.subr.mxu0 0.0
        %352 = vmatpush1.msra.mxu0 %v315
        %353 = vmatprep.subr.mxu0 0.0
        %354 = vmatpush1.msra.mxu0 %v316
        %355 = vmatprep.subr.mxu0 0.0
        %356 = vmatpush1.msra.mxu0 %v317
        %357 = vmatprep.subr.mxu0 0.0
        %358 = vmatpush1.msra.mxu0 %v318
        %359 = vmatprep.subr.mxu0 0.0
        %360 = vmatpush1.msra.mxu0 0.0
        %361 = vmatprep.subr.mxu0 0.0
        %362 = vmatpush1.msra.mxu0 0.0
        %363 = vmatprep.subr.mxu0 0.0
        %364 = vmatpush1.msra.mxu0 0.0
        %365 = vmatprep.subr.mxu0 0.0
        %366 = vmatpush1.msra.mxu0 0.0
        %367 = vmatprep.subr.mxu0 0.0
        %368 = vmatpush1.msra.mxu0 0.0
        %369 = vmatprep.subr.mxu0 0.0
        %370 = vmatpush1.msra.mxu0 0.0
        %371 = vmatprep.subr.mxu0 0.0
        %372 = vmatpush1.msra.mxu0 0.0
        %373 = vmatprep.subr.mxu0 0.0
        %374 = vmatpush1.msra.mxu0 0.0
        %375 = vmatprep.subr.mxu0 0.0
        %376 = vmatpush1.msra.mxu0 0.0
        %377 = vmatprep.subr.mxu0 0.0
        %378 = vmatpush1.msra.mxu0 0.0
        %379 = vmatprep.subr.mxu0 0.0
        %380 = vmatpush1.msra.mxu0 0.0
        %381 = vmatprep.subr.mxu0 0.0
        %382 = vmatpush1.msra.mxu0 0.0
        %383 = vmatprep.subr.mxu0 0.0
        %384 = vmatpush1.msra.mxu0 0.0
        %385 = vmatprep.subr.mxu0 0.0
        %386 = vmatpush1.msra.mxu0 0.0
        %387 = vmatprep.subr.mxu0 0.0
        %388 = vmatpush1.msra.mxu0 0.0
        %389 = vmatprep.subr.mxu0 0.0
        %390 = vmatpush1.msra.mxu0 0.0
        %391 = vmatprep.subr.mxu0 0.0
        %392 = vmatpush1.msra.mxu0 0.0
        %393 = vmatprep.subr.mxu0 0.0
        %394 = vmatpush1.msra.mxu0 0.0
        %395 = vmatprep.subr.mxu0 0.0
        %396 = vmatpush1.msra.mxu0 0.0
        %397 = vmatprep.subr.mxu0 0.0
        %398 = vmatpush1.msra.mxu0 0.0
        %399 = vmatprep.subr.mxu0 0.0
        %400 = vmatpush1.msra.mxu0 0.0
        %401 = vmatprep.subr.mxu0 0.0
        %402 = vmatpush1.msra.mxu0 0.0
        %403 = vmatprep.subr.mxu0 0.0
        %404 = vmatpush1.msra.mxu0 0.0
        %405 = vmatprep.subr.mxu0 0.0
        %406 = vmatpush1.msra.mxu0 0.0
        %407 = vmatprep.subr.mxu0 0.0
        %408 = vmatpush1.msra.mxu0 0.0
        %409 = vmatprep.subr.mxu0 0.0
        %410 = vmatpush1.msra.mxu0 0.0
        %411 = vmatprep.subr.mxu0 0.0
        %412 = vmatpush1.msra.mxu0 0.0
        %413 = vmatprep.subr.mxu0 0.0
        %414 = vmatpush1.msra.mxu0 0.0
        %415 = vmatprep.mubr.f32.mxu0 0.0
        %416 = vmatmul.mubr.f32.gmra.mrb[0].mxu0 %v349
        %v417 = vpop.f32.mrb[0].mxu0
        %v418 = vadd.f32 0.0, %v417
        %v419 = vpop.f32.mrb[0].mxu0
        %420 = vdwg.mxu0
        %v422 = vsel %vm347, %v308, 0
        %424 = vmatprep.subr.mxu0 0.0
        %425 = vmatpush1.msra.mxu0 %v319
        %426 = vmatprep.subr.mxu0 0.0
        %427 = vmatpush1.msra.mxu0 %v320
        %428 = vmatprep.subr.mxu0 0.0
        %429 = vmatpush1.msra.mxu0 %v321
        %430 = vmatprep.subr.mxu0 0.0
        %431 = vmatpush1.msra.mxu0 %v322
        %432 = vmatprep.subr.mxu0 0.0
        %433 = vmatpush1.msra.mxu0 0.0
        %434 = vmatprep.subr.mxu0 0.0
        %435 = vmatpush1.msra.mxu0 0.0
        %436 = vmatprep.subr.mxu0 0.0
        %437 = vmatpush1.msra.mxu0 0.0
        %438 = vmatprep.subr.mxu0 0.0
        %439 = vmatpush1.msra.mxu0 0.0
        %440 = vmatprep.subr.mxu0 0.0
        %441 = vmatpush1.msra.mxu0 0.0
        %442 = vmatprep.subr.mxu0 0.0
        %443 = vmatpush1.msra.mxu0 0.0
        %444 = vmatprep.subr.mxu0 0.0
        %445 = vmatpush1.msra.mxu0 0.0
        %446 = vmatprep.subr.mxu0 0.0
        %447 = vmatpush1.msra.mxu0 0.0
        %448 = vmatprep.subr.mxu0 0.0
        %449 = vmatpush1.msra.mxu0 0.0
        %450 = vmatprep.subr.mxu0 0.0
        %451 = vmatpush1.msra.mxu0 0.0
        %452 = vmatprep.subr.mxu0 0.0
        %453 = vmatpush1.msra.mxu0 0.0
        %454 = vmatprep.subr.mxu0 0.0
        %455 = vmatpush1.msra.mxu0 0.0
        %456 = vmatprep.subr.mxu0 0.0
        %457 = vmatpush1.msra.mxu0 0.0
        %458 = vmatprep.subr.mxu0 0.0
        %459 = vmatpush1.msra.mxu0 0.0
        %460 = vmatprep.subr.mxu0 0.0
        %461 = vmatpush1.msra.mxu0 0.0
        %462 = vmatprep.subr.mxu0 0.0
        %463 = vmatpush1.msra.mxu0 0.0
        %464 = vmatprep.subr.mxu0 0.0
        %465 = vmatpush1.msra.mxu0 0.0
        %466 = vmatprep.subr.mxu0 0.0
        %467 = vmatpush1.msra.mxu0 0.0
        %468 = vmatprep.subr.mxu0 0.0
        %469 = vmatpush1.msra.mxu0 0.0
        %470 = vmatprep.subr.mxu0 0.0
        %471 = vmatpush1.msra.mxu0 0.0
        %472 = vmatprep.subr.mxu0 0.0
        %473 = vmatpush1.msra.mxu0 0.0
        %474 = vmatprep.subr.mxu0 0.0
        %475 = vmatpush1.msra.mxu0 0.0
        %476 = vmatprep.subr.mxu0 0.0
        %477 = vmatpush1.msra.mxu0 0.0
        %478 = vmatprep.subr.mxu0 0.0
        %479 = vmatpush1.msra.mxu0 0.0
        %480 = vmatprep.subr.mxu0 0.0
        %481 = vmatpush1.msra.mxu0 0.0
        %482 = vmatprep.subr.mxu0 0.0
        %483 = vmatpush1.msra.mxu0 0.0
        %484 = vmatprep.subr.mxu0 0.0
        %485 = vmatpush1.msra.mxu0 0.0
        %486 = vmatprep.subr.mxu0 0.0
        %487 = vmatpush1.msra.mxu0 0.0
        %488 = vmatprep.mubr.f32.mxu0 0.0
        %489 = vmatmul.mubr.f32.gmra.mrb[0].mxu0 %v422
        %v490 = vpop.f32.mrb[0].mxu0
        %v491 = vadd.f32 0.0, %v490
        %v492 = vpop.f32.mrb[0].mxu0
        %493 = vdwg.mxu0
        %v495 = vsel %vm347, %v309, 0
        %497 = vmatprep.subr.mxu0 0.0
        %498 = vmatpush1.msra.mxu0 %v323
        %499 = vmatprep.subr.mxu0 0.0
        %500 = vmatpush1.msra.mxu0 %v324
        %501 = vmatprep.subr.mxu0 0.0
        %502 = vmatpush1.msra.mxu0 %v325
        %503 = vmatprep.subr.mxu0 0.0
        %504 = vmatpush1.msra.mxu0 %v326
        %505 = vmatprep.subr.mxu0 0.0
        %506 = vmatpush1.msra.mxu0 0.0
        %507 = vmatprep.subr.mxu0 0.0
        %508 = vmatpush1.msra.mxu0 0.0
        %509 = vmatprep.subr.mxu0 0.0
        %510 = vmatpush1.msra.mxu0 0.0
        %511 = vmatprep.subr.mxu0 0.0
        %512 = vmatpush1.msra.mxu0 0.0
        %513 = vmatprep.subr.mxu0 0.0
        %514 = vmatpush1.msra.mxu0 0.0
        %515 = vmatprep.subr.mxu0 0.0
        %516 = vmatpush1.msra.mxu0 0.0
        %517 = vmatprep.subr.mxu0 0.0
        %518 = vmatpush1.msra.mxu0 0.0
        %519 = vmatprep.subr.mxu0 0.0
        %520 = vmatpush1.msra.mxu0 0.0
        %521 = vmatprep.subr.mxu0 0.0
        %522 = vmatpush1.msra.mxu0 0.0
        %523 = vmatprep.subr.mxu0 0.0
        %524 = vmatpush1.msra.mxu0 0.0
        %525 = vmatprep.subr.mxu0 0.0
        %526 = vmatpush1.msra.mxu0 0.0
        %527 = vmatprep.subr.mxu0 0.0
        %528 = vmatpush1.msra.mxu0 0.0
        %529 = vmatprep.subr.mxu0 0.0
        %530 = vmatpush1.msra.mxu0 0.0
        %531 = vmatprep.subr.mxu0 0.0
        %532 = vmatpush1.msra.mxu0 0.0
        %533 = vmatprep.subr.mxu0 0.0
        %534 = vmatpush1.msra.mxu0 0.0
        %535 = vmatprep.subr.mxu0 0.0
        %536 = vmatpush1.msra.mxu0 0.0
        %537 = vmatprep.subr.mxu0 0.0
        %538 = vmatpush1.msra.mxu0 0.0
        %539 = vmatprep.subr.mxu0 0.0
        %540 = vmatpush1.msra.mxu0 0.0
        %541 = vmatprep.subr.mxu0 0.0
        %542 = vmatpush1.msra.mxu0 0.0
        %543 = vmatprep.subr.mxu0 0.0
        %544 = vmatpush1.msra.mxu0 0.0
        %545 = vmatprep.subr.mxu0 0.0
        %546 = vmatpush1.msra.mxu0 0.0
        %547 = vmatprep.subr.mxu0 0.0
        %548 = vmatpush1.msra.mxu0 0.0
        %549 = vmatprep.subr.mxu0 0.0
        %550 = vmatpush1.msra.mxu0 0.0
        %551 = vmatprep.subr.mxu0 0.0
        %552 = vmatpush1.msra.mxu0 0.0
        %553 = vmatprep.subr.mxu0 0.0
        %554 = vmatpush1.msra.mxu0 0.0
        %555 = vmatprep.subr.mxu0 0.0
        %556 = vmatpush1.msra.mxu0 0.0
        %557 = vmatprep.subr.mxu0 0.0
        %558 = vmatpush1.msra.mxu0 0.0
        %559 = vmatprep.subr.mxu0 0.0
        %560 = vmatpush1.msra.mxu0 0.0
        %561 = vmatprep.mubr.f32.mxu0 0.0
        %562 = vmatmul.mubr.f32.gmra.mrb[0].mxu0 %v495
        %v563 = vpop.f32.mrb[0].mxu0
        %v564 = vadd.f32 0.0, %v563
        %v565 = vpop.f32.mrb[0].mxu0
        %566 = vdwg.mxu0
        %v568 = vsel %vm347, %v310, 0
        %570 = vmatprep.subr.mxu0 0.0
        %571 = vmatpush1.msra.mxu0 %v327
        %572 = vmatprep.subr.mxu0 0.0
        %573 = vmatpush1.msra.mxu0 %v328
        %574 = vmatprep.subr.mxu0 0.0
        %575 = vmatpush1.msra.mxu0 %v329
        %576 = vmatprep.subr.mxu0 0.0
        %577 = vmatpush1.msra.mxu0 %v330
        %578 = vmatprep.subr.mxu0 0.0
        %579 = vmatpush1.msra.mxu0 0.0
        %580 = vmatprep.subr.mxu0 0.0
        %581 = vmatpush1.msra.mxu0 0.0
        %582 = vmatprep.subr.mxu0 0.0
        %583 = vmatpush1.msra.mxu0 0.0
        %584 = vmatprep.subr.mxu0 0.0
        %585 = vmatpush1.msra.mxu0 0.0
        %586 = vmatprep.subr.mxu0 0.0
        %587 = vmatpush1.msra.mxu0 0.0
        %588 = vmatprep.subr.mxu0 0.0
        %589 = vmatpush1.msra.mxu0 0.0
        %590 = vmatprep.subr.mxu0 0.0
        %591 = vmatpush1.msra.mxu0 0.0
        %592 = vmatprep.subr.mxu0 0.0
        %593 = vmatpush1.msra.mxu0 0.0
        %594 = vmatprep.subr.mxu0 0.0
        %595 = vmatpush1.msra.mxu0 0.0
        %596 = vmatprep.subr.mxu0 0.0
        %597 = vmatpush1.msra.mxu0 0.0
        %598 = vmatprep.subr.mxu0 0.0
        %599 = vmatpush1.msra.mxu0 0.0
        %600 = vmatprep.subr.mxu0 0.0
        %601 = vmatpush1.msra.mxu0 0.0
        %602 = vmatprep.subr.mxu0 0.0
        %603 = vmatpush1.msra.mxu0 0.0
        %604 = vmatprep.subr.mxu0 0.0
        %605 = vmatpush1.msra.mxu0 0.0
        %606 = vmatprep.subr.mxu0 0.0
        %607 = vmatpush1.msra.mxu0 0.0
        %608 = vmatprep.subr.mxu0 0.0
        %609 = vmatpush1.msra.mxu0 0.0
        %610 = vmatprep.subr.mxu0 0.0
        %611 = vmatpush1.msra.mxu0 0.0
        %612 = vmatprep.subr.mxu0 0.0
        %613 = vmatpush1.msra.mxu0 0.0
        %614 = vmatprep.subr.mxu0 0.0
        %615 = vmatpush1.msra.mxu0 0.0
        %616 = vmatprep.subr.mxu0 0.0
        %617 = vmatpush1.msra.mxu0 0.0
        %618 = vmatprep.subr.mxu0 0.0
        %619 = vmatpush1.msra.mxu0 0.0
        %620 = vmatprep.subr.mxu0 0.0
        %621 = vmatpush1.msra.mxu0 0.0
        %622 = vmatprep.subr.mxu0 0.0
        %623 = vmatpush1.msra.mxu0 0.0
        %624 = vmatprep.subr.mxu0 0.0
        %625 = vmatpush1.msra.mxu0 0.0
        %626 = vmatprep.subr.mxu0 0.0
        %627 = vmatpush1.msra.mxu0 0.0
        %628 = vmatprep.subr.mxu0 0.0
        %629 = vmatpush1.msra.mxu0 0.0
        %630 = vmatprep.subr.mxu0 0.0
        %631 = vmatpush1.msra.mxu0 0.0
        %632 = vmatprep.subr.mxu0 0.0
        %633 = vmatpush1.msra.mxu0 0.0
        %634 = vmatprep.mubr.f32.mxu0 0.0
        %635 = vmatmul.mubr.f32.gmra.mrb[0].mxu0 %v568
        %v636 = vpop.f32.mrb[0].mxu0
        %v637 = vadd.f32 0.0, %v636
        %v638 = vpop.f32.mrb[0].mxu0
        %639 = vdwg.mxu0
        %v641 = vsel %vm347, %v311, 0
        %643 = vmatprep.subr.mxu0 0.0
        %644 = vmatpush1.msra.mxu0 %v331
        %645 = vmatprep.subr.mxu0 0.0
        %646 = vmatpush1.msra.mxu0 %v332
        %647 = vmatprep.subr.mxu0 0.0
        %648 = vmatpush1.msra.mxu0 %v333
        %649 = vmatprep.subr.mxu0 0.0
        %650 = vmatpush1.msra.mxu0 %v334
        %651 = vmatprep.subr.mxu0 0.0
        %652 = vmatpush1.msra.mxu0 0.0
        %653 = vmatprep.subr.mxu0 0.0
        %654 = vmatpush1.msra.mxu0 0.0
        %655 = vmatprep.subr.mxu0 0.0
        %656 = vmatpush1.msra.mxu0 0.0
        %657 = vmatprep.subr.mxu0 0.0
        %658 = vmatpush1.msra.mxu0 0.0
        %659 = vmatprep.subr.mxu0 0.0
        %660 = vmatpush1.msra.mxu0 0.0
        %661 = vmatprep.subr.mxu0 0.0
        %662 = vmatpush1.msra.mxu0 0.0
        %663 = vmatprep.subr.mxu0 0.0
        %664 = vmatpush1.msra.mxu0 0.0
        %665 = vmatprep.subr.mxu0 0.0
        %666 = vmatpush1.msra.mxu0 0.0
        %667 = vmatprep.subr.mxu0 0.0
        %668 = vmatpush1.msra.mxu0 0.0
        %669 = vmatprep.subr.mxu0 0.0
        %670 = vmatpush1.msra.mxu0 0.0
        %671 = vmatprep.subr.mxu0 0.0
        %672 = vmatpush1.msra.mxu0 0.0
        %673 = vmatprep.subr.mxu0 0.0
        %674 = vmatpush1.msra.mxu0 0.0
        %675 = vmatprep.subr.mxu0 0.0
        %676 = vmatpush1.msra.mxu0 0.0
        %677 = vmatprep.subr.mxu0 0.0
        %678 = vmatpush1.msra.mxu0 0.0
        %679 = vmatprep.subr.mxu0 0.0
        %680 = vmatpush1.msra.mxu0 0.0
        %681 = vmatprep.subr.mxu0 0.0
        %682 = vmatpush1.msra.mxu0 0.0
        %683 = vmatprep.subr.mxu0 0.0
        %684 = vmatpush1.msra.mxu0 0.0
        %685 = vmatprep.subr.mxu0 0.0
        %686 = vmatpush1.msra.mxu0 0.0
        %687 = vmatprep.subr.mxu0 0.0
        %688 = vmatpush1.msra.mxu0 0.0
        %689 = vmatprep.subr.mxu0 0.0
        %690 = vmatpush1.msra.mxu0 0.0
        %691 = vmatprep.subr.mxu0 0.0
        %692 = vmatpush1.msra.mxu0 0.0
        %693 = vmatprep.subr.mxu0 0.0
        %694 = vmatpush1.msra.mxu0 0.0
        %695 = vmatprep.subr.mxu0 0.0
        %696 = vmatpush1.msra.mxu0 0.0
        %697 = vmatprep.subr.mxu0 0.0
        %698 = vmatpush1.msra.mxu0 0.0
        %699 = vmatprep.subr.mxu0 0.0
        %700 = vmatpush1.msra.mxu0 0.0
        %701 = vmatprep.subr.mxu0 0.0
        %702 = vmatpush1.msra.mxu0 0.0
        %703 = vmatprep.subr.mxu0 0.0
        %704 = vmatpush1.msra.mxu0 0.0
        %705 = vmatprep.subr.mxu0 0.0
        %706 = vmatpush1.msra.mxu0 0.0
        %707 = vmatprep.mubr.f32.mxu0 0.0
        %708 = vmatmul.mubr.f32.gmra.mrb[0].mxu0 %v641
        %v709 = vpop.f32.mrb[0].mxu0
        %v710 = vadd.f32 0.0, %v709
        %v711 = vpop.f32.mrb[0].mxu0
        %712 = vdwg.mxu0
        %v714 = vsel %vm347, %v312, 0
        %716 = vmatprep.subr.mxu0 0.0
        %717 = vmatpush1.msra.mxu0 %v335
        %718 = vmatprep.subr.mxu0 0.0
        %719 = vmatpush1.msra.mxu0 %v336
        %720 = vmatprep.subr.mxu0 0.0
        %721 = vmatpush1.msra.mxu0 %v337
        %722 = vmatprep.subr.mxu0 0.0
        %723 = vmatpush1.msra.mxu0 %v338
        %724 = vmatprep.subr.mxu0 0.0
        %725 = vmatpush1.msra.mxu0 0.0
        %726 = vmatprep.subr.mxu0 0.0
        %727 = vmatpush1.msra.mxu0 0.0
        %728 = vmatprep.subr.mxu0 0.0
        %729 = vmatpush1.msra.mxu0 0.0
        %730 = vmatprep.subr.mxu0 0.0
        %731 = vmatpush1.msra.mxu0 0.0
        %732 = vmatprep.subr.mxu0 0.0
        %733 = vmatpush1.msra.mxu0 0.0
        %734 = vmatprep.subr.mxu0 0.0
        %735 = vmatpush1.msra.mxu0 0.0
        %736 = vmatprep.subr.mxu0 0.0
        %737 = vmatpush1.msra.mxu0 0.0
        %738 = vmatprep.subr.mxu0 0.0
        %739 = vmatpush1.msra.mxu0 0.0
        %740 = vmatprep.subr.mxu0 0.0
        %741 = vmatpush1.msra.mxu0 0.0
        %742 = vmatprep.subr.mxu0 0.0
        %743 = vmatpush1.msra.mxu0 0.0
        %744 = vmatprep.subr.mxu0 0.0
        %745 = vmatpush1.msra.mxu0 0.0
        %746 = vmatprep.subr.mxu0 0.0
        %747 = vmatpush1.msra.mxu0 0.0
        %748 = vmatprep.subr.mxu0 0.0
        %749 = vmatpush1.msra.mxu0 0.0
        %750 = vmatprep.subr.mxu0 0.0
        %751 = vmatpush1.msra.mxu0 0.0
        %752 = vmatprep.subr.mxu0 0.0
        %753 = vmatpush1.msra.mxu0 0.0
        %754 = vmatprep.subr.mxu0 0.0
        %755 = vmatpush1.msra.mxu0 0.0
        %756 = vmatprep.subr.mxu0 0.0
        %757 = vmatpush1.msra.mxu0 0.0
        %758 = vmatprep.subr.mxu0 0.0
        %759 = vmatpush1.msra.mxu0 0.0
        %760 = vmatprep.subr.mxu0 0.0
        %761 = vmatpush1.msra.mxu0 0.0
        %762 = vmatprep.subr.mxu0 0.0
        %763 = vmatpush1.msra.mxu0 0.0
        %764 = vmatprep.subr.mxu0 0.0
        %765 = vmatpush1.msra.mxu0 0.0
        %766 = vmatprep.subr.mxu0 0.0
        %767 = vmatpush1.msra.mxu0 0.0
        %768 = vmatprep.subr.mxu0 0.0
        %769 = vmatpush1.msra.mxu0 0.0
        %770 = vmatprep.subr.mxu0 0.0
        %771 = vmatpush1.msra.mxu0 0.0
        %772 = vmatprep.subr.mxu0 0.0
        %773 = vmatpush1.msra.mxu0 0.0
        %774 = vmatprep.subr.mxu0 0.0
        %775 = vmatpush1.msra.mxu0 0.0
        %776 = vmatprep.subr.mxu0 0.0
        %777 = vmatpush1.msra.mxu0 0.0
        %778 = vmatprep.subr.mxu0 0.0
        %779 = vmatpush1.msra.mxu0 0.0
        %780 = vmatprep.mubr.f32.mxu0 0.0
        %781 = vmatmul.mubr.f32.gmra.mrb[0].mxu0 %v714
        %v782 = vpop.f32.mrb[0].mxu0
        %v783 = vadd.f32 0.0, %v782
        %v784 = vpop.f32.mrb[0].mxu0
        %785 = vdwg.mxu0
        %v787 = vsel %vm347, %v313, 0
        %789 = vmatprep.subr.mxu0 0.0
        %790 = vmatpush1.msra.mxu0 %v339
        %791 = vmatprep.subr.mxu0 0.0
        %792 = vmatpush1.msra.mxu0 %v340
        %793 = vmatprep.subr.mxu0 0.0
        %794 = vmatpush1.msra.mxu0 %v341
        %795 = vmatprep.subr.mxu0 0.0
        %796 = vmatpush1.msra.mxu0 %v342
        %797 = vmatprep.subr.mxu0 0.0
        %798 = vmatpush1.msra.mxu0 0.0
        %799 = vmatprep.subr.mxu0 0.0
        %800 = vmatpush1.msra.mxu0 0.0
        %801 = vmatprep.subr.mxu0 0.0
        %802 = vmatpush1.msra.mxu0 0.0
        %803 = vmatprep.subr.mxu0 0.0
        %804 = vmatpush1.msra.mxu0 0.0
        %805 = vmatprep.subr.mxu0 0.0
        %806 = vmatpush1.msra.mxu0 0.0
        %807 = vmatprep.subr.mxu0 0.0
        %808 = vmatpush1.msra.mxu0 0.0
        %809 = vmatprep.subr.mxu0 0.0
        %810 = vmatpush1.msra.mxu0 0.0
        %811 = vmatprep.subr.mxu0 0.0
        %812 = vmatpush1.msra.mxu0 0.0
        %813 = vmatprep.subr.mxu0 0.0
        %814 = vmatpush1.msra.mxu0 0.0
        %815 = vmatprep.subr.mxu0 0.0
        %816 = vmatpush1.msra.mxu0 0.0
        %817 = vmatprep.subr.mxu0 0.0
        %818 = vmatpush1.msra.mxu0 0.0
        %819 = vmatprep.subr.mxu0 0.0
        %820 = vmatpush1.msra.mxu0 0.0
        %821 = vmatprep.subr.mxu0 0.0
        %822 = vmatpush1.msra.mxu0 0.0
        %823 = vmatprep.subr.mxu0 0.0
        %824 = vmatpush1.msra.mxu0 0.0
        %825 = vmatprep.subr.mxu0 0.0
        %826 = vmatpush1.msra.mxu0 0.0
        %827 = vmatprep.subr.mxu0 0.0
        %828 = vmatpush1.msra.mxu0 0.0
        %829 = vmatprep.subr.mxu0 0.0
        %830 = vmatpush1.msra.mxu0 0.0
        %831 = vmatprep.subr.mxu0 0.0
        %832 = vmatpush1.msra.mxu0 0.0
        %833 = vmatprep.subr.mxu0 0.0
        %834 = vmatpush1.msra.mxu0 0.0
        %835 = vmatprep.subr.mxu0 0.0
        %836 = vmatpush1.msra.mxu0 0.0
        %837 = vmatprep.subr.mxu0 0.0
        %838 = vmatpush1.msra.mxu0 0.0
        %839 = vmatprep.subr.mxu0 0.0
        %840 = vmatpush1.msra.mxu0 0.0
        %841 = vmatprep.subr.mxu0 0.0
        %842 = vmatpush1.msra.mxu0 0.0
        %843 = vmatprep.subr.mxu0 0.0
        %844 = vmatpush1.msra.mxu0 0.0
        %845 = vmatprep.subr.mxu0 0.0
        %846 = vmatpush1.msra.mxu0 0.0
        %847 = vmatprep.subr.mxu0 0.0
        %848 = vmatpush1.msra.mxu0 0.0
        %849 = vmatprep.subr.mxu0 0.0
        %850 = vmatpush1.msra.mxu0 0.0
        %851 = vmatprep.subr.mxu0 0.0
        %852 = vmatpush1.msra.mxu0 0.0
        %853 = vmatprep.mubr.f32.mxu0 0.0
        %854 = vmatmul.mubr.f32.gmra.mrb[0].mxu0 %v787
        %v855 = vpop.f32.mrb[0].mxu0
        %v856 = vadd.f32 0.0, %v855
        %v857 = vpop.f32.mrb[0].mxu0
        %858 = vdwg.mxu0
        %v860 = vsel %vm347, %v314, 0
        %862 = vmatprep.subr.mxu0 0.0
        %863 = vmatpush1.msra.mxu0 %v343
        %864 = vmatprep.subr.mxu0 0.0
        %865 = vmatpush1.msra.mxu0 %v344
        %866 = vmatprep.subr.mxu0 0.0
        %867 = vmatpush1.msra.mxu0 %v345
        %868 = vmatprep.subr.mxu0 0.0
        %869 = vmatpush1.msra.mxu0 %v346
        %870 = vmatprep.subr.mxu0 0.0
        %871 = vmatpush1.msra.mxu0 0.0
        %872 = vmatprep.subr.mxu0 0.0
        %873 = vmatpush1.msra.mxu0 0.0
        %874 = vmatprep.subr.mxu0 0.0
        %875 = vmatpush1.msra.mxu0 0.0
        %876 = vmatprep.subr.mxu0 0.0
        %877 = vmatpush1.msra.mxu0 0.0
        %878 = vmatprep.subr.mxu0 0.0
        %879 = vmatpush1.msra.mxu0 0.0
        %880 = vmatprep.subr.mxu0 0.0
        %881 = vmatpush1.msra.mxu0 0.0
        %882 = vmatprep.subr.mxu0 0.0
        %883 = vmatpush1.msra.mxu0 0.0
        %884 = vmatprep.subr.mxu0 0.0
        %885 = vmatpush1.msra.mxu0 0.0
        %886 = vmatprep.subr.mxu0 0.0
        %887 = vmatpush1.msra.mxu0 0.0
        %888 = vmatprep.subr.mxu0 0.0
        %889 = vmatpush1.msra.mxu0 0.0
        %890 = vmatprep.subr.mxu0 0.0
        %891 = vmatpush1.msra.mxu0 0.0
        %892 = vmatprep.subr.mxu0 0.0
        %893 = vmatpush1.msra.mxu0 0.0
        %894 = vmatprep.subr.mxu0 0.0
        %895 = vmatpush1.msra.mxu0 0.0
        %896 = vmatprep.subr.mxu0 0.0
        %897 = vmatpush1.msra.mxu0 0.0
        %898 = vmatprep.subr.mxu0 0.0
        %899 = vmatpush1.msra.mxu0 0.0
        %900 = vmatprep.subr.mxu0 0.0
        %901 = vmatpush1.msra.mxu0 0.0
        %902 = vmatprep.subr.mxu0 0.0
        %903 = vmatpush1.msra.mxu0 0.0
        %904 = vmatprep.subr.mxu0 0.0
        %905 = vmatpush1.msra.mxu0 0.0
        %906 = vmatprep.subr.mxu0 0.0
        %907 = vmatpush1.msra.mxu0 0.0
        %908 = vmatprep.subr.mxu0 0.0
        %909 = vmatpush1.msra.mxu0 0.0
        %910 = vmatprep.subr.mxu0 0.0
        %911 = vmatpush1.msra.mxu0 0.0
        %912 = vmatprep.subr.mxu0 0.0
        %913 = vmatpush1.msra.mxu0 0.0
        %914 = vmatprep.subr.mxu0 0.0
        %915 = vmatpush1.msra.mxu0 0.0
        %916 = vmatprep.subr.mxu0 0.0
        %917 = vmatpush1.msra.mxu0 0.0
        %918 = vmatprep.subr.mxu0 0.0
        %919 = vmatpush1.msra.mxu0 0.0
        %920 = vmatprep.subr.mxu0 0.0
        %921 = vmatpush1.msra.mxu0 0.0
        %922 = vmatprep.subr.mxu0 0.0
        %923 = vmatpush1.msra.mxu0 0.0
        %924 = vmatprep.subr.mxu0 0.0
        %925 = vmatpush1.msra.mxu0 0.0
        %926 = vmatprep.mubr.f32.mxu0 0.0
        %927 = vmatmul.mubr.f32.gmra.mrb[0].mxu0 %v860
        %v928 = vpop.f32.mrb[0].mxu0
        %v929 = vadd.f32 0.0, %v928
        %v930 = vpop.f32.mrb[0].mxu0
        %931 = vdwg.mxu0
        %v940 = vrot.slane %v491, 7
        %vm941 = vcmask 1041409
        %v942 = vsel %vm941, %v940, %v418
        %v943 = vrot.slane %v564, 6
        %vm944 = vcmask 1042434
        %v945 = vsel %vm944, %v943, %v942
        %v946 = vrot.slane %v637, 5
        %vm947 = vcmask 1043459
        %v948 = vsel %vm947, %v946, %v945
        %v949 = vrot.slane %v710, 4
        %vm950 = vcmask 1044484
        %v951 = vsel %vm950, %v949, %v948
        %v952 = vrot.slane %v783, 3
        %vm953 = vcmask 1045509
        %v954 = vsel %vm953, %v952, %v951
        %v955 = vrot.slane %v856, 2
        %vm956 = vcmask 1046534
        %v957 = vsel %vm956, %v955, %v954
        %v958 = vrot.slane %v929, 1
        %vm959 = vcmask 1047559
        %v960 = vsel %vm959, %v958, %v957
        %962 = vst [vmem:[#allocation2] sm:$0xff] %v960
        %v963 = vsel %vm944, %v940, %v418
        %v964 = vsel %vm947, %v943, %v963
        %v965 = vsel %vm950, %v946, %v964
        %v966 = vsel %vm953, %v949, %v965
        %v967 = vsel %vm956, %v952, %v966
        %v968 = vsel %vm959, %v955, %v967
        %s971 = scalar_lea.vmem [#allocation2], 8
        %972 = vst [vmem:[%s971 - $0x1] sm:$0xfe] %v968
        %973 = vst [vmem:[%s971 + $0x7] sm:$0x1] %v958
        %v974 = vsel %vm947, %v940, %v418
        %v975 = vsel %vm950, %v943, %v974
        %v976 = vsel %vm953, %v946, %v975
        %v977 = vsel %vm956, %v949, %v976
        %v978 = vsel %vm959, %v952, %v977
        %v979 = vsel %vm941, %v958, %v955
        %s982 = scalar_lea.vmem [#allocation2], 16
        %983 = vst [vmem:[%s982 - $0x2] sm:$0xfc] %v978
        %984 = vst [vmem:[%s982 + $0x6] sm:$0x3] %v979
        %v985 = vsel %vm950, %v940, %v418
        %v986 = vsel %vm953, %v943, %v985
        %v987 = vsel %vm956, %v946, %v986
        %v988 = vsel %vm959, %v949, %v987
        %v989 = vsel %vm941, %v955, %v952
        %v990 = vsel %vm944, %v958, %v989
        %s993 = scalar_lea.vmem [#allocation2], 24
        %994 = vst [vmem:[%s993 - $0x3] sm:$0xf8] %v988
        %995 = vst [vmem:[%s993 + $0x5] sm:$0x7] %v990
        %v996 = vld [vmem:[#allocation2] sm:$0xff]
        %v997 = vld [vmem:[#allocation2 + $0x8] sm:$0xff]
        %v998 = vld [vmem:[#allocation2 + $0x10] sm:$0xff]
        %v999 = vld [vmem:[#allocation2 + $0x18] sm:$0xff]
        %v1000 = vld [vmem:[%s3] sm:$0xf]
        %v1001 = vld [vmem:[%s4] sm:$0xff]
        %v1002 = vld [vmem:[%s4 + $0x8] sm:$0xff]
        %v1003 = vld [vmem:[%s4 + $0x10] sm:$0xff]
        %v1004 = vld [vmem:[%s4 + $0x18] sm:$0xff]
        %v1005 = vld [vmem:[%s4 + $0x20] sm:$0xff]
        %v1006 = vld [vmem:[%s4 + $0x28] sm:$0xff]
        %v1007 = vld [vmem:[%s4 + $0x30] sm:$0xff]
        %v1008 = vld [vmem:[%s4 + $0x38] sm:$0xff]
        %v1009 = vld [vmem:[%s4 + $0x40] sm:$0xff]
        %v1010 = vld [vmem:[%s4 + $0x48] sm:$0xff]
        %v1011 = vld [vmem:[%s4 + $0x50] sm:$0xff]
        %v1012 = vld [vmem:[%s4 + $0x58] sm:$0xff]
        %v1013 = vld [vmem:[%s4 + $0x60] sm:$0xff]
        %v1014 = vld [vmem:[%s4 + $0x68] sm:$0xff]
        %v1015 = vld [vmem:[%s4 + $0x70] sm:$0xff]
        %v1016 = vld [vmem:[%s4 + $0x78] sm:$0xff]
        %v1017 = vld [vmem:[%s2] sm:$0x1]
        %v1018 = vmul.f32 %v996, %v996
        %v1019 = vmul.f32 %v997, %v997
        %v1020 = vmul.f32 %v998, %v998
        %v1021 = vmul.f32 %v999, %v999
        %1022 = vmatprep.subr.mxu0 0.0
        %1023 = vmatpush1.xpose.msra.mxu0 %v1018
        %1024 = vmatprep.subr.mxu0 0.0
        %1025 = vmatpush1.xpose.msra.mxu0 0.0
        %1026 = vmatprep.subr.mxu0 0.0
        %1027 = vmatpush1.xpose.msra.mxu0 0.0
        %1028 = vmatprep.subr.mxu0 0.0
        %1029 = vmatpush1.xpose.msra.mxu0 0.0
        %1030 = vmatprep.subr.mxu0 0.0
        %1031 = vmatpush1.xpose.msra.mxu0 0.0
        %1032 = vmatprep.subr.mxu0 0.0
        %1033 = vmatpush1.xpose.msra.mxu0 0.0
        %1034 = vmatprep.subr.mxu0 0.0
        %1035 = vmatpush1.xpose.msra.mxu0 0.0
        %1036 = vmatprep.subr.mxu0 0.0
        %1037 = vmatpush1.xpose.msra.mxu0 0.0
        %1038 = vmatprep.subr.mxu0 0.0
        %1039 = vmatpush1.xpose.msra.mxu0 0.0
        %1040 = vmatprep.subr.mxu0 0.0
        %1041 = vmatpush1.xpose.msra.mxu0 0.0
        %1042 = vmatprep.subr.mxu0 0.0
        %1043 = vmatpush1.xpose.msra.mxu0 0.0
        %1044 = vmatprep.subr.mxu0 0.0
        %1045 = vmatpush1.xpose.msra.mxu0 0.0
        %1046 = vmatprep.subr.mxu0 0.0
        %1047 = vmatpush1.xpose.msra.mxu0 0.0
        %1048 = vmatprep.subr.mxu0 0.0
        %1049 = vmatpush1.xpose.msra.mxu0 0.0
        %1050 = vmatprep.subr.mxu0 0.0
        %1051 = vmatpush1.xpose.msra.mxu0 0.0
        %1052 = vmatprep.subr.mxu0 0.0
        %1053 = vmatpush1.xpose.msra.mxu0 0.0
        %1054 = vmatprep.subr.mxu0 0.0
        %1055 = vmatpush1.xpose.msra.mxu0 0.0
        %1056 = vmatprep.subr.mxu0 0.0
        %1057 = vmatpush1.xpose.msra.mxu0 0.0
        %1058 = vmatprep.subr.mxu0 0.0
        %1059 = vmatpush1.xpose.msra.mxu0 0.0
        %1060 = vmatprep.subr.mxu0 0.0
        %1061 = vmatpush1.xpose.msra.mxu0 0.0
        %1062 = vmatprep.subr.mxu0 0.0
        %1063 = vmatpush1.xpose.msra.mxu0 0.0
        %1064 = vmatprep.subr.mxu0 0.0
        %1065 = vmatpush1.xpose.msra.mxu0 0.0
        %1066 = vmatprep.subr.mxu0 0.0
        %1067 = vmatpush1.xpose.msra.mxu0 0.0
        %1068 = vmatprep.subr.mxu0 0.0
        %1069 = vmatpush1.xpose.msra.mxu0 0.0
        %1070 = vmatprep.subr.mxu0 0.0
        %1071 = vmatpush1.xpose.msra.mxu0 0.0
        %1072 = vmatprep.subr.mxu0 0.0
        %1073 = vmatpush1.xpose.msra.mxu0 0.0
        %1074 = vmatprep.subr.mxu0 0.0
        %1075 = vmatpush1.xpose.msra.mxu0 0.0
        %1076 = vmatprep.subr.mxu0 0.0
        %1077 = vmatpush1.xpose.msra.mxu0 0.0
        %1078 = vmatprep.subr.mxu0 0.0
        %1079 = vmatpush1.xpose.msra.mxu0 0.0
        %1080 = vmatprep.subr.mxu0 0.0
        %1081 = vmatpush1.xpose.msra.mxu0 0.0
        %1082 = vmatprep.subr.mxu0 0.0
        %1083 = vmatpush1.xpose.msra.mxu0 0.0
        %1084 = vmatprep.subr.mxu0 0.0
        %1085 = vmatpush1.xpose.msra.mxu0 0.0
        %1086 = vmatprep.mubr.f32.mxu0 0.0
        %1087 = vmatmul.mubr.f32.gmra.mrb[0].mxu0 %v1000
        %v1088 = vpop.f32.mrb[0].mxu0
        %v1089 = vadd.f32 0.0, %v1088
        %v1090 = vpop.f32.mrb[0].mxu0
        %1091 = vdwg.mxu0
        %1092 = vmatprep.subr.mxu0 0.0
        %1093 = vmatpush1.xpose.msra.mxu0 %v1019
        %1094 = vmatprep.subr.mxu0 0.0
        %1095 = vmatpush1.xpose.msra.mxu0 0.0
        %1096 = vmatprep.subr.mxu0 0.0
        %1097 = vmatpush1.xpose.msra.mxu0 0.0
        %1098 = vmatprep.subr.mxu0 0.0
        %1099 = vmatpush1.xpose.msra.mxu0 0.0
        %1100 = vmatprep.subr.mxu0 0.0
        %1101 = vmatpush1.xpose.msra.mxu0 0.0
        %1102 = vmatprep.subr.mxu0 0.0
        %1103 = vmatpush1.xpose.msra.mxu0 0.0
        %1104 = vmatprep.subr.mxu0 0.0
        %1105 = vmatpush1.xpose.msra.mxu0 0.0
        %1106 = vmatprep.subr.mxu0 0.0
        %1107 = vmatpush1.xpose.msra.mxu0 0.0
        %1108 = vmatprep.subr.mxu0 0.0
        %1109 = vmatpush1.xpose.msra.mxu0 0.0
        %1110 = vmatprep.subr.mxu0 0.0
        %1111 = vmatpush1.xpose.msra.mxu0 0.0
        %1112 = vmatprep.subr.mxu0 0.0
        %1113 = vmatpush1.xpose.msra.mxu0 0.0
        %1114 = vmatprep.subr.mxu0 0.0
        %1115 = vmatpush1.xpose.msra.mxu0 0.0
        %1116 = vmatprep.subr.mxu0 0.0
        %1117 = vmatpush1.xpose.msra.mxu0 0.0
        %1118 = vmatprep.subr.mxu0 0.0
        %1119 = vmatpush1.xpose.msra.mxu0 0.0
        %1120 = vmatprep.subr.mxu0 0.0
        %1121 = vmatpush1.xpose.msra.mxu0 0.0
        %1122 = vmatprep.subr.mxu0 0.0
        %1123 = vmatpush1.xpose.msra.mxu0 0.0
        %1124 = vmatprep.subr.mxu0 0.0
        %1125 = vmatpush1.xpose.msra.mxu0 0.0
        %1126 = vmatprep.subr.mxu0 0.0
        %1127 = vmatpush1.xpose.msra.mxu0 0.0
        %1128 = vmatprep.subr.mxu0 0.0
        %1129 = vmatpush1.xpose.msra.mxu0 0.0
        %1130 = vmatprep.subr.mxu0 0.0
        %1131 = vmatpush1.xpose.msra.mxu0 0.0
        %1132 = vmatprep.subr.mxu0 0.0
        %1133 = vmatpush1.xpose.msra.mxu0 0.0
        %1134 = vmatprep.subr.mxu0 0.0
        %1135 = vmatpush1.xpose.msra.mxu0 0.0
        %1136 = vmatprep.subr.mxu0 0.0
        %1137 = vmatpush1.xpose.msra.mxu0 0.0
        %1138 = vmatprep.subr.mxu0 0.0
        %1139 = vmatpush1.xpose.msra.mxu0 0.0
        %1140 = vmatprep.subr.mxu0 0.0
        %1141 = vmatpush1.xpose.msra.mxu0 0.0
        %1142 = vmatprep.subr.mxu0 0.0
        %1143 = vmatpush1.xpose.msra.mxu0 0.0
        %1144 = vmatprep.subr.mxu0 0.0
        %1145 = vmatpush1.xpose.msra.mxu0 0.0
        %1146 = vmatprep.subr.mxu0 0.0
        %1147 = vmatpush1.xpose.msra.mxu0 0.0
        %1148 = vmatprep.subr.mxu0 0.0
        %1149 = vmatpush1.xpose.msra.mxu0 0.0
        %1150 = vmatprep.subr.mxu0 0.0
        %1151 = vmatpush1.xpose.msra.mxu0 0.0
        %1152 = vmatprep.subr.mxu0 0.0
        %1153 = vmatpush1.xpose.msra.mxu0 0.0
        %1154 = vmatprep.subr.mxu0 0.0
        %1155 = vmatpush1.xpose.msra.mxu0 0.0
        %1156 = vmatprep.mubr.f32.mxu0 0.0
        %1157 = vmatmul.mubr.f32.gmra.mrb[0].mxu0 %v1000
        %v1158 = vpop.f32.mrb[0].mxu0
        %v1159 = vadd.f32 0.0, %v1158
        %v1160 = vpop.f32.mrb[0].mxu0
        %1161 = vdwg.mxu0
        %1162 = vmatprep.subr.mxu0 0.0
        %1163 = vmatpush1.xpose.msra.mxu0 %v1020
        %1164 = vmatprep.subr.mxu0 0.0
        %1165 = vmatpush1.xpose.msra.mxu0 0.0
        %1166 = vmatprep.subr.mxu0 0.0
        %1167 = vmatpush1.xpose.msra.mxu0 0.0
        %1168 = vmatprep.subr.mxu0 0.0
        %1169 = vmatpush1.xpose.msra.mxu0 0.0
        %1170 = vmatprep.subr.mxu0 0.0
        %1171 = vmatpush1.xpose.msra.mxu0 0.0
        %1172 = vmatprep.subr.mxu0 0.0
        %1173 = vmatpush1.xpose.msra.mxu0 0.0
        %1174 = vmatprep.subr.mxu0 0.0
        %1175 = vmatpush1.xpose.msra.mxu0 0.0
        %1176 = vmatprep.subr.mxu0 0.0
        %1177 = vmatpush1.xpose.msra.mxu0 0.0
        %1178 = vmatprep.subr.mxu0 0.0
        %1179 = vmatpush1.xpose.msra.mxu0 0.0
        %1180 = vmatprep.subr.mxu0 0.0
        %1181 = vmatpush1.xpose.msra.mxu0 0.0
        %1182 = vmatprep.subr.mxu0 0.0
        %1183 = vmatpush1.xpose.msra.mxu0 0.0
        %1184 = vmatprep.subr.mxu0 0.0
        %1185 = vmatpush1.xpose.msra.mxu0 0.0
        %1186 = vmatprep.subr.mxu0 0.0
        %1187 = vmatpush1.xpose.msra.mxu0 0.0
        %1188 = vmatprep.subr.mxu0 0.0
        %1189 = vmatpush1.xpose.msra.mxu0 0.0
        %1190 = vmatprep.subr.mxu0 0.0
        %1191 = vmatpush1.xpose.msra.mxu0 0.0
        %1192 = vmatprep.subr.mxu0 0.0
        %1193 = vmatpush1.xpose.msra.mxu0 0.0
        %1194 = vmatprep.subr.mxu0 0.0
        %1195 = vmatpush1.xpose.msra.mxu0 0.0
        %1196 = vmatprep.subr.mxu0 0.0
        %1197 = vmatpush1.xpose.msra.mxu0 0.0
        %1198 = vmatprep.subr.mxu0 0.0
        %1199 = vmatpush1.xpose.msra.mxu0 0.0
        %1200 = vmatprep.subr.mxu0 0.0
        %1201 = vmatpush1.xpose.msra.mxu0 0.0
        %1202 = vmatprep.subr.mxu0 0.0
        %1203 = vmatpush1.xpose.msra.mxu0 0.0
        %1204 = vmatprep.subr.mxu0 0.0
        %1205 = vmatpush1.xpose.msra.mxu0 0.0
        %1206 = vmatprep.subr.mxu0 0.0
        %1207 = vmatpush1.xpose.msra.mxu0 0.0
        %1208 = vmatprep.subr.mxu0 0.0
        %1209 = vmatpush1.xpose.msra.mxu0 0.0
        %1210 = vmatprep.subr.mxu0 0.0
        %1211 = vmatpush1.xpose.msra.mxu0 0.0
        %1212 = vmatprep.subr.mxu0 0.0
        %1213 = vmatpush1.xpose.msra.mxu0 0.0
        %1214 = vmatprep.subr.mxu0 0.0
        %1215 = vmatpush1.xpose.msra.mxu0 0.0
        %1216 = vmatprep.subr.mxu0 0.0
        %1217 = vmatpush1.xpose.msra.mxu0 0.0
        %1218 = vmatprep.subr.mxu0 0.0
        %1219 = vmatpush1.xpose.msra.mxu0 0.0
        %1220 = vmatprep.subr.mxu0 0.0
        %1221 = vmatpush1.xpose.msra.mxu0 0.0
        %1222 = vmatprep.subr.mxu0 0.0
        %1223 = vmatpush1.xpose.msra.mxu0 0.0
        %1224 = vmatprep.subr.mxu0 0.0
        %1225 = vmatpush1.xpose.msra.mxu0 0.0
        %1226 = vmatprep.mubr.f32.mxu0 0.0
        %1227 = vmatmul.mubr.f32.gmra.mrb[0].mxu0 %v1000
        %v1228 = vpop.f32.mrb[0].mxu0
        %v1229 = vadd.f32 0.0, %v1228
        %v1230 = vpop.f32.mrb[0].mxu0
        %1231 = vdwg.mxu0
        %1232 = vmatprep.subr.mxu0 0.0
        %1233 = vmatpush1.xpose.msra.mxu0 %v1021
        %1234 = vmatprep.subr.mxu0 0.0
        %1235 = vmatpush1.xpose.msra.mxu0 0.0
        %1236 = vmatprep.subr.mxu0 0.0
        %1237 = vmatpush1.xpose.msra.mxu0 0.0
        %1238 = vmatprep.subr.mxu0 0.0
        %1239 = vmatpush1.xpose.msra.mxu0 0.0
        %1240 = vmatprep.subr.mxu0 0.0
        %1241 = vmatpush1.xpose.msra.mxu0 0.0
        %1242 = vmatprep.subr.mxu0 0.0
        %1243 = vmatpush1.xpose.msra.mxu0 0.0
        %1244 = vmatprep.subr.mxu0 0.0
        %1245 = vmatpush1.xpose.msra.mxu0 0.0
        %1246 = vmatprep.subr.mxu0 0.0
        %1247 = vmatpush1.xpose.msra.mxu0 0.0
        %1248 = vmatprep.subr.mxu0 0.0
        %1249 = vmatpush1.xpose.msra.mxu0 0.0
        %1250 = vmatprep.subr.mxu0 0.0
        %1251 = vmatpush1.xpose.msra.mxu0 0.0
        %1252 = vmatprep.subr.mxu0 0.0
        %1253 = vmatpush1.xpose.msra.mxu0 0.0
        %1254 = vmatprep.subr.mxu0 0.0
        %1255 = vmatpush1.xpose.msra.mxu0 0.0
        %1256 = vmatprep.subr.mxu0 0.0
        %1257 = vmatpush1.xpose.msra.mxu0 0.0
        %1258 = vmatprep.subr.mxu0 0.0
        %1259 = vmatpush1.xpose.msra.mxu0 0.0
        %1260 = vmatprep.subr.mxu0 0.0
        %1261 = vmatpush1.xpose.msra.mxu0 0.0
        %1262 = vmatprep.subr.mxu0 0.0
        %1263 = vmatpush1.xpose.msra.mxu0 0.0
        %1264 = vmatprep.subr.mxu0 0.0
        %1265 = vmatpush1.xpose.msra.mxu0 0.0
        %1266 = vmatprep.subr.mxu0 0.0
        %1267 = vmatpush1.xpose.msra.mxu0 0.0
        %1268 = vmatprep.subr.mxu0 0.0
        %1269 = vmatpush1.xpose.msra.mxu0 0.0
        %1270 = vmatprep.subr.mxu0 0.0
        %1271 = vmatpush1.xpose.msra.mxu0 0.0
        %1272 = vmatprep.subr.mxu0 0.0
        %1273 = vmatpush1.xpose.msra.mxu0 0.0
        %1274 = vmatprep.subr.mxu0 0.0
        %1275 = vmatpush1.xpose.msra.mxu0 0.0
        %1276 = vmatprep.subr.mxu0 0.0
        %1277 = vmatpush1.xpose.msra.mxu0 0.0
        %1278 = vmatprep.subr.mxu0 0.0
        %1279 = vmatpush1.xpose.msra.mxu0 0.0
        %1280 = vmatprep.subr.mxu0 0.0
        %1281 = vmatpush1.xpose.msra.mxu0 0.0
        %1282 = vmatprep.subr.mxu0 0.0
        %1283 = vmatpush1.xpose.msra.mxu0 0.0
        %1284 = vmatprep.subr.mxu0 0.0
        %1285 = vmatpush1.xpose.msra.mxu0 0.0
        %1286 = vmatprep.subr.mxu0 0.0
        %1287 = vmatpush1.xpose.msra.mxu0 0.0
        %1288 = vmatprep.subr.mxu0 0.0
        %1289 = vmatpush1.xpose.msra.mxu0 0.0
        %1290 = vmatprep.subr.mxu0 0.0
        %1291 = vmatpush1.xpose.msra.mxu0 0.0
        %1292 = vmatprep.subr.mxu0 0.0
        %1293 = vmatpush1.xpose.msra.mxu0 0.0
        %1294 = vmatprep.subr.mxu0 0.0
        %1295 = vmatpush1.xpose.msra.mxu0 0.0
        %1296 = vmatprep.mubr.f32.mxu0 0.0
        %1297 = vmatmul.mubr.f32.gmra.mrb[0].mxu0 %v1000
        %v1298 = vpop.f32.mrb[0].mxu0
        %v1299 = vadd.f32 0.0, %v1298
        %v1300 = vpop.f32.mrb[0].mxu0
        %1301 = vdwg.mxu0
        %vm1302 = vcmask 64512
        %v1303 = vsel %vm1302, 1.0, 0.0
        %1304 = vadd.xlane.f32.xlu0 %v1303
        %v1305 = vpop.xlane.xlu0 %1304
        %v1306 = vrcp.pop %v1305
        %v1307 = vmul.f32 1.0, %v1306
        %v1309 = vsel %vm1302, %v1307, 0
        %1311 = vmatprep.subr.mxu0 0.0
        %1312 = vmatpush1.msra.mxu0 %v996
        %1313 = vmatprep.subr.mxu0 0.0
        %1314 = vmatpush1.msra.mxu0 0.0
        %1315 = vmatprep.subr.mxu0 0.0
        %1316 = vmatpush1.msra.mxu0 0.0
        %1317 = vmatprep.subr.mxu0 0.0
        %1318 = vmatpush1.msra.mxu0 0.0
        %1319 = vmatprep.subr.mxu0 0.0
        %1320 = vmatpush1.msra.mxu0 0.0
        %1321 = vmatprep.subr.mxu0 0.0
        %1322 = vmatpush1.msra.mxu0 0.0
        %1323 = vmatprep.subr.mxu0 0.0
        %1324 = vmatpush1.msra.mxu0 0.0
        %1325 = vmatprep.subr.mxu0 0.0
        %1326 = vmatpush1.msra.mxu0 0.0
        %1327 = vmatprep.subr.mxu0 0.0
        %1328 = vmatpush1.msra.mxu0 0.0
        %1329 = vmatprep.subr.mxu0 0.0
        %1330 = vmatpush1.msra.mxu0 0.0
        %1331 = vmatprep.subr.mxu0 0.0
        %1332 = vmatpush1.msra.mxu0 0.0
        %1333 = vmatprep.subr.mxu0 0.0
        %1334 = vmatpush1.msra.mxu0 0.0
        %1335 = vmatprep.subr.mxu0 0.0
        %1336 = vmatpush1.msra.mxu0 0.0
        %1337 = vmatprep.subr.mxu0 0.0
        %1338 = vmatpush1.msra.mxu0 0.0
        %1339 = vmatprep.subr.mxu0 0.0
        %1340 = vmatpush1.msra.mxu0 0.0
        %1341 = vmatprep.subr.mxu0 0.0
        %1342 = vmatpush1.msra.mxu0 0.0
        %1343 = vmatprep.subr.mxu0 0.0
        %1344 = vmatpush1.msra.mxu0 0.0
        %1345 = vmatprep.subr.mxu0 0.0
        %1346 = vmatpush1.msra.mxu0 0.0
        %1347 = vmatprep.subr.mxu0 0.0
        %1348 = vmatpush1.msra.mxu0 0.0
        %1349 = vmatprep.subr.mxu0 0.0
        %1350 = vmatpush1.msra.mxu0 0.0
        %1351 = vmatprep.subr.mxu0 0.0
        %1352 = vmatpush1.msra.mxu0 0.0
        %1353 = vmatprep.subr.mxu0 0.0
        %1354 = vmatpush1.msra.mxu0 0.0
        %1355 = vmatprep.subr.mxu0 0.0
        %1356 = vmatpush1.msra.mxu0 0.0
        %1357 = vmatprep.subr.mxu0 0.0
        %1358 = vmatpush1.msra.mxu0 0.0
        %1359 = vmatprep.subr.mxu0 0.0
        %1360 = vmatpush1.msra.mxu0 0.0
        %1361 = vmatprep.subr.mxu0 0.0
        %1362 = vmatpush1.msra.mxu0 0.0
        %1363 = vmatprep.subr.mxu0 0.0
        %1364 = vmatpush1.msra.mxu0 0.0
        %1365 = vmatprep.subr.mxu0 0.0
        %1366 = vmatpush1.msra.mxu0 0.0
        %1367 = vmatprep.subr.mxu0 0.0
        %1368 = vmatpush1.msra.mxu0 0.0
        %1369 = vmatprep.subr.mxu0 0.0
        %1370 = vmatpush1.msra.mxu0 0.0
        %1371 = vmatprep.subr.mxu0 0.0
        %1372 = vmatpush1.msra.mxu0 0.0
        %1373 = vmatprep.subr.mxu0 0.0
        %1374 = vmatpush1.msra.mxu0 0.0
        %1375 = vmatprep.mubr.f32.mxu0 0.0
        %1376 = vmatmul.mubr.f32.gmra.mrb[0].mxu0 %v1309
        %v1377 = vpop.f32.mrb[0].mxu0
        %v1378 = vadd.f32 0.0, %v1377
        %v1379 = vpop.f32.mrb[0].mxu0
        %1380 = vdwg.mxu0
        %1381 = vmatprep.subr.mxu0 0.0
        %1382 = vmatpush1.msra.mxu0 %v997
        %1383 = vmatprep.subr.mxu0 0.0
        %1384 = vmatpush1.msra.mxu0 0.0
        %1385 = vmatprep.subr.mxu0 0.0
        %1386 = vmatpush1.msra.mxu0 0.0
        %1387 = vmatprep.subr.mxu0 0.0
        %1388 = vmatpush1.msra.mxu0 0.0
        %1389 = vmatprep.subr.mxu0 0.0
        %1390 = vmatpush1.msra.mxu0 0.0
        %1391 = vmatprep.subr.mxu0 0.0
        %1392 = vmatpush1.msra.mxu0 0.0
        %1393 = vmatprep.subr.mxu0 0.0
        %1394 = vmatpush1.msra.mxu0 0.0
        %1395 = vmatprep.subr.mxu0 0.0
        %1396 = vmatpush1.msra.mxu0 0.0
        %1397 = vmatprep.subr.mxu0 0.0
        %1398 = vmatpush1.msra.mxu0 0.0
        %1399 = vmatprep.subr.mxu0 0.0
        %1400 = vmatpush1.msra.mxu0 0.0
        %1401 = vmatprep.subr.mxu0 0.0
        %1402 = vmatpush1.msra.mxu0 0.0
        %1403 = vmatprep.subr.mxu0 0.0
        %1404 = vmatpush1.msra.mxu0 0.0
        %1405 = vmatprep.subr.mxu0 0.0
        %1406 = vmatpush1.msra.mxu0 0.0
        %1407 = vmatprep.subr.mxu0 0.0
        %1408 = vmatpush1.msra.mxu0 0.0
        %1409 = vmatprep.subr.mxu0 0.0
        %1410 = vmatpush1.msra.mxu0 0.0
        %1411 = vmatprep.subr.mxu0 0.0
        %1412 = vmatpush1.msra.mxu0 0.0
        %1413 = vmatprep.subr.mxu0 0.0
        %1414 = vmatpush1.msra.mxu0 0.0
        %1415 = vmatprep.subr.mxu0 0.0
        %1416 = vmatpush1.msra.mxu0 0.0
        %1417 = vmatprep.subr.mxu0 0.0
        %1418 = vmatpush1.msra.mxu0 0.0
        %1419 = vmatprep.subr.mxu0 0.0
        %1420 = vmatpush1.msra.mxu0 0.0
        %1421 = vmatprep.subr.mxu0 0.0
        %1422 = vmatpush1.msra.mxu0 0.0
        %1423 = vmatprep.subr.mxu0 0.0
        %1424 = vmatpush1.msra.mxu0 0.0
        %1425 = vmatprep.subr.mxu0 0.0
        %1426 = vmatpush1.msra.mxu0 0.0
        %1427 = vmatprep.subr.mxu0 0.0
        %1428 = vmatpush1.msra.mxu0 0.0
        %1429 = vmatprep.subr.mxu0 0.0
        %1430 = vmatpush1.msra.mxu0 0.0
        %1431 = vmatprep.subr.mxu0 0.0
        %1432 = vmatpush1.msra.mxu0 0.0
        %1433 = vmatprep.subr.mxu0 0.0
        %1434 = vmatpush1.msra.mxu0 0.0
        %1435 = vmatprep.subr.mxu0 0.0
        %1436 = vmatpush1.msra.mxu0 0.0
        %1437 = vmatprep.subr.mxu0 0.0
        %1438 = vmatpush1.msra.mxu0 0.0
        %1439 = vmatprep.subr.mxu0 0.0
        %1440 = vmatpush1.msra.mxu0 0.0
        %1441 = vmatprep.subr.mxu0 0.0
        %1442 = vmatpush1.msra.mxu0 0.0
        %1443 = vmatprep.subr.mxu0 0.0
        %1444 = vmatpush1.msra.mxu0 0.0
        %1445 = vmatprep.mubr.f32.mxu0 0.0
        %1446 = vmatmul.mubr.f32.gmra.mrb[0].mxu0 %v1309
        %v1447 = vpop.f32.mrb[0].mxu0
        %v1448 = vadd.f32 0.0, %v1447
        %v1449 = vpop.f32.mrb[0].mxu0
        %1450 = vdwg.mxu0
        %1451 = vmatprep.subr.mxu0 0.0
        %1452 = vmatpush1.msra.mxu0 %v998
        %1453 = vmatprep.subr.mxu0 0.0
        %1454 = vmatpush1.msra.mxu0 0.0
        %1455 = vmatprep.subr.mxu0 0.0
        %1456 = vmatpush1.msra.mxu0 0.0
        %1457 = vmatprep.subr.mxu0 0.0
        %1458 = vmatpush1.msra.mxu0 0.0
        %1459 = vmatprep.subr.mxu0 0.0
        %1460 = vmatpush1.msra.mxu0 0.0
        %1461 = vmatprep.subr.mxu0 0.0
        %1462 = vmatpush1.msra.mxu0 0.0
        %1463 = vmatprep.subr.mxu0 0.0
        %1464 = vmatpush1.msra.mxu0 0.0
        %1465 = vmatprep.subr.mxu0 0.0
        %1466 = vmatpush1.msra.mxu0 0.0
        %1467 = vmatprep.subr.mxu0 0.0
        %1468 = vmatpush1.msra.mxu0 0.0
        %1469 = vmatprep.subr.mxu0 0.0
        %1470 = vmatpush1.msra.mxu0 0.0
        %1471 = vmatprep.subr.mxu0 0.0
        %1472 = vmatpush1.msra.mxu0 0.0
        %1473 = vmatprep.subr.mxu0 0.0
        %1474 = vmatpush1.msra.mxu0 0.0
        %1475 = vmatprep.subr.mxu0 0.0
        %1476 = vmatpush1.msra.mxu0 0.0
        %1477 = vmatprep.subr.mxu0 0.0
        %1478 = vmatpush1.msra.mxu0 0.0
        %1479 = vmatprep.subr.mxu0 0.0
        %1480 = vmatpush1.msra.mxu0 0.0
        %1481 = vmatprep.subr.mxu0 0.0
        %1482 = vmatpush1.msra.mxu0 0.0
        %1483 = vmatprep.subr.mxu0 0.0
        %1484 = vmatpush1.msra.mxu0 0.0
        %1485 = vmatprep.subr.mxu0 0.0
        %1486 = vmatpush1.msra.mxu0 0.0
        %1487 = vmatprep.subr.mxu0 0.0
        %1488 = vmatpush1.msra.mxu0 0.0
        %1489 = vmatprep.subr.mxu0 0.0
        %1490 = vmatpush1.msra.mxu0 0.0
        %1491 = vmatprep.subr.mxu0 0.0
        %1492 = vmatpush1.msra.mxu0 0.0
        %1493 = vmatprep.subr.mxu0 0.0
        %1494 = vmatpush1.msra.mxu0 0.0
        %1495 = vmatprep.subr.mxu0 0.0
        %1496 = vmatpush1.msra.mxu0 0.0
        %1497 = vmatprep.subr.mxu0 0.0
        %1498 = vmatpush1.msra.mxu0 0.0
        %1499 = vmatprep.subr.mxu0 0.0
        %1500 = vmatpush1.msra.mxu0 0.0
        %1501 = vmatprep.subr.mxu0 0.0
        %1502 = vmatpush1.msra.mxu0 0.0
        %1503 = vmatprep.subr.mxu0 0.0
        %1504 = vmatpush1.msra.mxu0 0.0
        %1505 = vmatprep.subr.mxu0 0.0
        %1506 = vmatpush1.msra.mxu0 0.0
        %1507 = vmatprep.subr.mxu0 0.0
        %1508 = vmatpush1.msra.mxu0 0.0
        %1509 = vmatprep.subr.mxu0 0.0
        %1510 = vmatpush1.msra.mxu0 0.0
        %1511 = vmatprep.subr.mxu0 0.0
        %1512 = vmatpush1.msra.mxu0 0.0
        %1513 = vmatprep.subr.mxu0 0.0
        %1514 = vmatpush1.msra.mxu0 0.0
        %1515 = vmatprep.mubr.f32.mxu0 0.0
        %1516 = vmatmul.mubr.f32.gmra.mrb[0].mxu0 %v1309
        %v1517 = vpop.f32.mrb[0].mxu0
        %v1518 = vadd.f32 0.0, %v1517
        %v1519 = vpop.f32.mrb[0].mxu0
        %1520 = vdwg.mxu0
        %1521 = vmatprep.subr.mxu0 0.0
        %1522 = vmatpush1.msra.mxu0 %v999
        %1523 = vmatprep.subr.mxu0 0.0
        %1524 = vmatpush1.msra.mxu0 0.0
        %1525 = vmatprep.subr.mxu0 0.0
        %1526 = vmatpush1.msra.mxu0 0.0
        %1527 = vmatprep.subr.mxu0 0.0
        %1528 = vmatpush1.msra.mxu0 0.0
        %1529 = vmatprep.subr.mxu0 0.0
        %1530 = vmatpush1.msra.mxu0 0.0
        %1531 = vmatprep.subr.mxu0 0.0
        %1532 = vmatpush1.msra.mxu0 0.0
        %1533 = vmatprep.subr.mxu0 0.0
        %1534 = vmatpush1.msra.mxu0 0.0
        %1535 = vmatprep.subr.mxu0 0.0
        %1536 = vmatpush1.msra.mxu0 0.0
        %1537 = vmatprep.subr.mxu0 0.0
        %1538 = vmatpush1.msra.mxu0 0.0
        %1539 = vmatprep.subr.mxu0 0.0
        %1540 = vmatpush1.msra.mxu0 0.0
        %1541 = vmatprep.subr.mxu0 0.0
        %1542 = vmatpush1.msra.mxu0 0.0
        %1543 = vmatprep.subr.mxu0 0.0
        %1544 = vmatpush1.msra.mxu0 0.0
        %1545 = vmatprep.subr.mxu0 0.0
        %1546 = vmatpush1.msra.mxu0 0.0
        %1547 = vmatprep.subr.mxu0 0.0
        %1548 = vmatpush1.msra.mxu0 0.0
        %1549 = vmatprep.subr.mxu0 0.0
        %1550 = vmatpush1.msra.mxu0 0.0
        %1551 = vmatprep.subr.mxu0 0.0
        %1552 = vmatpush1.msra.mxu0 0.0
        %1553 = vmatprep.subr.mxu0 0.0
        %1554 = vmatpush1.msra.mxu0 0.0
        %1555 = vmatprep.subr.mxu0 0.0
        %1556 = vmatpush1.msra.mxu0 0.0
        %1557 = vmatprep.subr.mxu0 0.0
        %1558 = vmatpush1.msra.mxu0 0.0
        %1559 = vmatprep.subr.mxu0 0.0
        %1560 = vmatpush1.msra.mxu0 0.0
        %1561 = vmatprep.subr.mxu0 0.0
        %1562 = vmatpush1.msra.mxu0 0.0
        %1563 = vmatprep.subr.mxu0 0.0
        %1564 = vmatpush1.msra.mxu0 0.0
        %1565 = vmatprep.subr.mxu0 0.0
        %1566 = vmatpush1.msra.mxu0 0.0
        %1567 = vmatprep.subr.mxu0 0.0
        %1568 = vmatpush1.msra.mxu0 0.0
        %1569 = vmatprep.subr.mxu0 0.0
        %1570 = vmatpush1.msra.mxu0 0.0
        %1571 = vmatprep.subr.mxu0 0.0
        %1572 = vmatpush1.msra.mxu0 0.0
        %1573 = vmatprep.subr.mxu0 0.0
        %1574 = vmatpush1.msra.mxu0 0.0
        %1575 = vmatprep.subr.mxu0 0.0
        %1576 = vmatpush1.msra.mxu0 0.0
        %1577 = vmatprep.subr.mxu0 0.0
        %1578 = vmatpush1.msra.mxu0 0.0
        %1579 = vmatprep.subr.mxu0 0.0
        %1580 = vmatpush1.msra.mxu0 0.0
        %1581 = vmatprep.subr.mxu0 0.0
        %1582 = vmatpush1.msra.mxu0 0.0
        %1583 = vmatprep.subr.mxu0 0.0
        %1584 = vmatpush1.msra.mxu0 0.0
        %1585 = vmatprep.mubr.f32.mxu0 0.0
        %1586 = vmatmul.mubr.f32.gmra.mrb[0].mxu0 %v1309
        %v1587 = vpop.f32.mrb[0].mxu0
        %v1588 = vadd.f32 0.0, %v1587
        %v1589 = vpop.f32.mrb[0].mxu0
        %1590 = vdwg.mxu0
        %v1591 = vmul.f32 %v1378, %v1000
        %v1592 = vmul.f32 %v1448, %v1000
        %v1593 = vmul.f32 %v1518, %v1000
        %v1594 = vmul.f32 %v1588, %v1000
        %vm1595 = vcmask 1043456
        %v1596 = vsel %vm1595, %v1591, 0.0
        %v1597 = vrot.slane %v1596, 4
        %v1598 = vadd.f32 %v1596, %v1597
        %v1599 = vrot.slane %v1598, 2
        %v1600 = vadd.f32 %v1598, %v1599
        %v1601 = vrot.slane %v1600, 1
        %v1602 = vadd.f32 %v1600, %v1601
        %v1603 = vsel %vm1595, %v1592, 0.0
        %v1604 = vrot.slane %v1603, 4
        %v1605 = vadd.f32 %v1603, %v1604
        %v1606 = vrot.slane %v1605, 2
        %v1607 = vadd.f32 %v1605, %v1606
        %v1608 = vrot.slane %v1607, 1
        %v1609 = vadd.f32 %v1607, %v1608
        %v1610 = vsel %vm1595, %v1593, 0.0
        %v1611 = vrot.slane %v1610, 4
        %v1612 = vadd.f32 %v1610, %v1611
        %v1613 = vrot.slane %v1612, 2
        %v1614 = vadd.f32 %v1612, %v1613
        %v1615 = vrot.slane %v1614, 1
        %v1616 = vadd.f32 %v1614, %v1615
        %v1617 = vsel %vm1595, %v1594, 0.0
        %v1618 = vrot.slane %v1617, 4
        %v1619 = vadd.f32 %v1617, %v1618
        %v1620 = vrot.slane %v1619, 2
        %v1621 = vadd.f32 %v1619, %v1620
        %v1622 = vrot.slane %v1621, 1
        %v1623 = vadd.f32 %v1621, %v1622
        %v1624 = vmul.f32 %v1602, %v1602
        %v1625 = vmul.f32 %v1609, %v1609
        %v1626 = vmul.f32 %v1616, %v1616
        %v1627 = vmul.f32 %v1623, %v1623
        %v1632 = vsel %vm941, %v1625, %v1624
        %v1633 = vsel %vm944, %v1626, %v1632
        %v1634 = vsel %vm947, %v1627, %v1633
        %1636 = vmatprep.subr.mxu0 0.0
        %1637 = vmatpush1.msra.mxu0 %v1001
        %1638 = vmatprep.subr.mxu0 0.0
        %1639 = vmatpush1.msra.mxu0 %v1002
        %1640 = vmatprep.subr.mxu0 0.0
        %1641 = vmatpush1.msra.mxu0 %v1003
        %1642 = vmatprep.subr.mxu0 0.0
        %1643 = vmatpush1.msra.mxu0 %v1004
        %1644 = vmatprep.subr.mxu0 0.0
        %1645 = vmatpush1.msra.mxu0 %v1005
        %1646 = vmatprep.subr.mxu0 0.0
        %1647 = vmatpush1.msra.mxu0 %v1006
        %1648 = vmatprep.subr.mxu0 0.0
        %1649 = vmatpush1.msra.mxu0 %v1007
        %1650 = vmatprep.subr.mxu0 0.0
        %1651 = vmatpush1.msra.mxu0 %v1008
        %1652 = vmatprep.subr.mxu0 0.0
        %1653 = vmatpush1.msra.mxu0 %v1009
        %1654 = vmatprep.subr.mxu0 0.0
        %1655 = vmatpush1.msra.mxu0 %v1010
        %1656 = vmatprep.subr.mxu0 0.0
        %1657 = vmatpush1.msra.mxu0 %v1011
        %1658 = vmatprep.subr.mxu0 0.0
        %1659 = vmatpush1.msra.mxu0 %v1012
        %1660 = vmatprep.subr.mxu0 0.0
        %1661 = vmatpush1.msra.mxu0 %v1013
        %1662 = vmatprep.subr.mxu0 0.0
        %1663 = vmatpush1.msra.mxu0 %v1014
        %1664 = vmatprep.subr.mxu0 0.0
        %1665 = vmatpush1.msra.mxu0 %v1015
        %1666 = vmatprep.subr.mxu0 0.0
        %1667 = vmatpush1.msra.mxu0 %v1016
        %1668 = vmatprep.subr.mxu0 0.0
        %1669 = vmatpush1.msra.mxu0 0.0
        %1670 = vmatprep.subr.mxu0 0.0
        %1671 = vmatpush1.msra.mxu0 0.0
        %1672 = vmatprep.subr.mxu0 0.0
        %1673 = vmatpush1.msra.mxu0 0.0
        %1674 = vmatprep.subr.mxu0 0.0
        %1675 = vmatpush1.msra.mxu0 0.0
        %1676 = vmatprep.subr.mxu0 0.0
        %1677 = vmatpush1.msra.mxu0 0.0
        %1678 = vmatprep.subr.mxu0 0.0
        %1679 = vmatpush1.msra.mxu0 0.0
        %1680 = vmatprep.subr.mxu0 0.0
        %1681 = vmatpush1.msra.mxu0 0.0
        %1682 = vmatprep.subr.mxu0 0.0
        %1683 = vmatpush1.msra.mxu0 0.0
        %1684 = vmatprep.subr.mxu0 0.0
        %1685 = vmatpush1.msra.mxu0 0.0
        %1686 = vmatprep.subr.mxu0 0.0
        %1687 = vmatpush1.msra.mxu0 0.0
        %1688 = vmatprep.subr.mxu0 0.0
        %1689 = vmatpush1.msra.mxu0 0.0
        %1690 = vmatprep.subr.mxu0 0.0
        %1691 = vmatpush1.msra.mxu0 0.0
        %1692 = vmatprep.subr.mxu0 0.0
        %1693 = vmatpush1.msra.mxu0 0.0
        %1694 = vmatprep.subr.mxu0 0.0
        %1695 = vmatpush1.msra.mxu0 0.0
        %1696 = vmatprep.subr.mxu0 0.0
        %1697 = vmatpush1.msra.mxu0 0.0
        %1698 = vmatprep.subr.mxu0 0.0
        %1699 = vmatpush1.msra.mxu0 0.0
        %1700 = vmatprep.mubr.f32.mxu0 0.0
        %1701 = vmatmul.mubr.f32.gmra.mrb[0].mxu0 %v1634
        %v1702 = vpop.f32.mrb[0].mxu0
        %v1703 = vadd.f32 0.0, %v1702
        %v1704 = vpop.f32.mrb[0].mxu0
        %1705 = vdwg.mxu0
        %v1706 = vadd.f32 %v1703, 1.0
        %v1707 = vrcp.pop %v1706
        %v1708 = vmul.f32 %v1703, %v1707
        %v1709 = vadd.f32 %v1703, 1e-12
        %v1710 = vrsqrt.pop %v1709
        %v1711 = vmul.f32 %v1708, %v1710
        %vm1712 = vcmask 31744
        %v1714 = vsel %vm1712, %v1711, 0
        %v1717 = vsel %vm1595, %v1000, 0
        %1719 = vmatprep.subr.mxu0 0.0
        %1720 = vmatpush1.msra.mxu0 %v1717
        %1721 = vmatprep.subr.mxu0 0.0
        %1722 = vmatpush1.msra.mxu0 0.0
        %1723 = vmatprep.subr.mxu0 0.0
        %1724 = vmatpush1.msra.mxu0 0.0
        %1725 = vmatprep.subr.mxu0 0.0
        %1726 = vmatpush1.msra.mxu0 0.0
        %1727 = vmatprep.subr.mxu0 0.0
        %1728 = vmatpush1.msra.mxu0 0.0
        %1729 = vmatprep.subr.mxu0 0.0
        %1730 = vmatpush1.msra.mxu0 0.0
        %1731 = vmatprep.subr.mxu0 0.0
        %1732 = vmatpush1.msra.mxu0 0.0
        %1733 = vmatprep.subr.mxu0 0.0
        %1734 = vmatpush1.msra.mxu0 0.0
        %1735 = vmatprep.subr.mxu0 0.0
        %1736 = vmatpush1.msra.mxu0 0.0
        %1737 = vmatprep.subr.mxu0 0.0
        %1738 = vmatpush1.msra.mxu0 0.0
        %1739 = vmatprep.subr.mxu0 0.0
        %1740 = vmatpush1.msra.mxu0 0.0
        %1741 = vmatprep.subr.mxu0 0.0
        %1742 = vmatpush1.msra.mxu0 0.0
        %1743 = vmatprep.subr.mxu0 0.0
        %1744 = vmatpush1.msra.mxu0 0.0
        %1745 = vmatprep.subr.mxu0 0.0
        %1746 = vmatpush1.msra.mxu0 0.0
        %1747 = vmatprep.subr.mxu0 0.0
        %1748 = vmatpush1.msra.mxu0 0.0
        %1749 = vmatprep.subr.mxu0 0.0
        %1750 = vmatpush1.msra.mxu0 0.0
        %1751 = vmatprep.subr.mxu0 0.0
        %1752 = vmatpush1.msra.mxu0 0.0
        %1753 = vmatprep.subr.mxu0 0.0
        %1754 = vmatpush1.msra.mxu0 0.0
        %1755 = vmatprep.subr.mxu0 0.0
        %1756 = vmatpush1.msra.mxu0 0.0
        %1757 = vmatprep.subr.mxu0 0.0
        %1758 = vmatpush1.msra.mxu0 0.0
        %1759 = vmatprep.subr.mxu0 0.0
        %1760 = vmatpush1.msra.mxu0 0.0
        %1761 = vmatprep.subr.mxu0 0.0
        %1762 = vmatpush1.msra.mxu0 0.0
        %1763 = vmatprep.subr.mxu0 0.0
        %1764 = vmatpush1.msra.mxu0 0.0
        %1765 = vmatprep.subr.mxu0 0.0
        %1766 = vmatpush1.msra.mxu0 0.0
        %1767 = vmatprep.subr.mxu0 0.0
        %1768 = vmatpush1.msra.mxu0 0.0
        %1769 = vmatprep.subr.mxu0 0.0
        %1770 = vmatpush1.msra.mxu0 0.0
        %1771 = vmatprep.subr.mxu0 0.0
        %1772 = vmatpush1.msra.mxu0 0.0
        %1773 = vmatprep.subr.mxu0 0.0
        %1774 = vmatpush1.msra.mxu0 0.0
        %1775 = vmatprep.subr.mxu0 0.0
        %1776 = vmatpush1.msra.mxu0 0.0
        %1777 = vmatprep.subr.mxu0 0.0
        %1778 = vmatpush1.msra.mxu0 0.0
        %1779 = vmatprep.subr.mxu0 0.0
        %1780 = vmatpush1.msra.mxu0 0.0
        %1781 = vmatprep.subr.mxu0 0.0
        %1782 = vmatpush1.msra.mxu0 0.0
        %1783 = vmatprep.mubr.f32.mxu0 0.0
        %1784 = vmatmul.mubr.f32.gmra.mrb[0].mxu0 %v1714
        %v1785 = vpop.f32.mrb[0].mxu0
        %v1786 = vadd.f32 0.0, %v1785
        %v1787 = vpop.f32.mrb[0].mxu0
        %1788 = vdwg.mxu0
        %v1793 = vsel %vm941, %v1609, %v1602
        %v1794 = vsel %vm944, %v1616, %v1793
        %v1795 = vsel %vm947, %v1623, %v1794
        %v1797 = vmul.f32 %v1786, %v1795
        %v1799 = vlaneseq
        %v1800 = vshrl.u32 %v1799, 7
        %v1801 = vsub.s32 0, %v1800
        %v1802 = vrot.slane %v1017, %v1801
        %v1804 = vadd.f32 %v1797, %v1802
        %v1807 = vunpack.c.l.s4 1966171168
        %v1808 = vunpack.c.0.s8 %v1807
        %v1809 = vlaneseq
        %v1810 = vshrl.u32 %v1809, 7
        %v1811 = vsub.s32 %v1808, %v1810
        %v1812 = vrot.slane %v1804, %v1811
        %v1813 = vcombine.high %v1812, %v1812
        %v1815 = vunpack.c.l.s4 1966171168
        %v1816 = vunpack.c.0.s8 %v1815
        %v1817 = vlaneseq
        %v1818 = vshrl.u32 %v1817, 7
        %v1819 = vsub.s32 %v1816, %v1818
        %v1820 = vrot.slane %v1812, %v1819
        %v1822 = vunpack.c.l.s4 1966171168
        %v1823 = vunpack.c.0.s8 %v1822
        %v1824 = vlaneseq
        %v1825 = vshrl.u32 %v1824, 7
        %v1826 = vsub.s32 %v1823, %v1825
        %v1827 = vrot.slane %v1813, %v1826
        %v1828 = vcombine.high %v1820, %v1820
        %v1829 = vcombine.high %v1827, %v1827
        %v1830 = vlaneseq
        %v1831 = vshrl.u32 %v1830, 7
        %v1832 = vsub.s32 0, %v1831
        %v1833 = vrot.slane %v1820, %v1832
        %v1834 = vlaneseq
        %v1835 = vshrl.u32 %v1834, 7
        %v1836 = vsub.s32 0, %v1835
        %v1837 = vrot.slane %v1827, %v1836
        %v1838 = vlaneseq
        %v1839 = vshrl.u32 %v1838, 7
        %v1840 = vsub.s32 0, %v1839
        %v1841 = vrot.slane %v1828, %v1840
        %v1842 = vlaneseq
        %v1843 = vshrl.u32 %v1842, 7
        %v1844 = vsub.s32 0, %v1843
        %v1845 = vrot.slane %v1829, %v1844
        %v1850 = vmul.f32 %v1833, %v1000
        %v1851 = vmul.f32 %v1837, %v1000
        %v1852 = vmul.f32 %v1841, %v1000
        %v1853 = vmul.f32 %v1845, %v1000
        %1854 = vmatprep.subr.mxu0 0.0
        %1855 = vmatpush1.xpose.msra.mxu0 %v996
        %1856 = vmatprep.subr.mxu0 0.0
        %1857 = vmatpush1.xpose.msra.mxu0 0.0
        %1858 = vmatprep.subr.mxu0 0.0
        %1859 = vmatpush1.xpose.msra.mxu0 0.0
        %1860 = vmatprep.subr.mxu0 0.0
        %1861 = vmatpush1.xpose.msra.mxu0 0.0
        %1862 = vmatprep.subr.mxu0 0.0
        %1863 = vmatpush1.xpose.msra.mxu0 0.0
        %1864 = vmatprep.subr.mxu0 0.0
        %1865 = vmatpush1.xpose.msra.mxu0 0.0
        %1866 = vmatprep.subr.mxu0 0.0
        %1867 = vmatpush1.xpose.msra.mxu0 0.0
        %1868 = vmatprep.subr.mxu0 0.0
        %1869 = vmatpush1.xpose.msra.mxu0 0.0
        %1870 = vmatprep.subr.mxu0 0.0
        %1871 = vmatpush1.xpose.msra.mxu0 0.0
        %1872 = vmatprep.subr.mxu0 0.0
        %1873 = vmatpush1.xpose.msra.mxu0 0.0
        %1874 = vmatprep.subr.mxu0 0.0
        %1875 = vmatpush1.xpose.msra.mxu0 0.0
        %1876 = vmatprep.subr.mxu0 0.0
        %1877 = vmatpush1.xpose.msra.mxu0 0.0
        %1878 = vmatprep.subr.mxu0 0.0
        %1879 = vmatpush1.xpose.msra.mxu0 0.0
        %1880 = vmatprep.subr.mxu0 0.0
        %1881 = vmatpush1.xpose.msra.mxu0 0.0
        %1882 = vmatprep.subr.mxu0 0.0
        %1883 = vmatpush1.xpose.msra.mxu0 0.0
        %1884 = vmatprep.subr.mxu0 0.0
        %1885 = vmatpush1.xpose.msra.mxu0 0.0
        %1886 = vmatprep.subr.mxu0 0.0
        %1887 = vmatpush1.xpose.msra.mxu0 0.0
        %1888 = vmatprep.subr.mxu0 0.0
        %1889 = vmatpush1.xpose.msra.mxu0 0.0
        %1890 = vmatprep.subr.mxu0 0.0
        %1891 = vmatpush1.xpose.msra.mxu0 0.0
        %1892 = vmatprep.subr.mxu0 0.0
        %1893 = vmatpush1.xpose.msra.mxu0 0.0
        %1894 = vmatprep.subr.mxu0 0.0
        %1895 = vmatpush1.xpose.msra.mxu0 0.0
        %1896 = vmatprep.subr.mxu0 0.0
        %1897 = vmatpush1.xpose.msra.mxu0 0.0
        %1898 = vmatprep.subr.mxu0 0.0
        %1899 = vmatpush1.xpose.msra.mxu0 0.0
        %1900 = vmatprep.subr.mxu0 0.0
        %1901 = vmatpush1.xpose.msra.mxu0 0.0
        %1902 = vmatprep.subr.mxu0 0.0
        %1903 = vmatpush1.xpose.msra.mxu0 0.0
        %1904 = vmatprep.subr.mxu0 0.0
        %1905 = vmatpush1.xpose.msra.mxu0 0.0
        %1906 = vmatprep.subr.mxu0 0.0
        %1907 = vmatpush1.xpose.msra.mxu0 0.0
        %1908 = vmatprep.subr.mxu0 0.0
        %1909 = vmatpush1.xpose.msra.mxu0 0.0
        %1910 = vmatprep.subr.mxu0 0.0
        %1911 = vmatpush1.xpose.msra.mxu0 0.0
        %1912 = vmatprep.subr.mxu0 0.0
        %1913 = vmatpush1.xpose.msra.mxu0 0.0
        %1914 = vmatprep.subr.mxu0 0.0
        %1915 = vmatpush1.xpose.msra.mxu0 0.0
        %1916 = vmatprep.subr.mxu0 0.0
        %1917 = vmatpush1.xpose.msra.mxu0 0.0
        %1918 = vmatprep.mubr.f32.mxu0 0.0
        %1919 = vmatmul.mubr.f32.gmra.mrb[0].mxu0 %v1850
        %v1920 = vpop.f32.mrb[0].mxu0
        %v1921 = vadd.f32 0.0, %v1920
        %v1922 = vpop.f32.mrb[0].mxu0
        %1923 = vdwg.mxu0
        %1924 = vmatprep.subr.mxu0 0.0
        %1925 = vmatpush1.xpose.msra.mxu0 %v997
        %1926 = vmatprep.subr.mxu0 0.0
        %1927 = vmatpush1.xpose.msra.mxu0 0.0
        %1928 = vmatprep.subr.mxu0 0.0
        %1929 = vmatpush1.xpose.msra.mxu0 0.0
        %1930 = vmatprep.subr.mxu0 0.0
        %1931 = vmatpush1.xpose.msra.mxu0 0.0
        %1932 = vmatprep.subr.mxu0 0.0
        %1933 = vmatpush1.xpose.msra.mxu0 0.0
        %1934 = vmatprep.subr.mxu0 0.0
        %1935 = vmatpush1.xpose.msra.mxu0 0.0
        %1936 = vmatprep.subr.mxu0 0.0
        %1937 = vmatpush1.xpose.msra.mxu0 0.0
        %1938 = vmatprep.subr.mxu0 0.0
        %1939 = vmatpush1.xpose.msra.mxu0 0.0
        %1940 = vmatprep.subr.mxu0 0.0
        %1941 = vmatpush1.xpose.msra.mxu0 0.0
        %1942 = vmatprep.subr.mxu0 0.0
        %1943 = vmatpush1.xpose.msra.mxu0 0.0
        %1944 = vmatprep.subr.mxu0 0.0
        %1945 = vmatpush1.xpose.msra.mxu0 0.0
        %1946 = vmatprep.subr.mxu0 0.0
        %1947 = vmatpush1.xpose.msra.mxu0 0.0
        %1948 = vmatprep.subr.mxu0 0.0
        %1949 = vmatpush1.xpose.msra.mxu0 0.0
        %1950 = vmatprep.subr.mxu0 0.0
        %1951 = vmatpush1.xpose.msra.mxu0 0.0
        %1952 = vmatprep.subr.mxu0 0.0
        %1953 = vmatpush1.xpose.msra.mxu0 0.0
        %1954 = vmatprep.subr.mxu0 0.0
        %1955 = vmatpush1.xpose.msra.mxu0 0.0
        %1956 = vmatprep.subr.mxu0 0.0
        %1957 = vmatpush1.xpose.msra.mxu0 0.0
        %1958 = vmatprep.subr.mxu0 0.0
        %1959 = vmatpush1.xpose.msra.mxu0 0.0
        %1960 = vmatprep.subr.mxu0 0.0
        %1961 = vmatpush1.xpose.msra.mxu0 0.0
        %1962 = vmatprep.subr.mxu0 0.0
        %1963 = vmatpush1.xpose.msra.mxu0 0.0
        %1964 = vmatprep.subr.mxu0 0.0
        %1965 = vmatpush1.xpose.msra.mxu0 0.0
        %1966 = vmatprep.subr.mxu0 0.0
        %1967 = vmatpush1.xpose.msra.mxu0 0.0
        %1968 = vmatprep.subr.mxu0 0.0
        %1969 = vmatpush1.xpose.msra.mxu0 0.0
        %1970 = vmatprep.subr.mxu0 0.0
        %1971 = vmatpush1.xpose.msra.mxu0 0.0
        %1972 = vmatprep.subr.mxu0 0.0
        %1973 = vmatpush1.xpose.msra.mxu0 0.0
        %1974 = vmatprep.subr.mxu0 0.0
        %1975 = vmatpush1.xpose.msra.mxu0 0.0
        %1976 = vmatprep.subr.mxu0 0.0
        %1977 = vmatpush1.xpose.msra.mxu0 0.0
        %1978 = vmatprep.subr.mxu0 0.0
        %1979 = vmatpush1.xpose.msra.mxu0 0.0
        %1980 = vmatprep.subr.mxu0 0.0
        %1981 = vmatpush1.xpose.msra.mxu0 0.0
        %1982 = vmatprep.subr.mxu0 0.0
        %1983 = vmatpush1.xpose.msra.mxu0 0.0
        %1984 = vmatprep.subr.mxu0 0.0
        %1985 = vmatpush1.xpose.msra.mxu0 0.0
        %1986 = vmatprep.subr.mxu0 0.0
        %1987 = vmatpush1.xpose.msra.mxu0 0.0
        %1988 = vmatprep.mubr.f32.mxu0 0.0
        %1989 = vmatmul.mubr.f32.gmra.mrb[0].mxu0 %v1851
        %v1990 = vpop.f32.mrb[0].mxu0
        %v1991 = vadd.f32 0.0, %v1990
        %v1992 = vpop.f32.mrb[0].mxu0
        %1993 = vdwg.mxu0
        %1994 = vmatprep.subr.mxu0 0.0
        %1995 = vmatpush1.xpose.msra.mxu0 %v998
        %1996 = vmatprep.subr.mxu0 0.0
        %1997 = vmatpush1.xpose.msra.mxu0 0.0
        %1998 = vmatprep.subr.mxu0 0.0
        %1999 = vmatpush1.xpose.msra.mxu0 0.0
        %2000 = vmatprep.subr.mxu0 0.0
        %2001 = vmatpush1.xpose.msra.mxu0 0.0
        %2002 = vmatprep.subr.mxu0 0.0
        %2003 = vmatpush1.xpose.msra.mxu0 0.0
        %2004 = vmatprep.subr.mxu0 0.0
        %2005 = vmatpush1.xpose.msra.mxu0 0.0
        %2006 = vmatprep.subr.mxu0 0.0
        %2007 = vmatpush1.xpose.msra.mxu0 0.0
        %2008 = vmatprep.subr.mxu0 0.0
        %2009 = vmatpush1.xpose.msra.mxu0 0.0
        %2010 = vmatprep.subr.mxu0 0.0
        %2011 = vmatpush1.xpose.msra.mxu0 0.0
        %2012 = vmatprep.subr.mxu0 0.0
        %2013 = vmatpush1.xpose.msra.mxu0 0.0
        %2014 = vmatprep.subr.mxu0 0.0
        %2015 = vmatpush1.xpose.msra.mxu0 0.0
        %2016 = vmatprep.subr.mxu0 0.0
        %2017 = vmatpush1.xpose.msra.mxu0 0.0
        %2018 = vmatprep.subr.mxu0 0.0
        %2019 = vmatpush1.xpose.msra.mxu0 0.0
        %2020 = vmatprep.subr.mxu0 0.0
        %2021 = vmatpush1.xpose.msra.mxu0 0.0
        %2022 = vmatprep.subr.mxu0 0.0
        %2023 = vmatpush1.xpose.msra.mxu0 0.0
        %2024 = vmatprep.subr.mxu0 0.0
        %2025 = vmatpush1.xpose.msra.mxu0 0.0
        %2026 = vmatprep.subr.mxu0 0.0
        %2027 = vmatpush1.xpose.msra.mxu0 0.0
        %2028 = vmatprep.subr.mxu0 0.0
        %2029 = vmatpush1.xpose.msra.mxu0 0.0
        %2030 = vmatprep.subr.mxu0 0.0
        %2031 = vmatpush1.xpose.msra.mxu0 0.0
        %2032 = vmatprep.subr.mxu0 0.0
        %2033 = vmatpush1.xpose.msra.mxu0 0.0
        %2034 = vmatprep.subr.mxu0 0.0
        %2035 = vmatpush1.xpose.msra.mxu0 0.0
        %2036 = vmatprep.subr.mxu0 0.0
        %2037 = vmatpush1.xpose.msra.mxu0 0.0
        %2038 = vmatprep.subr.mxu0 0.0
        %2039 = vmatpush1.xpose.msra.mxu0 0.0
        %2040 = vmatprep.subr.mxu0 0.0
        %2041 = vmatpush1.xpose.msra.mxu0 0.0
        %2042 = vmatprep.subr.mxu0 0.0
        %2043 = vmatpush1.xpose.msra.mxu0 0.0
        %2044 = vmatprep.subr.mxu0 0.0
        %2045 = vmatpush1.xpose.msra.mxu0 0.0
        %2046 = vmatprep.subr.mxu0 0.0
        %2047 = vmatpush1.xpose.msra.mxu0 0.0
        %2048 = vmatprep.subr.mxu0 0.0
        %2049 = vmatpush1.xpose.msra.mxu0 0.0
        %2050 = vmatprep.subr.mxu0 0.0
        %2051 = vmatpush1.xpose.msra.mxu0 0.0
        %2052 = vmatprep.subr.mxu0 0.0
        %2053 = vmatpush1.xpose.msra.mxu0 0.0
        %2054 = vmatprep.subr.mxu0 0.0
        %2055 = vmatpush1.xpose.msra.mxu0 0.0
        %2056 = vmatprep.subr.mxu0 0.0
        %2057 = vmatpush1.xpose.msra.mxu0 0.0
        %2058 = vmatprep.mubr.f32.mxu0 0.0
        %2059 = vmatmul.mubr.f32.gmra.mrb[0].mxu0 %v1852
        %v2060 = vpop.f32.mrb[0].mxu0
        %v2061 = vadd.f32 0.0, %v2060
        %v2062 = vpop.f32.mrb[0].mxu0
        %2063 = vdwg.mxu0
        %2064 = vmatprep.subr.mxu0 0.0
        %2065 = vmatpush1.xpose.msra.mxu0 %v999
        %2066 = vmatprep.subr.mxu0 0.0
        %2067 = vmatpush1.xpose.msra.mxu0 0.0
        %2068 = vmatprep.subr.mxu0 0.0
        %2069 = vmatpush1.xpose.msra.mxu0 0.0
        %2070 = vmatprep.subr.mxu0 0.0
        %2071 = vmatpush1.xpose.msra.mxu0 0.0
        %2072 = vmatprep.subr.mxu0 0.0
        %2073 = vmatpush1.xpose.msra.mxu0 0.0
        %2074 = vmatprep.subr.mxu0 0.0
        %2075 = vmatpush1.xpose.msra.mxu0 0.0
        %2076 = vmatprep.subr.mxu0 0.0
        %2077 = vmatpush1.xpose.msra.mxu0 0.0
        %2078 = vmatprep.subr.mxu0 0.0
        %2079 = vmatpush1.xpose.msra.mxu0 0.0
        %2080 = vmatprep.subr.mxu0 0.0
        %2081 = vmatpush1.xpose.msra.mxu0 0.0
        %2082 = vmatprep.subr.mxu0 0.0
        %2083 = vmatpush1.xpose.msra.mxu0 0.0
        %2084 = vmatprep.subr.mxu0 0.0
        %2085 = vmatpush1.xpose.msra.mxu0 0.0
        %2086 = vmatprep.subr.mxu0 0.0
        %2087 = vmatpush1.xpose.msra.mxu0 0.0
        %2088 = vmatprep.subr.mxu0 0.0
        %2089 = vmatpush1.xpose.msra.mxu0 0.0
        %2090 = vmatprep.subr.mxu0 0.0
        %2091 = vmatpush1.xpose.msra.mxu0 0.0
        %2092 = vmatprep.subr.mxu0 0.0
        %2093 = vmatpush1.xpose.msra.mxu0 0.0
        %2094 = vmatprep.subr.mxu0 0.0
        %2095 = vmatpush1.xpose.msra.mxu0 0.0
        %2096 = vmatprep.subr.mxu0 0.0
        %2097 = vmatpush1.xpose.msra.mxu0 0.0
        %2098 = vmatprep.subr.mxu0 0.0
        %2099 = vmatpush1.xpose.msra.mxu0 0.0
        %2100 = vmatprep.subr.mxu0 0.0
        %2101 = vmatpush1.xpose.msra.mxu0 0.0
        %2102 = vmatprep.subr.mxu0 0.0
        %2103 = vmatpush1.xpose.msra.mxu0 0.0
        %2104 = vmatprep.subr.mxu0 0.0
        %2105 = vmatpush1.xpose.msra.mxu0 0.0
        %2106 = vmatprep.subr.mxu0 0.0
        %2107 = vmatpush1.xpose.msra.mxu0 0.0
        %2108 = vmatprep.subr.mxu0 0.0
        %2109 = vmatpush1.xpose.msra.mxu0 0.0
        %2110 = vmatprep.subr.mxu0 0.0
        %2111 = vmatpush1.xpose.msra.mxu0 0.0
        %2112 = vmatprep.subr.mxu0 0.0
        %2113 = vmatpush1.xpose.msra.mxu0 0.0
        %2114 = vmatprep.subr.mxu0 0.0
        %2115 = vmatpush1.xpose.msra.mxu0 0.0
        %2116 = vmatprep.subr.mxu0 0.0
        %2117 = vmatpush1.xpose.msra.mxu0 0.0
        %2118 = vmatprep.subr.mxu0 0.0
        %2119 = vmatpush1.xpose.msra.mxu0 0.0
        %2120 = vmatprep.subr.mxu0 0.0
        %2121 = vmatpush1.xpose.msra.mxu0 0.0
        %2122 = vmatprep.subr.mxu0 0.0
        %2123 = vmatpush1.xpose.msra.mxu0 0.0
        %2124 = vmatprep.subr.mxu0 0.0
        %2125 = vmatpush1.xpose.msra.mxu0 0.0
        %2126 = vmatprep.subr.mxu0 0.0
        %2127 = vmatpush1.xpose.msra.mxu0 0.0
        %2128 = vmatprep.mubr.f32.mxu0 0.0
        %2129 = vmatmul.mubr.f32.gmra.mrb[0].mxu0 %v1853
        %v2130 = vpop.f32.mrb[0].mxu0
        %v2131 = vadd.f32 0.0, %v2130
        %v2132 = vpop.f32.mrb[0].mxu0
        %2133 = vdwg.mxu0
        %v2134 = vmul.f32 %v1804, %v1804
        %2135 = vmatprep.subr.mxu0 0.0
        %2136 = vmatpush1.msra.mxu0 %v1001
        %2137 = vmatprep.subr.mxu0 0.0
        %2138 = vmatpush1.msra.mxu0 %v1002
        %2139 = vmatprep.subr.mxu0 0.0
        %2140 = vmatpush1.msra.mxu0 %v1003
        %2141 = vmatprep.subr.mxu0 0.0
        %2142 = vmatpush1.msra.mxu0 %v1004
        %2143 = vmatprep.subr.mxu0 0.0
        %2144 = vmatpush1.msra.mxu0 %v1005
        %2145 = vmatprep.subr.mxu0 0.0
        %2146 = vmatpush1.msra.mxu0 %v1006
        %2147 = vmatprep.subr.mxu0 0.0
        %2148 = vmatpush1.msra.mxu0 %v1007
        %2149 = vmatprep.subr.mxu0 0.0
        %2150 = vmatpush1.msra.mxu0 %v1008
        %2151 = vmatprep.subr.mxu0 0.0
        %2152 = vmatpush1.msra.mxu0 %v1009
        %2153 = vmatprep.subr.mxu0 0.0
        %2154 = vmatpush1.msra.mxu0 %v1010
        %2155 = vmatprep.subr.mxu0 0.0
        %2156 = vmatpush1.msra.mxu0 %v1011
        %2157 = vmatprep.subr.mxu0 0.0
        %2158 = vmatpush1.msra.mxu0 %v1012
        %2159 = vmatprep.subr.mxu0 0.0
        %2160 = vmatpush1.msra.mxu0 %v1013
        %2161 = vmatprep.subr.mxu0 0.0
        %2162 = vmatpush1.msra.mxu0 %v1014
        %2163 = vmatprep.subr.mxu0 0.0
        %2164 = vmatpush1.msra.mxu0 %v1015
        %2165 = vmatprep.subr.mxu0 0.0
        %2166 = vmatpush1.msra.mxu0 %v1016
        %2167 = vmatprep.subr.mxu0 0.0
        %2168 = vmatpush1.msra.mxu0 0.0
        %2169 = vmatprep.subr.mxu0 0.0
        %2170 = vmatpush1.msra.mxu0 0.0
        %2171 = vmatprep.subr.mxu0 0.0
        %2172 = vmatpush1.msra.mxu0 0.0
        %2173 = vmatprep.subr.mxu0 0.0
        %2174 = vmatpush1.msra.mxu0 0.0
        %2175 = vmatprep.subr.mxu0 0.0
        %2176 = vmatpush1.msra.mxu0 0.0
        %2177 = vmatprep.subr.mxu0 0.0
        %2178 = vmatpush1.msra.mxu0 0.0
        %2179 = vmatprep.subr.mxu0 0.0
        %2180 = vmatpush1.msra.mxu0 0.0
        %2181 = vmatprep.subr.mxu0 0.0
        %2182 = vmatpush1.msra.mxu0 0.0
        %2183 = vmatprep.subr.mxu0 0.0
        %2184 = vmatpush1.msra.mxu0 0.0
        %2185 = vmatprep.subr.mxu0 0.0
        %2186 = vmatpush1.msra.mxu0 0.0
        %2187 = vmatprep.subr.mxu0 0.0
        %2188 = vmatpush1.msra.mxu0 0.0
        %2189 = vmatprep.subr.mxu0 0.0
        %2190 = vmatpush1.msra.mxu0 0.0
        %2191 = vmatprep.subr.mxu0 0.0
        %2192 = vmatpush1.msra.mxu0 0.0
        %2193 = vmatprep.subr.mxu0 0.0
        %2194 = vmatpush1.msra.mxu0 0.0
        %2195 = vmatprep.subr.mxu0 0.0
        %2196 = vmatpush1.msra.mxu0 0.0
        %2197 = vmatprep.subr.mxu0 0.0
        %2198 = vmatpush1.msra.mxu0 0.0
        %2199 = vmatprep.mubr.f32.mxu0 0.0
        %2200 = vmatmul.mubr.f32.gmra.mrb[0].mxu0 %v2134
        %v2201 = vpop.f32.mrb[0].mxu0
        %v2202 = vadd.f32 0.0, %v2201
        %v2203 = vpop.f32.mrb[0].mxu0
        %2204 = vdwg.mxu0
        %v2205 = vmul.f32 %v1921, 2.0
        %v2206 = vmul.f32 %v1991, 2.0
        %v2207 = vmul.f32 %v2061, 2.0
        %v2208 = vmul.f32 %v2131, 2.0
        %v2209 = vsub.f32 %v1089, %v2205
        %v2210 = vsub.f32 %v1159, %v2206
        %v2211 = vsub.f32 %v1229, %v2207
        %v2212 = vsub.f32 %v1299, %v2208
        %v2213 = vlaneseq
        %v2214 = vshrl.u32 %v2213, 7
        %v2215 = vsub.s32 0, %v2214
        %v2216 = vrot.slane %v2202, %v2215
        %2218 = vbcast.lane.b32.xlu0 %v2216, 256
        %v2219 = vpop.permute.xlu0 %2218
        %v2220 = vlaneseq
        %v2221 = vshrl.u32 %v2220, 7
        %v2222 = vsub.s32 1, %v2221
        %v2223 = vrot.slane %v2202, %v2222
        %2225 = vbcast.lane.b32.xlu0 %v2223, 256
        %v2226 = vpop.permute.xlu0 %2225
        %v2227 = vlaneseq
        %v2228 = vshrl.u32 %v2227, 7
        %v2229 = vsub.s32 2, %v2228
        %v2230 = vrot.slane %v2202, %v2229
        %2232 = vbcast.lane.b32.xlu0 %v2230, 256
        %v2233 = vpop.permute.xlu0 %2232
        %v2234 = vlaneseq
        %v2235 = vshrl.u32 %v2234, 7
        %v2236 = vsub.s32 3, %v2235
        %v2237 = vrot.slane %v2202, %v2236
        %2239 = vbcast.lane.b32.xlu0 %v2237, 256
        %v2240 = vpop.permute.xlu0 %2239
        %v2241 = vadd.f32 %v2209, %v2219
        %v2242 = vadd.f32 %v2210, %v2226
        %v2243 = vadd.f32 %v2211, %v2233
        %v2244 = vadd.f32 %v2212, %v2240
        %v2245 = vsub.f32 0.0, %v2241
        %v2246 = vsub.f32 0.0, %v2242
        %v2247 = vsub.f32 0.0, %v2243
        %v2248 = vsub.f32 0.0, %v2244
        %v2249 = vmul.f32 %v2245, 1.442695
        %v2250 = vpow.pop %v2249
        %v2251 = vmul.f32 %v2246, 1.442695
        %v2252 = vpow.pop %v2251
        %v2253 = vmul.f32 %v2247, 1.442695
        %v2254 = vpow.pop %v2253
        %v2255 = vmul.f32 %v2248, 1.442695
        %v2256 = vpow.pop %v2255
        %v2257 = vadd.f32 %v2250, 0.0
        %v2258 = vadd.f32 %v2252, 0.0
        %v2259 = vadd.f32 %v2254, 0.0
        %v2260 = vadd.f32 %v2256, 0.0
        %vm2261 = vcmask 60416
        %v2262 = vsel %vm2261, %v2257, -inf
        %2263 = vmax.xlane.f32.xlu0 %v2262
        %v2264 = vpop.xlane.xlu0 %2263
        %v2265 = vsel %vm2261, %v2258, -inf
        %2266 = vmax.xlane.f32.xlu0 %v2265
        %v2267 = vpop.xlane.xlu0 %2266
        %v2268 = vsel %vm2261, %v2259, -inf
        %2269 = vmax.xlane.f32.xlu0 %v2268
        %v2270 = vpop.xlane.xlu0 %2269
        %v2271 = vsel %vm2261, %v2260, -inf
        %2272 = vmax.xlane.f32.xlu0 %v2271
        %v2273 = vpop.xlane.xlu0 %2272
        %v2274 = vsub.f32 %v2257, %v2264
        %v2275 = vsub.f32 %v2258, %v2267
        %v2276 = vsub.f32 %v2259, %v2270
        %v2277 = vsub.f32 %v2260, %v2273
        %v2278 = vmul.f32 %v2274, 1.442695
        %v2279 = vpow.pop %v2278
        %v2280 = vmul.f32 %v2275, 1.442695
        %v2281 = vpow.pop %v2280
        %v2282 = vmul.f32 %v2276, 1.442695
        %v2283 = vpow.pop %v2282
        %v2284 = vmul.f32 %v2277, 1.442695
        %v2285 = vpow.pop %v2284
        %v2286 = vsel %vm2261, %v2279, 0.0
        %2287 = vadd.xlane.f32.xlu0 %v2286
        %v2288 = vpop.xlane.xlu0 %2287
        %v2289 = vsel %vm2261, %v2281, 0.0
        %2290 = vadd.xlane.f32.xlu0 %v2289
        %v2291 = vpop.xlane.xlu0 %2290
        %v2292 = vsel %vm2261, %v2283, 0.0
        %2293 = vadd.xlane.f32.xlu0 %v2292
        %v2294 = vpop.xlane.xlu0 %2293
        %v2295 = vsel %vm2261, %v2285, 0.0
        %2296 = vadd.xlane.f32.xlu0 %v2295
        %v2297 = vpop.xlane.xlu0 %2296
        %v2298 = vrcp.pop %v2288
        %v2299 = vmul.f32 %v2279, %v2298
        %v2300 = vrcp.pop %v2291
        %v2301 = vmul.f32 %v2281, %v2300
        %v2302 = vrcp.pop %v2294
        %v2303 = vmul.f32 %v2283, %v2302
        %v2304 = vrcp.pop %v2297
        %v2305 = vmul.f32 %v2285, %v2304
        %v2307 = vsel %vm1302, %v2299, 0
        %2309 = vmatprep.subr.mxu0 0.0
        %2310 = vmatpush1.msra.mxu0 %v996
        %2311 = vmatprep.subr.mxu0 0.0
        %2312 = vmatpush1.msra.mxu0 0.0
        %2313 = vmatprep.subr.mxu0 0.0
        %2314 = vmatpush1.msra.mxu0 0.0
        %2315 = vmatprep.subr.mxu0 0.0
        %2316 = vmatpush1.msra.mxu0 0.0
        %2317 = vmatprep.subr.mxu0 0.0
        %2318 = vmatpush1.msra.mxu0 0.0
        %2319 = vmatprep.subr.mxu0 0.0
        %2320 = vmatpush1.msra.mxu0 0.0
        %2321 = vmatprep.subr.mxu0 0.0
        %2322 = vmatpush1.msra.mxu0 0.0
        %2323 = vmatprep.subr.mxu0 0.0
        %2324 = vmatpush1.msra.mxu0 0.0
        %2325 = vmatprep.subr.mxu0 0.0
        %2326 = vmatpush1.msra.mxu0 0.0
        %2327 = vmatprep.subr.mxu0 0.0
        %2328 = vmatpush1.msra.mxu0 0.0
        %2329 = vmatprep.subr.mxu0 0.0
        %2330 = vmatpush1.msra.mxu0 0.0
        %2331 = vmatprep.subr.mxu0 0.0
        %2332 = vmatpush1.msra.mxu0 0.0
        %2333 = vmatprep.subr.mxu0 0.0
        %2334 = vmatpush1.msra.mxu0 0.0
        %2335 = vmatprep.subr.mxu0 0.0
        %2336 = vmatpush1.msra.mxu0 0.0
        %2337 = vmatprep.subr.mxu0 0.0
        %2338 = vmatpush1.msra.mxu0 0.0
        %2339 = vmatprep.subr.mxu0 0.0
        %2340 = vmatpush1.msra.mxu0 0.0
        %2341 = vmatprep.subr.mxu0 0.0
        %2342 = vmatpush1.msra.mxu0 0.0
        %2343 = vmatprep.subr.mxu0 0.0
        %2344 = vmatpush1.msra.mxu0 0.0
        %2345 = vmatprep.subr.mxu0 0.0
        %2346 = vmatpush1.msra.mxu0 0.0
        %2347 = vmatprep.subr.mxu0 0.0
        %2348 = vmatpush1.msra.mxu0 0.0
        %2349 = vmatprep.subr.mxu0 0.0
        %2350 = vmatpush1.msra.mxu0 0.0
        %2351 = vmatprep.subr.mxu0 0.0
        %2352 = vmatpush1.msra.mxu0 0.0
        %2353 = vmatprep.subr.mxu0 0.0
        %2354 = vmatpush1.msra.mxu0 0.0
        %2355 = vmatprep.subr.mxu0 0.0
        %2356 = vmatpush1.msra.mxu0 0.0
        %2357 = vmatprep.subr.mxu0 0.0
        %2358 = vmatpush1.msra.mxu0 0.0
        %2359 = vmatprep.subr.mxu0 0.0
        %2360 = vmatpush1.msra.mxu0 0.0
        %2361 = vmatprep.subr.mxu0 0.0
        %2362 = vmatpush1.msra.mxu0 0.0
        %2363 = vmatprep.subr.mxu0 0.0
        %2364 = vmatpush1.msra.mxu0 0.0
        %2365 = vmatprep.subr.mxu0 0.0
        %2366 = vmatpush1.msra.mxu0 0.0
        %2367 = vmatprep.subr.mxu0 0.0
        %2368 = vmatpush1.msra.mxu0 0.0
        %2369 = vmatprep.subr.mxu0 0.0
        %2370 = vmatpush1.msra.mxu0 0.0
        %2371 = vmatprep.subr.mxu0 0.0
        %2372 = vmatpush1.msra.mxu0 0.0
        %2373 = vmatprep.mubr.f32.mxu0 0.0
        %2374 = vmatmul.mubr.f32.gmra.mrb[0].mxu0 %v2307
        %v2375 = vpop.f32.mrb[0].mxu0
        %v2376 = vadd.f32 0.0, %v2375
        %v2377 = vpop.f32.mrb[0].mxu0
        %2378 = vdwg.mxu0
        %v2380 = vsel %vm1302, %v2301, 0
        %2382 = vmatprep.subr.mxu0 0.0
        %2383 = vmatpush1.msra.mxu0 %v997
        %2384 = vmatprep.subr.mxu0 0.0
        %2385 = vmatpush1.msra.mxu0 0.0
        %2386 = vmatprep.subr.mxu0 0.0
        %2387 = vmatpush1.msra.mxu0 0.0
        %2388 = vmatprep.subr.mxu0 0.0
        %2389 = vmatpush1.msra.mxu0 0.0
        %2390 = vmatprep.subr.mxu0 0.0
        %2391 = vmatpush1.msra.mxu0 0.0
        %2392 = vmatprep.subr.mxu0 0.0
        %2393 = vmatpush1.msra.mxu0 0.0
        %2394 = vmatprep.subr.mxu0 0.0
        %2395 = vmatpush1.msra.mxu0 0.0
        %2396 = vmatprep.subr.mxu0 0.0
        %2397 = vmatpush1.msra.mxu0 0.0
        %2398 = vmatprep.subr.mxu0 0.0
        %2399 = vmatpush1.msra.mxu0 0.0
        %2400 = vmatprep.subr.mxu0 0.0
        %2401 = vmatpush1.msra.mxu0 0.0
        %2402 = vmatprep.subr.mxu0 0.0
        %2403 = vmatpush1.msra.mxu0 0.0
        %2404 = vmatprep.subr.mxu0 0.0
        %2405 = vmatpush1.msra.mxu0 0.0
        %2406 = vmatprep.subr.mxu0 0.0
        %2407 = vmatpush1.msra.mxu0 0.0
        %2408 = vmatprep.subr.mxu0 0.0
        %2409 = vmatpush1.msra.mxu0 0.0
        %2410 = vmatprep.subr.mxu0 0.0
        %2411 = vmatpush1.msra.mxu0 0.0
        %2412 = vmatprep.subr.mxu0 0.0
        %2413 = vmatpush1.msra.mxu0 0.0
        %2414 = vmatprep.subr.mxu0 0.0
        %2415 = vmatpush1.msra.mxu0 0.0
        %2416 = vmatprep.subr.mxu0 0.0
        %2417 = vmatpush1.msra.mxu0 0.0
        %2418 = vmatprep.subr.mxu0 0.0
        %2419 = vmatpush1.msra.mxu0 0.0
        %2420 = vmatprep.subr.mxu0 0.0
        %2421 = vmatpush1.msra.mxu0 0.0
        %2422 = vmatprep.subr.mxu0 0.0
        %2423 = vmatpush1.msra.mxu0 0.0
        %2424 = vmatprep.subr.mxu0 0.0
        %2425 = vmatpush1.msra.mxu0 0.0
        %2426 = vmatprep.subr.mxu0 0.0
        %2427 = vmatpush1.msra.mxu0 0.0
        %2428 = vmatprep.subr.mxu0 0.0
        %2429 = vmatpush1.msra.mxu0 0.0
        %2430 = vmatprep.subr.mxu0 0.0
        %2431 = vmatpush1.msra.mxu0 0.0
        %2432 = vmatprep.subr.mxu0 0.0
        %2433 = vmatpush1.msra.mxu0 0.0
        %2434 = vmatprep.subr.mxu0 0.0
        %2435 = vmatpush1.msra.mxu0 0.0
        %2436 = vmatprep.subr.mxu0 0.0
        %2437 = vmatpush1.msra.mxu0 0.0
        %2438 = vmatprep.subr.mxu0 0.0
        %2439 = vmatpush1.msra.mxu0 0.0
        %2440 = vmatprep.subr.mxu0 0.0
        %2441 = vmatpush1.msra.mxu0 0.0
        %2442 = vmatprep.subr.mxu0 0.0
        %2443 = vmatpush1.msra.mxu0 0.0
        %2444 = vmatprep.subr.mxu0 0.0
        %2445 = vmatpush1.msra.mxu0 0.0
        %2446 = vmatprep.mubr.f32.mxu0 0.0
        %2447 = vmatmul.mubr.f32.gmra.mrb[0].mxu0 %v2380
        %v2448 = vpop.f32.mrb[0].mxu0
        %v2449 = vadd.f32 0.0, %v2448
        %v2450 = vpop.f32.mrb[0].mxu0
        %2451 = vdwg.mxu0
        %v2453 = vsel %vm1302, %v2303, 0
        %2455 = vmatprep.subr.mxu0 0.0
        %2456 = vmatpush1.msra.mxu0 %v998
        %2457 = vmatprep.subr.mxu0 0.0
        %2458 = vmatpush1.msra.mxu0 0.0
        %2459 = vmatprep.subr.mxu0 0.0
        %2460 = vmatpush1.msra.mxu0 0.0
        %2461 = vmatprep.subr.mxu0 0.0
        %2462 = vmatpush1.msra.mxu0 0.0
        %2463 = vmatprep.subr.mxu0 0.0
        %2464 = vmatpush1.msra.mxu0 0.0
        %2465 = vmatprep.subr.mxu0 0.0
        %2466 = vmatpush1.msra.mxu0 0.0
        %2467 = vmatprep.subr.mxu0 0.0
        %2468 = vmatpush1.msra.mxu0 0.0
        %2469 = vmatprep.subr.mxu0 0.0
        %2470 = vmatpush1.msra.mxu0 0.0
        %2471 = vmatprep.subr.mxu0 0.0
        %2472 = vmatpush1.msra.mxu0 0.0
        %2473 = vmatprep.subr.mxu0 0.0
        %2474 = vmatpush1.msra.mxu0 0.0
        %2475 = vmatprep.subr.mxu0 0.0
        %2476 = vmatpush1.msra.mxu0 0.0
        %2477 = vmatprep.subr.mxu0 0.0
        %2478 = vmatpush1.msra.mxu0 0.0
        %2479 = vmatprep.subr.mxu0 0.0
        %2480 = vmatpush1.msra.mxu0 0.0
        %2481 = vmatprep.subr.mxu0 0.0
        %2482 = vmatpush1.msra.mxu0 0.0
        %2483 = vmatprep.subr.mxu0 0.0
        %2484 = vmatpush1.msra.mxu0 0.0
        %2485 = vmatprep.subr.mxu0 0.0
        %2486 = vmatpush1.msra.mxu0 0.0
        %2487 = vmatprep.subr.mxu0 0.0
        %2488 = vmatpush1.msra.mxu0 0.0
        %2489 = vmatprep.subr.mxu0 0.0
        %2490 = vmatpush1.msra.mxu0 0.0
        %2491 = vmatprep.subr.mxu0 0.0
        %2492 = vmatpush1.msra.mxu0 0.0
        %2493 = vmatprep.subr.mxu0 0.0
        %2494 = vmatpush1.msra.mxu0 0.0
        %2495 = vmatprep.subr.mxu0 0.0
        %2496 = vmatpush1.msra.mxu0 0.0
        %2497 = vmatprep.subr.mxu0 0.0
        %2498 = vmatpush1.msra.mxu0 0.0
        %2499 = vmatprep.subr.mxu0 0.0
        %2500 = vmatpush1.msra.mxu0 0.0
        %2501 = vmatprep.subr.mxu0 0.0
        %2502 = vmatpush1.msra.mxu0 0.0
        %2503 = vmatprep.subr.mxu0 0.0
        %2504 = vmatpush1.msra.mxu0 0.0
        %2505 = vmatprep.subr.mxu0 0.0
        %2506 = vmatpush1.msra.mxu0 0.0
        %2507 = vmatprep.subr.mxu0 0.0
        %2508 = vmatpush1.msra.mxu0 0.0
        %2509 = vmatprep.subr.mxu0 0.0
        %2510 = vmatpush1.msra.mxu0 0.0
        %2511 = vmatprep.subr.mxu0 0.0
        %2512 = vmatpush1.msra.mxu0 0.0
        %2513 = vmatprep.subr.mxu0 0.0
        %2514 = vmatpush1.msra.mxu0 0.0
        %2515 = vmatprep.subr.mxu0 0.0
        %2516 = vmatpush1.msra.mxu0 0.0
        %2517 = vmatprep.subr.mxu0 0.0
        %2518 = vmatpush1.msra.mxu0 0.0
        %2519 = vmatprep.mubr.f32.mxu0 0.0
        %2520 = vmatmul.mubr.f32.gmra.mrb[0].mxu0 %v2453
        %v2521 = vpop.f32.mrb[0].mxu0
        %v2522 = vadd.f32 0.0, %v2521
        %v2523 = vpop.f32.mrb[0].mxu0
        %2524 = vdwg.mxu0
        %v2526 = vsel %vm1302, %v2305, 0
        %2528 = vmatprep.subr.mxu0 0.0
        %2529 = vmatpush1.msra.mxu0 %v999
        %2530 = vmatprep.subr.mxu0 0.0
        %2531 = vmatpush1.msra.mxu0 0.0
        %2532 = vmatprep.subr.mxu0 0.0
        %2533 = vmatpush1.msra.mxu0 0.0
        %2534 = vmatprep.subr.mxu0 0.0
        %2535 = vmatpush1.msra.mxu0 0.0
        %2536 = vmatprep.subr.mxu0 0.0
        %2537 = vmatpush1.msra.mxu0 0.0
        %2538 = vmatprep.subr.mxu0 0.0
        %2539 = vmatpush1.msra.mxu0 0.0
        %2540 = vmatprep.subr.mxu0 0.0
        %2541 = vmatpush1.msra.mxu0 0.0
        %2542 = vmatprep.subr.mxu0 0.0
        %2543 = vmatpush1.msra.mxu0 0.0
        %2544 = vmatprep.subr.mxu0 0.0
        %2545 = vmatpush1.msra.mxu0 0.0
        %2546 = vmatprep.subr.mxu0 0.0
        %2547 = vmatpush1.msra.mxu0 0.0
        %2548 = vmatprep.subr.mxu0 0.0
        %2549 = vmatpush1.msra.mxu0 0.0
        %2550 = vmatprep.subr.mxu0 0.0
        %2551 = vmatpush1.msra.mxu0 0.0
        %2552 = vmatprep.subr.mxu0 0.0
        %2553 = vmatpush1.msra.mxu0 0.0
        %2554 = vmatprep.subr.mxu0 0.0
        %2555 = vmatpush1.msra.mxu0 0.0
        %2556 = vmatprep.subr.mxu0 0.0
        %2557 = vmatpush1.msra.mxu0 0.0
        %2558 = vmatprep.subr.mxu0 0.0
        %2559 = vmatpush1.msra.mxu0 0.0
        %2560 = vmatprep.subr.mxu0 0.0
        %2561 = vmatpush1.msra.mxu0 0.0
        %2562 = vmatprep.subr.mxu0 0.0
        %2563 = vmatpush1.msra.mxu0 0.0
        %2564 = vmatprep.subr.mxu0 0.0
        %2565 = vmatpush1.msra.mxu0 0.0
        %2566 = vmatprep.subr.mxu0 0.0
        %2567 = vmatpush1.msra.mxu0 0.0
        %2568 = vmatprep.subr.mxu0 0.0
        %2569 = vmatpush1.msra.mxu0 0.0
        %2570 = vmatprep.subr.mxu0 0.0
        %2571 = vmatpush1.msra.mxu0 0.0
        %2572 = vmatprep.subr.mxu0 0.0
        %2573 = vmatpush1.msra.mxu0 0.0
        %2574 = vmatprep.subr.mxu0 0.0
        %2575 = vmatpush1.msra.mxu0 0.0
        %2576 = vmatprep.subr.mxu0 0.0
        %2577 = vmatpush1.msra.mxu0 0.0
        %2578 = vmatprep.subr.mxu0 0.0
        %2579 = vmatpush1.msra.mxu0 0.0
        %2580 = vmatprep.subr.mxu0 0.0
        %2581 = vmatpush1.msra.mxu0 0.0
        %2582 = vmatprep.subr.mxu0 0.0
        %2583 = vmatpush1.msra.mxu0 0.0
        %2584 = vmatprep.subr.mxu0 0.0
        %2585 = vmatpush1.msra.mxu0 0.0
        %2586 = vmatprep.subr.mxu0 0.0
        %2587 = vmatpush1.msra.mxu0 0.0
        %2588 = vmatprep.subr.mxu0 0.0
        %2589 = vmatpush1.msra.mxu0 0.0
        %2590 = vmatprep.subr.mxu0 0.0
        %2591 = vmatpush1.msra.mxu0 0.0
        %2592 = vmatprep.mubr.f32.mxu0 0.0
        %2593 = vmatmul.mubr.f32.gmra.mrb[0].mxu0 %v2526
        %v2594 = vpop.f32.mrb[0].mxu0
        %v2595 = vadd.f32 0.0, %v2594
        %v2596 = vpop.f32.mrb[0].mxu0
        %2597 = vdwg.mxu0
        %v2598 = vmul.f32 %v2376, %v1000
        %v2599 = vmul.f32 %v2449, %v1000
        %v2600 = vmul.f32 %v2522, %v1000
        %v2601 = vmul.f32 %v2595, %v1000
        %v2602 = vsel %vm1595, %v2598, 0.0
        %v2603 = vrot.slane %v2602, 4
        %v2604 = vadd.f32 %v2602, %v2603
        %v2605 = vrot.slane %v2604, 2
        %v2606 = vadd.f32 %v2604, %v2605
        %v2607 = vrot.slane %v2606, 1
        %v2608 = vadd.f32 %v2606, %v2607
        %v2609 = vsel %vm1595, %v2599, 0.0
        %v2610 = vrot.slane %v2609, 4
        %v2611 = vadd.f32 %v2609, %v2610
        %v2612 = vrot.slane %v2611, 2
        %v2613 = vadd.f32 %v2611, %v2612
        %v2614 = vrot.slane %v2613, 1
        %v2615 = vadd.f32 %v2613, %v2614
        %v2616 = vsel %vm1595, %v2600, 0.0
        %v2617 = vrot.slane %v2616, 4
        %v2618 = vadd.f32 %v2616, %v2617
        %v2619 = vrot.slane %v2618, 2
        %v2620 = vadd.f32 %v2618, %v2619
        %v2621 = vrot.slane %v2620, 1
        %v2622 = vadd.f32 %v2620, %v2621
        %v2623 = vsel %vm1595, %v2601, 0.0
        %v2624 = vrot.slane %v2623, 4
        %v2625 = vadd.f32 %v2623, %v2624
        %v2626 = vrot.slane %v2625, 2
        %v2627 = vadd.f32 %v2625, %v2626
        %v2628 = vrot.slane %v2627, 1
        %v2629 = vadd.f32 %v2627, %v2628
        %v2630 = vmul.f32 %v2608, %v2608
        %v2631 = vmul.f32 %v2615, %v2615
        %v2632 = vmul.f32 %v2622, %v2622
        %v2633 = vmul.f32 %v2629, %v2629
        %v2638 = vsel %vm941, %v2631, %v2630
        %v2639 = vsel %vm944, %v2632, %v2638
        %v2640 = vsel %vm947, %v2633, %v2639
        %2642 = vmatprep.subr.mxu0 0.0
        %2643 = vmatpush1.msra.mxu0 %v1001
        %2644 = vmatprep.subr.mxu0 0.0
        %2645 = vmatpush1.msra.mxu0 %v1002
        %2646 = vmatprep.subr.mxu0 0.0
        %2647 = vmatpush1.msra.mxu0 %v1003
        %2648 = vmatprep.subr.mxu0 0.0
        %2649 = vmatpush1.msra.mxu0 %v1004
        %2650 = vmatprep.subr.mxu0 0.0
        %2651 = vmatpush1.msra.mxu0 %v1005
        %2652 = vmatprep.subr.mxu0 0.0
        %2653 = vmatpush1.msra.mxu0 %v1006
        %2654 = vmatprep.subr.mxu0 0.0
        %2655 = vmatpush1.msra.mxu0 %v1007
        %2656 = vmatprep.subr.mxu0 0.0
        %2657 = vmatpush1.msra.mxu0 %v1008
        %2658 = vmatprep.subr.mxu0 0.0
        %2659 = vmatpush1.msra.mxu0 %v1009
        %2660 = vmatprep.subr.mxu0 0.0
        %2661 = vmatpush1.msra.mxu0 %v1010
        %2662 = vmatprep.subr.mxu0 0.0
        %2663 = vmatpush1.msra.mxu0 %v1011
        %2664 = vmatprep.subr.mxu0 0.0
        %2665 = vmatpush1.msra.mxu0 %v1012
        %2666 = vmatprep.subr.mxu0 0.0
        %2667 = vmatpush1.msra.mxu0 %v1013
        %2668 = vmatprep.subr.mxu0 0.0
        %2669 = vmatpush1.msra.mxu0 %v1014
        %2670 = vmatprep.subr.mxu0 0.0
        %2671 = vmatpush1.msra.mxu0 %v1015
        %2672 = vmatprep.subr.mxu0 0.0
        %2673 = vmatpush1.msra.mxu0 %v1016
        %2674 = vmatprep.subr.mxu0 0.0
        %2675 = vmatpush1.msra.mxu0 0.0
        %2676 = vmatprep.subr.mxu0 0.0
        %2677 = vmatpush1.msra.mxu0 0.0
        %2678 = vmatprep.subr.mxu0 0.0
        %2679 = vmatpush1.msra.mxu0 0.0
        %2680 = vmatprep.subr.mxu0 0.0
        %2681 = vmatpush1.msra.mxu0 0.0
        %2682 = vmatprep.subr.mxu0 0.0
        %2683 = vmatpush1.msra.mxu0 0.0
        %2684 = vmatprep.subr.mxu0 0.0
        %2685 = vmatpush1.msra.mxu0 0.0
        %2686 = vmatprep.subr.mxu0 0.0
        %2687 = vmatpush1.msra.mxu0 0.0
        %2688 = vmatprep.subr.mxu0 0.0
        %2689 = vmatpush1.msra.mxu0 0.0
        %2690 = vmatprep.subr.mxu0 0.0
        %2691 = vmatpush1.msra.mxu0 0.0
        %2692 = vmatprep.subr.mxu0 0.0
        %2693 = vmatpush1.msra.mxu0 0.0
        %2694 = vmatprep.subr.mxu0 0.0
        %2695 = vmatpush1.msra.mxu0 0.0
        %2696 = vmatprep.subr.mxu0 0.0
        %2697 = vmatpush1.msra.mxu0 0.0
        %2698 = vmatprep.subr.mxu0 0.0
        %2699 = vmatpush1.msra.mxu0 0.0
        %2700 = vmatprep.subr.mxu0 0.0
        %2701 = vmatpush1.msra.mxu0 0.0
        %2702 = vmatprep.subr.mxu0 0.0
        %2703 = vmatpush1.msra.mxu0 0.0
        %2704 = vmatprep.subr.mxu0 0.0
        %2705 = vmatpush1.msra.mxu0 0.0
        %2706 = vmatprep.mubr.f32.mxu0 0.0
        %2707 = vmatmul.mubr.f32.gmra.mrb[0].mxu0 %v2640
        %v2708 = vpop.f32.mrb[0].mxu0
        %v2709 = vadd.f32 0.0, %v2708
        %v2710 = vpop.f32.mrb[0].mxu0
        %2711 = vdwg.mxu0
        %v2712 = vadd.f32 %v2709, 1.0
        %v2713 = vrcp.pop %v2712
        %v2714 = vmul.f32 %v2709, %v2713
        %v2715 = vadd.f32 %v2709, 1e-12
        %v2716 = vrsqrt.pop %v2715
        %v2717 = vmul.f32 %v2714, %v2716
        %v2719 = vsel %vm1712, %v2717, 0
        %2721 = vmatprep.subr.mxu0 0.0
        %2722 = vmatpush1.msra.mxu0 %v1717
        %2723 = vmatprep.subr.mxu0 0.0
        %2724 = vmatpush1.msra.mxu0 0.0
        %2725 = vmatprep.subr.mxu0 0.0
        %2726 = vmatpush1.msra.mxu0 0.0
        %2727 = vmatprep.subr.mxu0 0.0
        %2728 = vmatpush1.msra.mxu0 0.0
        %2729 = vmatprep.subr.mxu0 0.0
        %2730 = vmatpush1.msra.mxu0 0.0
        %2731 = vmatprep.subr.mxu0 0.0
        %2732 = vmatpush1.msra.mxu0 0.0
        %2733 = vmatprep.subr.mxu0 0.0
        %2734 = vmatpush1.msra.mxu0 0.0
        %2735 = vmatprep.subr.mxu0 0.0
        %2736 = vmatpush1.msra.mxu0 0.0
        %2737 = vmatprep.subr.mxu0 0.0
        %2738 = vmatpush1.msra.mxu0 0.0
        %2739 = vmatprep.subr.mxu0 0.0
        %2740 = vmatpush1.msra.mxu0 0.0
        %2741 = vmatprep.subr.mxu0 0.0
        %2742 = vmatpush1.msra.mxu0 0.0
        %2743 = vmatprep.subr.mxu0 0.0
        %2744 = vmatpush1.msra.mxu0 0.0
        %2745 = vmatprep.subr.mxu0 0.0
        %2746 = vmatpush1.msra.mxu0 0.0
        %2747 = vmatprep.subr.mxu0 0.0
        %2748 = vmatpush1.msra.mxu0 0.0
        %2749 = vmatprep.subr.mxu0 0.0
        %2750 = vmatpush1.msra.mxu0 0.0
        %2751 = vmatprep.subr.mxu0 0.0
        %2752 = vmatpush1.msra.mxu0 0.0
        %2753 = vmatprep.subr.mxu0 0.0
        %2754 = vmatpush1.msra.mxu0 0.0
        %2755 = vmatprep.subr.mxu0 0.0
        %2756 = vmatpush1.msra.mxu0 0.0
        %2757 = vmatprep.subr.mxu0 0.0
        %2758 = vmatpush1.msra.mxu0 0.0
        %2759 = vmatprep.subr.mxu0 0.0
        %2760 = vmatpush1.msra.mxu0 0.0
        %2761 = vmatprep.subr.mxu0 0.0
        %2762 = vmatpush1.msra.mxu0 0.0
        %2763 = vmatprep.subr.mxu0 0.0
        %2764 = vmatpush1.msra.mxu0 0.0
        %2765 = vmatprep.subr.mxu0 0.0
        %2766 = vmatpush1.msra.mxu0 0.0
        %2767 = vmatprep.subr.mxu0 0.0
        %2768 = vmatpush1.msra.mxu0 0.0
        %2769 = vmatprep.subr.mxu0 0.0
        %2770 = vmatpush1.msra.mxu0 0.0
        %2771 = vmatprep.subr.mxu0 0.0
        %2772 = vmatpush1.msra.mxu0 0.0
        %2773 = vmatprep.subr.mxu0 0.0
        %2774 = vmatpush1.msra.mxu0 0.0
        %2775 = vmatprep.subr.mxu0 0.0
        %2776 = vmatpush1.msra.mxu0 0.0
        %2777 = vmatprep.subr.mxu0 0.0
        %2778 = vmatpush1.msra.mxu0 0.0
        %2779 = vmatprep.subr.mxu0 0.0
        %2780 = vmatpush1.msra.mxu0 0.0
        %2781 = vmatprep.subr.mxu0 0.0
        %2782 = vmatpush1.msra.mxu0 0.0
        %2783 = vmatprep.subr.mxu0 0.0
        %2784 = vmatpush1.msra.mxu0 0.0
        %2785 = vmatprep.mubr.f32.mxu0 0.0
        %2786 = vmatmul.mubr.f32.gmra.mrb[0].mxu0 %v2719
        %v2787 = vpop.f32.mrb[0].mxu0
        %v2788 = vadd.f32 0.0, %v2787
        %v2789 = vpop.f32.mrb[0].mxu0
        %2790 = vdwg.mxu0
        %v2795 = vsel %vm941, %v2615, %v2608
        %v2796 = vsel %vm944, %v2622, %v2795
        %v2797 = vsel %vm947, %v2629, %v2796
        %v2799 = vmul.f32 %v2788, %v2797
        %v2800 = vadd.f32 %v2799, %v1802
        %v2803 = vunpack.c.l.s4 1966171168
        %v2804 = vunpack.c.0.s8 %v2803
        %v2805 = vlaneseq
        %v2806 = vshrl.u32 %v2805, 7
        %v2807 = vsub.s32 %v2804, %v2806
        %v2808 = vrot.slane %v2800, %v2807
        %v2809 = vcombine.high %v2808, %v2808
        %v2811 = vunpack.c.l.s4 1966171168
        %v2812 = vunpack.c.0.s8 %v2811
        %v2813 = vlaneseq
        %v2814 = vshrl.u32 %v2813, 7
        %v2815 = vsub.s32 %v2812, %v2814
        %v2816 = vrot.slane %v2808, %v2815
        %v2818 = vunpack.c.l.s4 1966171168
        %v2819 = vunpack.c.0.s8 %v2818
        %v2820 = vlaneseq
        %v2821 = vshrl.u32 %v2820, 7
        %v2822 = vsub.s32 %v2819, %v2821
        %v2823 = vrot.slane %v2809, %v2822
        %v2824 = vcombine.high %v2816, %v2816
        %v2825 = vcombine.high %v2823, %v2823
        %v2826 = vlaneseq
        %v2827 = vshrl.u32 %v2826, 7
        %v2828 = vsub.s32 0, %v2827
        %v2829 = vrot.slane %v2816, %v2828
        %v2830 = vlaneseq
        %v2831 = vshrl.u32 %v2830, 7
        %v2832 = vsub.s32 0, %v2831
        %v2833 = vrot.slane %v2823, %v2832
        %v2834 = vlaneseq
        %v2835 = vshrl.u32 %v2834, 7
        %v2836 = vsub.s32 0, %v2835
        %v2837 = vrot.slane %v2824, %v2836
        %v2838 = vlaneseq
        %v2839 = vshrl.u32 %v2838, 7
        %v2840 = vsub.s32 0, %v2839
        %v2841 = vrot.slane %v2825, %v2840
        %v2846 = vmul.f32 %v2829, %v1000
        %v2847 = vmul.f32 %v2833, %v1000
        %v2848 = vmul.f32 %v2837, %v1000
        %v2849 = vmul.f32 %v2841, %v1000
        %2850 = vmatprep.subr.mxu0 0.0
        %2851 = vmatpush1.xpose.msra.mxu0 %v996
        %2852 = vmatprep.subr.mxu0 0.0
        %2853 = vmatpush1.xpose.msra.mxu0 0.0
        %2854 = vmatprep.subr.mxu0 0.0
        %2855 = vmatpush1.xpose.msra.mxu0 0.0
        %2856 = vmatprep.subr.mxu0 0.0
        %2857 = vmatpush1.xpose.msra.mxu0 0.0
        %2858 = vmatprep.subr.mxu0 0.0
        %2859 = vmatpush1.xpose.msra.mxu0 0.0
        %2860 = vmatprep.subr.mxu0 0.0
        %2861 = vmatpush1.xpose.msra.mxu0 0.0
        %2862 = vmatprep.subr.mxu0 0.0
        %2863 = vmatpush1.xpose.msra.mxu0 0.0
        %2864 = vmatprep.subr.mxu0 0.0
        %2865 = vmatpush1.xpose.msra.mxu0 0.0
        %2866 = vmatprep.subr.mxu0 0.0
        %2867 = vmatpush1.xpose.msra.mxu0 0.0
        %2868 = vmatprep.subr.mxu0 0.0
        %2869 = vmatpush1.xpose.msra.mxu0 0.0
        %2870 = vmatprep.subr.mxu0 0.0
        %2871 = vmatpush1.xpose.msra.mxu0 0.0
        %2872 = vmatprep.subr.mxu0 0.0
        %2873 = vmatpush1.xpose.msra.mxu0 0.0
        %2874 = vmatprep.subr.mxu0 0.0
        %2875 = vmatpush1.xpose.msra.mxu0 0.0
        %2876 = vmatprep.subr.mxu0 0.0
        %2877 = vmatpush1.xpose.msra.mxu0 0.0
        %2878 = vmatprep.subr.mxu0 0.0
        %2879 = vmatpush1.xpose.msra.mxu0 0.0
        %2880 = vmatprep.subr.mxu0 0.0
        %2881 = vmatpush1.xpose.msra.mxu0 0.0
        %2882 = vmatprep.subr.mxu0 0.0
        %2883 = vmatpush1.xpose.msra.mxu0 0.0
        %2884 = vmatprep.subr.mxu0 0.0
        %2885 = vmatpush1.xpose.msra.mxu0 0.0
        %2886 = vmatprep.subr.mxu0 0.0
        %2887 = vmatpush1.xpose.msra.mxu0 0.0
        %2888 = vmatprep.subr.mxu0 0.0
        %2889 = vmatpush1.xpose.msra.mxu0 0.0
        %2890 = vmatprep.subr.mxu0 0.0
        %2891 = vmatpush1.xpose.msra.mxu0 0.0
        %2892 = vmatprep.subr.mxu0 0.0
        %2893 = vmatpush1.xpose.msra.mxu0 0.0
        %2894 = vmatprep.subr.mxu0 0.0
        %2895 = vmatpush1.xpose.msra.mxu0 0.0
        %2896 = vmatprep.subr.mxu0 0.0
        %2897 = vmatpush1.xpose.msra.mxu0 0.0
        %2898 = vmatprep.subr.mxu0 0.0
        %2899 = vmatpush1.xpose.msra.mxu0 0.0
        %2900 = vmatprep.subr.mxu0 0.0
        %2901 = vmatpush1.xpose.msra.mxu0 0.0
        %2902 = vmatprep.subr.mxu0 0.0
        %2903 = vmatpush1.xpose.msra.mxu0 0.0
        %2904 = vmatprep.subr.mxu0 0.0
        %2905 = vmatpush1.xpose.msra.mxu0 0.0
        %2906 = vmatprep.subr.mxu0 0.0
        %2907 = vmatpush1.xpose.msra.mxu0 0.0
        %2908 = vmatprep.subr.mxu0 0.0
        %2909 = vmatpush1.xpose.msra.mxu0 0.0
        %2910 = vmatprep.subr.mxu0 0.0
        %2911 = vmatpush1.xpose.msra.mxu0 0.0
        %2912 = vmatprep.subr.mxu0 0.0
        %2913 = vmatpush1.xpose.msra.mxu0 0.0
        %2914 = vmatprep.mubr.f32.mxu0 0.0
        %2915 = vmatmul.mubr.f32.gmra.mrb[0].mxu0 %v2846
        %v2916 = vpop.f32.mrb[0].mxu0
        %v2917 = vadd.f32 0.0, %v2916
        %v2918 = vpop.f32.mrb[0].mxu0
        %2919 = vdwg.mxu0
        %2920 = vmatprep.subr.mxu0 0.0
        %2921 = vmatpush1.xpose.msra.mxu0 %v997
        %2922 = vmatprep.subr.mxu0 0.0
        %2923 = vmatpush1.xpose.msra.mxu0 0.0
        %2924 = vmatprep.subr.mxu0 0.0
        %2925 = vmatpush1.xpose.msra.mxu0 0.0
        %2926 = vmatprep.subr.mxu0 0.0
        %2927 = vmatpush1.xpose.msra.mxu0 0.0
        %2928 = vmatprep.subr.mxu0 0.0
        %2929 = vmatpush1.xpose.msra.mxu0 0.0
        %2930 = vmatprep.subr.mxu0 0.0
        %2931 = vmatpush1.xpose.msra.mxu0 0.0
        %2932 = vmatprep.subr.mxu0 0.0
        %2933 = vmatpush1.xpose.msra.mxu0 0.0
        %2934 = vmatprep.subr.mxu0 0.0
        %2935 = vmatpush1.xpose.msra.mxu0 0.0
        %2936 = vmatprep.subr.mxu0 0.0
        %2937 = vmatpush1.xpose.msra.mxu0 0.0
        %2938 = vmatprep.subr.mxu0 0.0
        %2939 = vmatpush1.xpose.msra.mxu0 0.0
        %2940 = vmatprep.subr.mxu0 0.0
        %2941 = vmatpush1.xpose.msra.mxu0 0.0
        %2942 = vmatprep.subr.mxu0 0.0
        %2943 = vmatpush1.xpose.msra.mxu0 0.0
        %2944 = vmatprep.subr.mxu0 0.0
        %2945 = vmatpush1.xpose.msra.mxu0 0.0
        %2946 = vmatprep.subr.mxu0 0.0
        %2947 = vmatpush1.xpose.msra.mxu0 0.0
        %2948 = vmatprep.subr.mxu0 0.0
        %2949 = vmatpush1.xpose.msra.mxu0 0.0
        %2950 = vmatprep.subr.mxu0 0.0
        %2951 = vmatpush1.xpose.msra.mxu0 0.0
        %2952 = vmatprep.subr.mxu0 0.0
        %2953 = vmatpush1.xpose.msra.mxu0 0.0
        %2954 = vmatprep.subr.mxu0 0.0
        %2955 = vmatpush1.xpose.msra.mxu0 0.0
        %2956 = vmatprep.subr.mxu0 0.0
        %2957 = vmatpush1.xpose.msra.mxu0 0.0
        %2958 = vmatprep.subr.mxu0 0.0
        %2959 = vmatpush1.xpose.msra.mxu0 0.0
        %2960 = vmatprep.subr.mxu0 0.0
        %2961 = vmatpush1.xpose.msra.mxu0 0.0
        %2962 = vmatprep.subr.mxu0 0.0
        %2963 = vmatpush1.xpose.msra.mxu0 0.0
        %2964 = vmatprep.subr.mxu0 0.0
        %2965 = vmatpush1.xpose.msra.mxu0 0.0
        %2966 = vmatprep.subr.mxu0 0.0
        %2967 = vmatpush1.xpose.msra.mxu0 0.0
        %2968 = vmatprep.subr.mxu0 0.0
        %2969 = vmatpush1.xpose.msra.mxu0 0.0
        %2970 = vmatprep.subr.mxu0 0.0
        %2971 = vmatpush1.xpose.msra.mxu0 0.0
        %2972 = vmatprep.subr.mxu0 0.0
        %2973 = vmatpush1.xpose.msra.mxu0 0.0
        %2974 = vmatprep.subr.mxu0 0.0
        %2975 = vmatpush1.xpose.msra.mxu0 0.0
        %2976 = vmatprep.subr.mxu0 0.0
        %2977 = vmatpush1.xpose.msra.mxu0 0.0
        %2978 = vmatprep.subr.mxu0 0.0
        %2979 = vmatpush1.xpose.msra.mxu0 0.0
        %2980 = vmatprep.subr.mxu0 0.0
        %2981 = vmatpush1.xpose.msra.mxu0 0.0
        %2982 = vmatprep.subr.mxu0 0.0
        %2983 = vmatpush1.xpose.msra.mxu0 0.0
        %2984 = vmatprep.mubr.f32.mxu0 0.0
        %2985 = vmatmul.mubr.f32.gmra.mrb[0].mxu0 %v2847
        %v2986 = vpop.f32.mrb[0].mxu0
        %v2987 = vadd.f32 0.0, %v2986
        %v2988 = vpop.f32.mrb[0].mxu0
        %2989 = vdwg.mxu0
        %2990 = vmatprep.subr.mxu0 0.0
        %2991 = vmatpush1.xpose.msra.mxu0 %v998
        %2992 = vmatprep.subr.mxu0 0.0
        %2993 = vmatpush1.xpose.msra.mxu0 0.0
        %2994 = vmatprep.subr.mxu0 0.0
        %2995 = vmatpush1.xpose.msra.mxu0 0.0
        %2996 = vmatprep.subr.mxu0 0.0
        %2997 = vmatpush1.xpose.msra.mxu0 0.0
        %2998 = vmatprep.subr.mxu0 0.0
        %2999 = vmatpush1.xpose.msra.mxu0 0.0
        %3000 = vmatprep.subr.mxu0 0.0
        %3001 = vmatpush1.xpose.msra.mxu0 0.0
        %3002 = vmatprep.subr.mxu0 0.0
        %3003 = vmatpush1.xpose.msra.mxu0 0.0
        %3004 = vmatprep.subr.mxu0 0.0
        %3005 = vmatpush1.xpose.msra.mxu0 0.0
        %3006 = vmatprep.subr.mxu0 0.0
        %3007 = vmatpush1.xpose.msra.mxu0 0.0
        %3008 = vmatprep.subr.mxu0 0.0
        %3009 = vmatpush1.xpose.msra.mxu0 0.0
        %3010 = vmatprep.subr.mxu0 0.0
        %3011 = vmatpush1.xpose.msra.mxu0 0.0
        %3012 = vmatprep.subr.mxu0 0.0
        %3013 = vmatpush1.xpose.msra.mxu0 0.0
        %3014 = vmatprep.subr.mxu0 0.0
        %3015 = vmatpush1.xpose.msra.mxu0 0.0
        %3016 = vmatprep.subr.mxu0 0.0
        %3017 = vmatpush1.xpose.msra.mxu0 0.0
        %3018 = vmatprep.subr.mxu0 0.0
        %3019 = vmatpush1.xpose.msra.mxu0 0.0
        %3020 = vmatprep.subr.mxu0 0.0
        %3021 = vmatpush1.xpose.msra.mxu0 0.0
        %3022 = vmatprep.subr.mxu0 0.0
        %3023 = vmatpush1.xpose.msra.mxu0 0.0
        %3024 = vmatprep.subr.mxu0 0.0
        %3025 = vmatpush1.xpose.msra.mxu0 0.0
        %3026 = vmatprep.subr.mxu0 0.0
        %3027 = vmatpush1.xpose.msra.mxu0 0.0
        %3028 = vmatprep.subr.mxu0 0.0
        %3029 = vmatpush1.xpose.msra.mxu0 0.0
        %3030 = vmatprep.subr.mxu0 0.0
        %3031 = vmatpush1.xpose.msra.mxu0 0.0
        %3032 = vmatprep.subr.mxu0 0.0
        %3033 = vmatpush1.xpose.msra.mxu0 0.0
        %3034 = vmatprep.subr.mxu0 0.0
        %3035 = vmatpush1.xpose.msra.mxu0 0.0
        %3036 = vmatprep.subr.mxu0 0.0
        %3037 = vmatpush1.xpose.msra.mxu0 0.0
        %3038 = vmatprep.subr.mxu0 0.0
        %3039 = vmatpush1.xpose.msra.mxu0 0.0
        %3040 = vmatprep.subr.mxu0 0.0
        %3041 = vmatpush1.xpose.msra.mxu0 0.0
        %3042 = vmatprep.subr.mxu0 0.0
        %3043 = vmatpush1.xpose.msra.mxu0 0.0
        %3044 = vmatprep.subr.mxu0 0.0
        %3045 = vmatpush1.xpose.msra.mxu0 0.0
        %3046 = vmatprep.subr.mxu0 0.0
        %3047 = vmatpush1.xpose.msra.mxu0 0.0
        %3048 = vmatprep.subr.mxu0 0.0
        %3049 = vmatpush1.xpose.msra.mxu0 0.0
        %3050 = vmatprep.subr.mxu0 0.0
        %3051 = vmatpush1.xpose.msra.mxu0 0.0
        %3052 = vmatprep.subr.mxu0 0.0
        %3053 = vmatpush1.xpose.msra.mxu0 0.0
        %3054 = vmatprep.mubr.f32.mxu0 0.0
        %3055 = vmatmul.mubr.f32.gmra.mrb[0].mxu0 %v2848
        %v3056 = vpop.f32.mrb[0].mxu0
        %v3057 = vadd.f32 0.0, %v3056
        %v3058 = vpop.f32.mrb[0].mxu0
        %3059 = vdwg.mxu0
        %3060 = vmatprep.subr.mxu0 0.0
        %3061 = vmatpush1.xpose.msra.mxu0 %v999
        %3062 = vmatprep.subr.mxu0 0.0
        %3063 = vmatpush1.xpose.msra.mxu0 0.0
        %3064 = vmatprep.subr.mxu0 0.0
        %3065 = vmatpush1.xpose.msra.mxu0 0.0
        %3066 = vmatprep.subr.mxu0 0.0
        %3067 = vmatpush1.xpose.msra.mxu0 0.0
        %3068 = vmatprep.subr.mxu0 0.0
        %3069 = vmatpush1.xpose.msra.mxu0 0.0
        %3070 = vmatprep.subr.mxu0 0.0
        %3071 = vmatpush1.xpose.msra.mxu0 0.0
        %3072 = vmatprep.subr.mxu0 0.0
        %3073 = vmatpush1.xpose.msra.mxu0 0.0
        %3074 = vmatprep.subr.mxu0 0.0
        %3075 = vmatpush1.xpose.msra.mxu0 0.0
        %3076 = vmatprep.subr.mxu0 0.0
        %3077 = vmatpush1.xpose.msra.mxu0 0.0
        %3078 = vmatprep.subr.mxu0 0.0
        %3079 = vmatpush1.xpose.msra.mxu0 0.0
        %3080 = vmatprep.subr.mxu0 0.0
        %3081 = vmatpush1.xpose.msra.mxu0 0.0
        %3082 = vmatprep.subr.mxu0 0.0
        %3083 = vmatpush1.xpose.msra.mxu0 0.0
        %3084 = vmatprep.subr.mxu0 0.0
        %3085 = vmatpush1.xpose.msra.mxu0 0.0
        %3086 = vmatprep.subr.mxu0 0.0
        %3087 = vmatpush1.xpose.msra.mxu0 0.0
        %3088 = vmatprep.subr.mxu0 0.0
        %3089 = vmatpush1.xpose.msra.mxu0 0.0
        %3090 = vmatprep.subr.mxu0 0.0
        %3091 = vmatpush1.xpose.msra.mxu0 0.0
        %3092 = vmatprep.subr.mxu0 0.0
        %3093 = vmatpush1.xpose.msra.mxu0 0.0
        %3094 = vmatprep.subr.mxu0 0.0
        %3095 = vmatpush1.xpose.msra.mxu0 0.0
        %3096 = vmatprep.subr.mxu0 0.0
        %3097 = vmatpush1.xpose.msra.mxu0 0.0
        %3098 = vmatprep.subr.mxu0 0.0
        %3099 = vmatpush1.xpose.msra.mxu0 0.0
        %3100 = vmatprep.subr.mxu0 0.0
        %3101 = vmatpush1.xpose.msra.mxu0 0.0
        %3102 = vmatprep.subr.mxu0 0.0
        %3103 = vmatpush1.xpose.msra.mxu0 0.0
        %3104 = vmatprep.subr.mxu0 0.0
        %3105 = vmatpush1.xpose.msra.mxu0 0.0
        %3106 = vmatprep.subr.mxu0 0.0
        %3107 = vmatpush1.xpose.msra.mxu0 0.0
        %3108 = vmatprep.subr.mxu0 0.0
        %3109 = vmatpush1.xpose.msra.mxu0 0.0
        %3110 = vmatprep.subr.mxu0 0.0
        %3111 = vmatpush1.xpose.msra.mxu0 0.0
        %3112 = vmatprep.subr.mxu0 0.0
        %3113 = vmatpush1.xpose.msra.mxu0 0.0
        %3114 = vmatprep.subr.mxu0 0.0
        %3115 = vmatpush1.xpose.msra.mxu0 0.0
        %3116 = vmatprep.subr.mxu0 0.0
        %3117 = vmatpush1.xpose.msra.mxu0 0.0
        %3118 = vmatprep.subr.mxu0 0.0
        %3119 = vmatpush1.xpose.msra.mxu0 0.0
        %3120 = vmatprep.subr.mxu0 0.0
        %3121 = vmatpush1.xpose.msra.mxu0 0.0
        %3122 = vmatprep.subr.mxu0 0.0
        %3123 = vmatpush1.xpose.msra.mxu0 0.0
        %3124 = vmatprep.mubr.f32.mxu0 0.0
        %3125 = vmatmul.mubr.f32.gmra.mrb[0].mxu0 %v2849
        %v3126 = vpop.f32.mrb[0].mxu0
        %v3127 = vadd.f32 0.0, %v3126
        %v3128 = vpop.f32.mrb[0].mxu0
        %3129 = vdwg.mxu0
        %v3130 = vmul.f32 %v2800, %v2800
        %3131 = vmatprep.subr.mxu0 0.0
        %3132 = vmatpush1.msra.mxu0 %v1001
        %3133 = vmatprep.subr.mxu0 0.0
        %3134 = vmatpush1.msra.mxu0 %v1002
        %3135 = vmatprep.subr.mxu0 0.0
        %3136 = vmatpush1.msra.mxu0 %v1003
        %3137 = vmatprep.subr.mxu0 0.0
        %3138 = vmatpush1.msra.mxu0 %v1004
        %3139 = vmatprep.subr.mxu0 0.0
        %3140 = vmatpush1.msra.mxu0 %v1005
        %3141 = vmatprep.subr.mxu0 0.0
        %3142 = vmatpush1.msra.mxu0 %v1006
        %3143 = vmatprep.subr.mxu0 0.0
        %3144 = vmatpush1.msra.mxu0 %v1007
        %3145 = vmatprep.subr.mxu0 0.0
        %3146 = vmatpush1.msra.mxu0 %v1008
        %3147 = vmatprep.subr.mxu0 0.0
        %3148 = vmatpush1.msra.mxu0 %v1009
        %3149 = vmatprep.subr.mxu0 0.0
        %3150 = vmatpush1.msra.mxu0 %v1010
        %3151 = vmatprep.subr.mxu0 0.0
        %3152 = vmatpush1.msra.mxu0 %v1011
        %3153 = vmatprep.subr.mxu0 0.0
        %3154 = vmatpush1.msra.mxu0 %v1012
        %3155 = vmatprep.subr.mxu0 0.0
        %3156 = vmatpush1.msra.mxu0 %v1013
        %3157 = vmatprep.subr.mxu0 0.0
        %3158 = vmatpush1.msra.mxu0 %v1014
        %3159 = vmatprep.subr.mxu0 0.0
        %3160 = vmatpush1.msra.mxu0 %v1015
        %3161 = vmatprep.subr.mxu0 0.0
        %3162 = vmatpush1.msra.mxu0 %v1016
        %3163 = vmatprep.subr.mxu0 0.0
        %3164 = vmatpush1.msra.mxu0 0.0
        %3165 = vmatprep.subr.mxu0 0.0
        %3166 = vmatpush1.msra.mxu0 0.0
        %3167 = vmatprep.subr.mxu0 0.0
        %3168 = vmatpush1.msra.mxu0 0.0
        %3169 = vmatprep.subr.mxu0 0.0
        %3170 = vmatpush1.msra.mxu0 0.0
        %3171 = vmatprep.subr.mxu0 0.0
        %3172 = vmatpush1.msra.mxu0 0.0
        %3173 = vmatprep.subr.mxu0 0.0
        %3174 = vmatpush1.msra.mxu0 0.0
        %3175 = vmatprep.subr.mxu0 0.0
        %3176 = vmatpush1.msra.mxu0 0.0
        %3177 = vmatprep.subr.mxu0 0.0
        %3178 = vmatpush1.msra.mxu0 0.0
        %3179 = vmatprep.subr.mxu0 0.0
        %3180 = vmatpush1.msra.mxu0 0.0
        %3181 = vmatprep.subr.mxu0 0.0
        %3182 = vmatpush1.msra.mxu0 0.0
        %3183 = vmatprep.subr.mxu0 0.0
        %3184 = vmatpush1.msra.mxu0 0.0
        %3185 = vmatprep.subr.mxu0 0.0
        %3186 = vmatpush1.msra.mxu0 0.0
        %3187 = vmatprep.subr.mxu0 0.0
        %3188 = vmatpush1.msra.mxu0 0.0
        %3189 = vmatprep.subr.mxu0 0.0
        %3190 = vmatpush1.msra.mxu0 0.0
        %3191 = vmatprep.subr.mxu0 0.0
        %3192 = vmatpush1.msra.mxu0 0.0
        %3193 = vmatprep.subr.mxu0 0.0
        %3194 = vmatpush1.msra.mxu0 0.0
        %3195 = vmatprep.mubr.f32.mxu0 0.0
        %3196 = vmatmul.mubr.f32.gmra.mrb[0].mxu0 %v3130
        %v3197 = vpop.f32.mrb[0].mxu0
        %v3198 = vadd.f32 0.0, %v3197
        %v3199 = vpop.f32.mrb[0].mxu0
        %3200 = vdwg.mxu0
        %v3201 = vmul.f32 %v2917, 2.0
        %v3202 = vmul.f32 %v2987, 2.0
        %v3203 = vmul.f32 %v3057, 2.0
        %v3204 = vmul.f32 %v3127, 2.0
        %v3205 = vsub.f32 %v1089, %v3201
        %v3206 = vsub.f32 %v1159, %v3202
        %v3207 = vsub.f32 %v1229, %v3203
        %v3208 = vsub.f32 %v1299, %v3204
        %v3209 = vlaneseq
        %v3210 = vshrl.u32 %v3209, 7
        %v3211 = vsub.s32 0, %v3210
        %v3212 = vrot.slane %v3198, %v3211
        %3214 = vbcast.lane.b32.xlu0 %v3212, 256
        %v3215 = vpop.permute.xlu0 %3214
        %v3216 = vlaneseq
        %v3217 = vshrl.u32 %v3216, 7
        %v3218 = vsub.s32 1, %v3217
        %v3219 = vrot.slane %v3198, %v3218
        %3221 = vbcast.lane.b32.xlu0 %v3219, 256
        %v3222 = vpop.permute.xlu0 %3221
        %v3223 = vlaneseq
        %v3224 = vshrl.u32 %v3223, 7
        %v3225 = vsub.s32 2, %v3224
        %v3226 = vrot.slane %v3198, %v3225
        %3228 = vbcast.lane.b32.xlu0 %v3226, 256
        %v3229 = vpop.permute.xlu0 %3228
        %v3230 = vlaneseq
        %v3231 = vshrl.u32 %v3230, 7
        %v3232 = vsub.s32 3, %v3231
        %v3233 = vrot.slane %v3198, %v3232
        %3235 = vbcast.lane.b32.xlu0 %v3233, 256
        %v3236 = vpop.permute.xlu0 %3235
        %v3237 = vadd.f32 %v3205, %v3215
        %v3238 = vadd.f32 %v3206, %v3222
        %v3239 = vadd.f32 %v3207, %v3229
        %v3240 = vadd.f32 %v3208, %v3236
        %v3241 = vsub.f32 0.0, %v3237
        %v3242 = vsub.f32 0.0, %v3238
        %v3243 = vsub.f32 0.0, %v3239
        %v3244 = vsub.f32 0.0, %v3240
        %v3245 = vmul.f32 %v3241, 1.442695
        %v3246 = vpow.pop %v3245
        %v3247 = vmul.f32 %v3242, 1.442695
        %v3248 = vpow.pop %v3247
        %v3249 = vmul.f32 %v3243, 1.442695
        %v3250 = vpow.pop %v3249
        %v3251 = vmul.f32 %v3244, 1.442695
        %v3252 = vpow.pop %v3251
        %v3253 = vadd.f32 %v2257, %v3246
        %v3254 = vadd.f32 %v2258, %v3248
        %v3255 = vadd.f32 %v2259, %v3250
        %v3256 = vadd.f32 %v2260, %v3252
        %v3257 = vsel %vm2261, %v3253, -inf
        %3258 = vmax.xlane.f32.xlu0 %v3257
        %v3259 = vpop.xlane.xlu0 %3258
        %v3260 = vsel %vm2261, %v3254, -inf
        %3261 = vmax.xlane.f32.xlu0 %v3260
        %v3262 = vpop.xlane.xlu0 %3261
        %v3263 = vsel %vm2261, %v3255, -inf
        %3264 = vmax.xlane.f32.xlu0 %v3263
        %v3265 = vpop.xlane.xlu0 %3264
        %v3266 = vsel %vm2261, %v3256, -inf
        %3267 = vmax.xlane.f32.xlu0 %v3266
        %v3268 = vpop.xlane.xlu0 %3267
        %v3269 = vsub.f32 %v3253, %v3259
        %v3270 = vsub.f32 %v3254, %v3262
        %v3271 = vsub.f32 %v3255, %v3265
        %v3272 = vsub.f32 %v3256, %v3268
        %v3273 = vmul.f32 %v3269, 1.442695
        %v3274 = vpow.pop %v3273
        %v3275 = vmul.f32 %v3270, 1.442695
        %v3276 = vpow.pop %v3275
        %v3277 = vmul.f32 %v3271, 1.442695
        %v3278 = vpow.pop %v3277
        %v3279 = vmul.f32 %v3272, 1.442695
        %v3280 = vpow.pop %v3279
        %v3281 = vsel %vm2261, %v3274, 0.0
        %3282 = vadd.xlane.f32.xlu0 %v3281
        %v3283 = vpop.xlane.xlu0 %3282
        %v3284 = vsel %vm2261, %v3276, 0.0
        %3285 = vadd.xlane.f32.xlu0 %v3284
        %v3286 = vpop.xlane.xlu0 %3285
        %v3287 = vsel %vm2261, %v3278, 0.0
        %3288 = vadd.xlane.f32.xlu0 %v3287
        %v3289 = vpop.xlane.xlu0 %3288
        %v3290 = vsel %vm2261, %v3280, 0.0
        %3291 = vadd.xlane.f32.xlu0 %v3290
        %v3292 = vpop.xlane.xlu0 %3291
        %v3293 = vrcp.pop %v3283
        %v3294 = vmul.f32 %v3274, %v3293
        %v3295 = vrcp.pop %v3286
        %v3296 = vmul.f32 %v3276, %v3295
        %v3297 = vrcp.pop %v3289
        %v3298 = vmul.f32 %v3278, %v3297
        %v3299 = vrcp.pop %v3292
        %v3300 = vmul.f32 %v3280, %v3299
        %v3302 = vsel %vm1302, %v3294, 0
        %3304 = vmatprep.subr.mxu0 0.0
        %3305 = vmatpush1.msra.mxu0 %v996
        %3306 = vmatprep.subr.mxu0 0.0
        %3307 = vmatpush1.msra.mxu0 0.0
        %3308 = vmatprep.subr.mxu0 0.0
        %3309 = vmatpush1.msra.mxu0 0.0
        %3310 = vmatprep.subr.mxu0 0.0
        %3311 = vmatpush1.msra.mxu0 0.0
        %3312 = vmatprep.subr.mxu0 0.0
        %3313 = vmatpush1.msra.mxu0 0.0
        %3314 = vmatprep.subr.mxu0 0.0
        %3315 = vmatpush1.msra.mxu0 0.0
        %3316 = vmatprep.subr.mxu0 0.0
        %3317 = vmatpush1.msra.mxu0 0.0
        %3318 = vmatprep.subr.mxu0 0.0
        %3319 = vmatpush1.msra.mxu0 0.0
        %3320 = vmatprep.subr.mxu0 0.0
        %3321 = vmatpush1.msra.mxu0 0.0
        %3322 = vmatprep.subr.mxu0 0.0
        %3323 = vmatpush1.msra.mxu0 0.0
        %3324 = vmatprep.subr.mxu0 0.0
        %3325 = vmatpush1.msra.mxu0 0.0
        %3326 = vmatprep.subr.mxu0 0.0
        %3327 = vmatpush1.msra.mxu0 0.0
        %3328 = vmatprep.subr.mxu0 0.0
        %3329 = vmatpush1.msra.mxu0 0.0
        %3330 = vmatprep.subr.mxu0 0.0
        %3331 = vmatpush1.msra.mxu0 0.0
        %3332 = vmatprep.subr.mxu0 0.0
        %3333 = vmatpush1.msra.mxu0 0.0
        %3334 = vmatprep.subr.mxu0 0.0
        %3335 = vmatpush1.msra.mxu0 0.0
        %3336 = vmatprep.subr.mxu0 0.0
        %3337 = vmatpush1.msra.mxu0 0.0
        %3338 = vmatprep.subr.mxu0 0.0
        %3339 = vmatpush1.msra.mxu0 0.0
        %3340 = vmatprep.subr.mxu0 0.0
        %3341 = vmatpush1.msra.mxu0 0.0
        %3342 = vmatprep.subr.mxu0 0.0
        %3343 = vmatpush1.msra.mxu0 0.0
        %3344 = vmatprep.subr.mxu0 0.0
        %3345 = vmatpush1.msra.mxu0 0.0
        %3346 = vmatprep.subr.mxu0 0.0
        %3347 = vmatpush1.msra.mxu0 0.0
        %3348 = vmatprep.subr.mxu0 0.0
        %3349 = vmatpush1.msra.mxu0 0.0
        %3350 = vmatprep.subr.mxu0 0.0
        %3351 = vmatpush1.msra.mxu0 0.0
        %3352 = vmatprep.subr.mxu0 0.0
        %3353 = vmatpush1.msra.mxu0 0.0
        %3354 = vmatprep.subr.mxu0 0.0
        %3355 = vmatpush1.msra.mxu0 0.0
        %3356 = vmatprep.subr.mxu0 0.0
        %3357 = vmatpush1.msra.mxu0 0.0
        %3358 = vmatprep.subr.mxu0 0.0
        %3359 = vmatpush1.msra.mxu0 0.0
        %3360 = vmatprep.subr.mxu0 0.0
        %3361 = vmatpush1.msra.mxu0 0.0
        %3362 = vmatprep.subr.mxu0 0.0
        %3363 = vmatpush1.msra.mxu0 0.0
        %3364 = vmatprep.subr.mxu0 0.0
        %3365 = vmatpush1.msra.mxu0 0.0
        %3366 = vmatprep.subr.mxu0 0.0
        %3367 = vmatpush1.msra.mxu0 0.0
        %3368 = vmatprep.mubr.f32.mxu0 0.0
        %3369 = vmatmul.mubr.f32.gmra.mrb[0].mxu0 %v3302
        %v3370 = vpop.f32.mrb[0].mxu0
        %v3371 = vadd.f32 0.0, %v3370
        %v3372 = vpop.f32.mrb[0].mxu0
        %3373 = vdwg.mxu0
        %v3375 = vsel %vm1302, %v3296, 0
        %3377 = vmatprep.subr.mxu0 0.0
        %3378 = vmatpush1.msra.mxu0 %v997
        %3379 = vmatprep.subr.mxu0 0.0
        %3380 = vmatpush1.msra.mxu0 0.0
        %3381 = vmatprep.subr.mxu0 0.0
        %3382 = vmatpush1.msra.mxu0 0.0
        %3383 = vmatprep.subr.mxu0 0.0
        %3384 = vmatpush1.msra.mxu0 0.0
        %3385 = vmatprep.subr.mxu0 0.0
        %3386 = vmatpush1.msra.mxu0 0.0
        %3387 = vmatprep.subr.mxu0 0.0
        %3388 = vmatpush1.msra.mxu0 0.0
        %3389 = vmatprep.subr.mxu0 0.0
        %3390 = vmatpush1.msra.mxu0 0.0
        %3391 = vmatprep.subr.mxu0 0.0
        %3392 = vmatpush1.msra.mxu0 0.0
        %3393 = vmatprep.subr.mxu0 0.0
        %3394 = vmatpush1.msra.mxu0 0.0
        %3395 = vmatprep.subr.mxu0 0.0
        %3396 = vmatpush1.msra.mxu0 0.0
        %3397 = vmatprep.subr.mxu0 0.0
        %3398 = vmatpush1.msra.mxu0 0.0
        %3399 = vmatprep.subr.mxu0 0.0
        %3400 = vmatpush1.msra.mxu0 0.0
        %3401 = vmatprep.subr.mxu0 0.0
        %3402 = vmatpush1.msra.mxu0 0.0
        %3403 = vmatprep.subr.mxu0 0.0
        %3404 = vmatpush1.msra.mxu0 0.0
        %3405 = vmatprep.subr.mxu0 0.0
        %3406 = vmatpush1.msra.mxu0 0.0
        %3407 = vmatprep.subr.mxu0 0.0
        %3408 = vmatpush1.msra.mxu0 0.0
        %3409 = vmatprep.subr.mxu0 0.0
        %3410 = vmatpush1.msra.mxu0 0.0
        %3411 = vmatprep.subr.mxu0 0.0
        %3412 = vmatpush1.msra.mxu0 0.0
        %3413 = vmatprep.subr.mxu0 0.0
        %3414 = vmatpush1.msra.mxu0 0.0
        %3415 = vmatprep.subr.mxu0 0.0
        %3416 = vmatpush1.msra.mxu0 0.0
        %3417 = vmatprep.subr.mxu0 0.0
        %3418 = vmatpush1.msra.mxu0 0.0
        %3419 = vmatprep.subr.mxu0 0.0
        %3420 = vmatpush1.msra.mxu0 0.0
        %3421 = vmatprep.subr.mxu0 0.0
        %3422 = vmatpush1.msra.mxu0 0.0
        %3423 = vmatprep.subr.mxu0 0.0
        %3424 = vmatpush1.msra.mxu0 0.0
        %3425 = vmatprep.subr.mxu0 0.0
        %3426 = vmatpush1.msra.mxu0 0.0
        %3427 = vmatprep.subr.mxu0 0.0
        %3428 = vmatpush1.msra.mxu0 0.0
        %3429 = vmatprep.subr.mxu0 0.0
        %3430 = vmatpush1.msra.mxu0 0.0
        %3431 = vmatprep.subr.mxu0 0.0
        %3432 = vmatpush1.msra.mxu0 0.0
        %3433 = vmatprep.subr.mxu0 0.0
        %3434 = vmatpush1.msra.mxu0 0.0
        %3435 = vmatprep.subr.mxu0 0.0
        %3436 = vmatpush1.msra.mxu0 0.0
        %3437 = vmatprep.subr.mxu0 0.0
        %3438 = vmatpush1.msra.mxu0 0.0
        %3439 = vmatprep.subr.mxu0 0.0
        %3440 = vmatpush1.msra.mxu0 0.0
        %3441 = vmatprep.mubr.f32.mxu0 0.0
        %3442 = vmatmul.mubr.f32.gmra.mrb[0].mxu0 %v3375
        %v3443 = vpop.f32.mrb[0].mxu0
        %v3444 = vadd.f32 0.0, %v3443
        %v3445 = vpop.f32.mrb[0].mxu0
        %3446 = vdwg.mxu0
        %v3448 = vsel %vm1302, %v3298, 0
        %3450 = vmatprep.subr.mxu0 0.0
        %3451 = vmatpush1.msra.mxu0 %v998
        %3452 = vmatprep.subr.mxu0 0.0
        %3453 = vmatpush1.msra.mxu0 0.0
        %3454 = vmatprep.subr.mxu0 0.0
        %3455 = vmatpush1.msra.mxu0 0.0
        %3456 = vmatprep.subr.mxu0 0.0
        %3457 = vmatpush1.msra.mxu0 0.0
        %3458 = vmatprep.subr.mxu0 0.0
        %3459 = vmatpush1.msra.mxu0 0.0
        %3460 = vmatprep.subr.mxu0 0.0
        %3461 = vmatpush1.msra.mxu0 0.0
        %3462 = vmatprep.subr.mxu0 0.0
        %3463 = vmatpush1.msra.mxu0 0.0
        %3464 = vmatprep.subr.mxu0 0.0
        %3465 = vmatpush1.msra.mxu0 0.0
        %3466 = vmatprep.subr.mxu0 0.0
        %3467 = vmatpush1.msra.mxu0 0.0
        %3468 = vmatprep.subr.mxu0 0.0
        %3469 = vmatpush1.msra.mxu0 0.0
        %3470 = vmatprep.subr.mxu0 0.0
        %3471 = vmatpush1.msra.mxu0 0.0
        %3472 = vmatprep.subr.mxu0 0.0
        %3473 = vmatpush1.msra.mxu0 0.0
        %3474 = vmatprep.subr.mxu0 0.0
        %3475 = vmatpush1.msra.mxu0 0.0
        %3476 = vmatprep.subr.mxu0 0.0
        %3477 = vmatpush1.msra.mxu0 0.0
        %3478 = vmatprep.subr.mxu0 0.0
        %3479 = vmatpush1.msra.mxu0 0.0
        %3480 = vmatprep.subr.mxu0 0.0
        %3481 = vmatpush1.msra.mxu0 0.0
        %3482 = vmatprep.subr.mxu0 0.0
        %3483 = vmatpush1.msra.mxu0 0.0
        %3484 = vmatprep.subr.mxu0 0.0
        %3485 = vmatpush1.msra.mxu0 0.0
        %3486 = vmatprep.subr.mxu0 0.0
        %3487 = vmatpush1.msra.mxu0 0.0
        %3488 = vmatprep.subr.mxu0 0.0
        %3489 = vmatpush1.msra.mxu0 0.0
        %3490 = vmatprep.subr.mxu0 0.0
        %3491 = vmatpush1.msra.mxu0 0.0
        %3492 = vmatprep.subr.mxu0 0.0
        %3493 = vmatpush1.msra.mxu0 0.0
        %3494 = vmatprep.subr.mxu0 0.0
        %3495 = vmatpush1.msra.mxu0 0.0
        %3496 = vmatprep.subr.mxu0 0.0
        %3497 = vmatpush1.msra.mxu0 0.0
        %3498 = vmatprep.subr.mxu0 0.0
        %3499 = vmatpush1.msra.mxu0 0.0
        %3500 = vmatprep.subr.mxu0 0.0
        %3501 = vmatpush1.msra.mxu0 0.0
        %3502 = vmatprep.subr.mxu0 0.0
        %3503 = vmatpush1.msra.mxu0 0.0
        %3504 = vmatprep.subr.mxu0 0.0
        %3505 = vmatpush1.msra.mxu0 0.0
        %3506 = vmatprep.subr.mxu0 0.0
        %3507 = vmatpush1.msra.mxu0 0.0
        %3508 = vmatprep.subr.mxu0 0.0
        %3509 = vmatpush1.msra.mxu0 0.0
        %3510 = vmatprep.subr.mxu0 0.0
        %3511 = vmatpush1.msra.mxu0 0.0
        %3512 = vmatprep.subr.mxu0 0.0
        %3513 = vmatpush1.msra.mxu0 0.0
        %3514 = vmatprep.mubr.f32.mxu0 0.0
        %3515 = vmatmul.mubr.f32.gmra.mrb[0].mxu0 %v3448
        %v3516 = vpop.f32.mrb[0].mxu0
        %v3517 = vadd.f32 0.0, %v3516
        %v3518 = vpop.f32.mrb[0].mxu0
        %3519 = vdwg.mxu0
        %v3521 = vsel %vm1302, %v3300, 0
        %3523 = vmatprep.subr.mxu0 0.0
        %3524 = vmatpush1.msra.mxu0 %v999
        %3525 = vmatprep.subr.mxu0 0.0
        %3526 = vmatpush1.msra.mxu0 0.0
        %3527 = vmatprep.subr.mxu0 0.0
        %3528 = vmatpush1.msra.mxu0 0.0
        %3529 = vmatprep.subr.mxu0 0.0
        %3530 = vmatpush1.msra.mxu0 0.0
        %3531 = vmatprep.subr.mxu0 0.0
        %3532 = vmatpush1.msra.mxu0 0.0
        %3533 = vmatprep.subr.mxu0 0.0
        %3534 = vmatpush1.msra.mxu0 0.0
        %3535 = vmatprep.subr.mxu0 0.0
        %3536 = vmatpush1.msra.mxu0 0.0
        %3537 = vmatprep.subr.mxu0 0.0
        %3538 = vmatpush1.msra.mxu0 0.0
        %3539 = vmatprep.subr.mxu0 0.0
        %3540 = vmatpush1.msra.mxu0 0.0
        %3541 = vmatprep.subr.mxu0 0.0
        %3542 = vmatpush1.msra.mxu0 0.0
        %3543 = vmatprep.subr.mxu0 0.0
        %3544 = vmatpush1.msra.mxu0 0.0
        %3545 = vmatprep.subr.mxu0 0.0
        %3546 = vmatpush1.msra.mxu0 0.0
        %3547 = vmatprep.subr.mxu0 0.0
        %3548 = vmatpush1.msra.mxu0 0.0
        %3549 = vmatprep.subr.mxu0 0.0
        %3550 = vmatpush1.msra.mxu0 0.0
        %3551 = vmatprep.subr.mxu0 0.0
        %3552 = vmatpush1.msra.mxu0 0.0
        %3553 = vmatprep.subr.mxu0 0.0
        %3554 = vmatpush1.msra.mxu0 0.0
        %3555 = vmatprep.subr.mxu0 0.0
        %3556 = vmatpush1.msra.mxu0 0.0
        %3557 = vmatprep.subr.mxu0 0.0
        %3558 = vmatpush1.msra.mxu0 0.0
        %3559 = vmatprep.subr.mxu0 0.0
        %3560 = vmatpush1.msra.mxu0 0.0
        %3561 = vmatprep.subr.mxu0 0.0
        %3562 = vmatpush1.msra.mxu0 0.0
        %3563 = vmatprep.subr.mxu0 0.0
        %3564 = vmatpush1.msra.mxu0 0.0
        %3565 = vmatprep.subr.mxu0 0.0
        %3566 = vmatpush1.msra.mxu0 0.0
        %3567 = vmatprep.subr.mxu0 0.0
        %3568 = vmatpush1.msra.mxu0 0.0
        %3569 = vmatprep.subr.mxu0 0.0
        %3570 = vmatpush1.msra.mxu0 0.0
        %3571 = vmatprep.subr.mxu0 0.0
        %3572 = vmatpush1.msra.mxu0 0.0
        %3573 = vmatprep.subr.mxu0 0.0
        %3574 = vmatpush1.msra.mxu0 0.0
        %3575 = vmatprep.subr.mxu0 0.0
        %3576 = vmatpush1.msra.mxu0 0.0
        %3577 = vmatprep.subr.mxu0 0.0
        %3578 = vmatpush1.msra.mxu0 0.0
        %3579 = vmatprep.subr.mxu0 0.0
        %3580 = vmatpush1.msra.mxu0 0.0
        %3581 = vmatprep.subr.mxu0 0.0
        %3582 = vmatpush1.msra.mxu0 0.0
        %3583 = vmatprep.subr.mxu0 0.0
        %3584 = vmatpush1.msra.mxu0 0.0
        %3585 = vmatprep.subr.mxu0 0.0
        %3586 = vmatpush1.msra.mxu0 0.0
        %3587 = vmatprep.mubr.f32.mxu0 0.0
        %3588 = vmatmul.mubr.f32.gmra.mrb[0].mxu0 %v3521
        %v3589 = vpop.f32.mrb[0].mxu0
        %v3590 = vadd.f32 0.0, %v3589
        %v3591 = vpop.f32.mrb[0].mxu0
        %3592 = vdwg.mxu0
        %v3593 = vmul.f32 %v3371, %v1000
        %v3594 = vmul.f32 %v3444, %v1000
        %v3595 = vmul.f32 %v3517, %v1000
        %v3596 = vmul.f32 %v3590, %v1000
        %v3597 = vsel %vm1595, %v3593, 0.0
        %v3598 = vrot.slane %v3597, 4
        %v3599 = vadd.f32 %v3597, %v3598
        %v3600 = vrot.slane %v3599, 2
        %v3601 = vadd.f32 %v3599, %v3600
        %v3602 = vrot.slane %v3601, 1
        %v3603 = vadd.f32 %v3601, %v3602
        %v3604 = vsel %vm1595, %v3594, 0.0
        %v3605 = vrot.slane %v3604, 4
        %v3606 = vadd.f32 %v3604, %v3605
        %v3607 = vrot.slane %v3606, 2
        %v3608 = vadd.f32 %v3606, %v3607
        %v3609 = vrot.slane %v3608, 1
        %v3610 = vadd.f32 %v3608, %v3609
        %v3611 = vsel %vm1595, %v3595, 0.0
        %v3612 = vrot.slane %v3611, 4
        %v3613 = vadd.f32 %v3611, %v3612
        %v3614 = vrot.slane %v3613, 2
        %v3615 = vadd.f32 %v3613, %v3614
        %v3616 = vrot.slane %v3615, 1
        %v3617 = vadd.f32 %v3615, %v3616
        %v3618 = vsel %vm1595, %v3596, 0.0
        %v3619 = vrot.slane %v3618, 4
        %v3620 = vadd.f32 %v3618, %v3619
        %v3621 = vrot.slane %v3620, 2
        %v3622 = vadd.f32 %v3620, %v3621
        %v3623 = vrot.slane %v3622, 1
        %v3624 = vadd.f32 %v3622, %v3623
        %v3625 = vmul.f32 %v3603, %v3603
        %v3626 = vmul.f32 %v3610, %v3610
        %v3627 = vmul.f32 %v3617, %v3617
        %v3628 = vmul.f32 %v3624, %v3624
        %v3633 = vsel %vm941, %v3626, %v3625
        %v3634 = vsel %vm944, %v3627, %v3633
        %v3635 = vsel %vm947, %v3628, %v3634
        %3637 = vmatprep.subr.mxu0 0.0
        %3638 = vmatpush1.msra.mxu0 %v1001
        %3639 = vmatprep.subr.mxu0 0.0
        %3640 = vmatpush1.msra.mxu0 %v1002
        %3641 = vmatprep.subr.mxu0 0.0
        %3642 = vmatpush1.msra.mxu0 %v1003
        %3643 = vmatprep.subr.mxu0 0.0
        %3644 = vmatpush1.msra.mxu0 %v1004
        %3645 = vmatprep.subr.mxu0 0.0
        %3646 = vmatpush1.msra.mxu0 %v1005
        %3647 = vmatprep.subr.mxu0 0.0
        %3648 = vmatpush1.msra.mxu0 %v1006
        %3649 = vmatprep.subr.mxu0 0.0
        %3650 = vmatpush1.msra.mxu0 %v1007
        %3651 = vmatprep.subr.mxu0 0.0
        %3652 = vmatpush1.msra.mxu0 %v1008
        %3653 = vmatprep.subr.mxu0 0.0
        %3654 = vmatpush1.msra.mxu0 %v1009
        %3655 = vmatprep.subr.mxu0 0.0
        %3656 = vmatpush1.msra.mxu0 %v1010
        %3657 = vmatprep.subr.mxu0 0.0
        %3658 = vmatpush1.msra.mxu0 %v1011
        %3659 = vmatprep.subr.mxu0 0.0
        %3660 = vmatpush1.msra.mxu0 %v1012
        %3661 = vmatprep.subr.mxu0 0.0
        %3662 = vmatpush1.msra.mxu0 %v1013
        %3663 = vmatprep.subr.mxu0 0.0
        %3664 = vmatpush1.msra.mxu0 %v1014
        %3665 = vmatprep.subr.mxu0 0.0
        %3666 = vmatpush1.msra.mxu0 %v1015
        %3667 = vmatprep.subr.mxu0 0.0
        %3668 = vmatpush1.msra.mxu0 %v1016
        %3669 = vmatprep.subr.mxu0 0.0
        %3670 = vmatpush1.msra.mxu0 0.0
        %3671 = vmatprep.subr.mxu0 0.0
        %3672 = vmatpush1.msra.mxu0 0.0
        %3673 = vmatprep.subr.mxu0 0.0
        %3674 = vmatpush1.msra.mxu0 0.0
        %3675 = vmatprep.subr.mxu0 0.0
        %3676 = vmatpush1.msra.mxu0 0.0
        %3677 = vmatprep.subr.mxu0 0.0
        %3678 = vmatpush1.msra.mxu0 0.0
        %3679 = vmatprep.subr.mxu0 0.0
        %3680 = vmatpush1.msra.mxu0 0.0
        %3681 = vmatprep.subr.mxu0 0.0
        %3682 = vmatpush1.msra.mxu0 0.0
        %3683 = vmatprep.subr.mxu0 0.0
        %3684 = vmatpush1.msra.mxu0 0.0
        %3685 = vmatprep.subr.mxu0 0.0
        %3686 = vmatpush1.msra.mxu0 0.0
        %3687 = vmatprep.subr.mxu0 0.0
        %3688 = vmatpush1.msra.mxu0 0.0
        %3689 = vmatprep.subr.mxu0 0.0
        %3690 = vmatpush1.msra.mxu0 0.0
        %3691 = vmatprep.subr.mxu0 0.0
        %3692 = vmatpush1.msra.mxu0 0.0
        %3693 = vmatprep.subr.mxu0 0.0
        %3694 = vmatpush1.msra.mxu0 0.0
        %3695 = vmatprep.subr.mxu0 0.0
        %3696 = vmatpush1.msra.mxu0 0.0
        %3697 = vmatprep.subr.mxu0 0.0
        %3698 = vmatpush1.msra.mxu0 0.0
        %3699 = vmatprep.subr.mxu0 0.0
        %3700 = vmatpush1.msra.mxu0 0.0
        %3701 = vmatprep.mubr.f32.mxu0 0.0
        %3702 = vmatmul.mubr.f32.gmra.mrb[0].mxu0 %v3635
        %v3703 = vpop.f32.mrb[0].mxu0
        %v3704 = vadd.f32 0.0, %v3703
        %v3705 = vpop.f32.mrb[0].mxu0
        %3706 = vdwg.mxu0
        %v3707 = vadd.f32 %v3704, 1.0
        %v3708 = vrcp.pop %v3707
        %v3709 = vmul.f32 %v3704, %v3708
        %v3710 = vadd.f32 %v3704, 1e-12
        %v3711 = vrsqrt.pop %v3710
        %v3712 = vmul.f32 %v3709, %v3711
        %v3714 = vsel %vm1712, %v3712, 0
        %3716 = vmatprep.subr.mxu0 0.0
        %3717 = vmatpush1.msra.mxu0 %v1717
        %3718 = vmatprep.subr.mxu0 0.0
        %3719 = vmatpush1.msra.mxu0 0.0
        %3720 = vmatprep.subr.mxu0 0.0
        %3721 = vmatpush1.msra.mxu0 0.0
        %3722 = vmatprep.subr.mxu0 0.0
        %3723 = vmatpush1.msra.mxu0 0.0
        %3724 = vmatprep.subr.mxu0 0.0
        %3725 = vmatpush1.msra.mxu0 0.0
        %3726 = vmatprep.subr.mxu0 0.0
        %3727 = vmatpush1.msra.mxu0 0.0
        %3728 = vmatprep.subr.mxu0 0.0
        %3729 = vmatpush1.msra.mxu0 0.0
        %3730 = vmatprep.subr.mxu0 0.0
        %3731 = vmatpush1.msra.mxu0 0.0
        %3732 = vmatprep.subr.mxu0 0.0
        %3733 = vmatpush1.msra.mxu0 0.0
        %3734 = vmatprep.subr.mxu0 0.0
        %3735 = vmatpush1.msra.mxu0 0.0
        %3736 = vmatprep.subr.mxu0 0.0
        %3737 = vmatpush1.msra.mxu0 0.0
        %3738 = vmatprep.subr.mxu0 0.0
        %3739 = vmatpush1.msra.mxu0 0.0
        %3740 = vmatprep.subr.mxu0 0.0
        %3741 = vmatpush1.msra.mxu0 0.0
        %3742 = vmatprep.subr.mxu0 0.0
        %3743 = vmatpush1.msra.mxu0 0.0
        %3744 = vmatprep.subr.mxu0 0.0
        %3745 = vmatpush1.msra.mxu0 0.0
        %3746 = vmatprep.subr.mxu0 0.0
        %3747 = vmatpush1.msra.mxu0 0.0
        %3748 = vmatprep.subr.mxu0 0.0
        %3749 = vmatpush1.msra.mxu0 0.0
        %3750 = vmatprep.subr.mxu0 0.0
        %3751 = vmatpush1.msra.mxu0 0.0
        %3752 = vmatprep.subr.mxu0 0.0
        %3753 = vmatpush1.msra.mxu0 0.0
        %3754 = vmatprep.subr.mxu0 0.0
        %3755 = vmatpush1.msra.mxu0 0.0
        %3756 = vmatprep.subr.mxu0 0.0
        %3757 = vmatpush1.msra.mxu0 0.0
        %3758 = vmatprep.subr.mxu0 0.0
        %3759 = vmatpush1.msra.mxu0 0.0
        %3760 = vmatprep.subr.mxu0 0.0
        %3761 = vmatpush1.msra.mxu0 0.0
        %3762 = vmatprep.subr.mxu0 0.0
        %3763 = vmatpush1.msra.mxu0 0.0
        %3764 = vmatprep.subr.mxu0 0.0
        %3765 = vmatpush1.msra.mxu0 0.0
        %3766 = vmatprep.subr.mxu0 0.0
        %3767 = vmatpush1.msra.mxu0 0.0
        %3768 = vmatprep.subr.mxu0 0.0
        %3769 = vmatpush1.msra.mxu0 0.0
        %3770 = vmatprep.subr.mxu0 0.0
        %3771 = vmatpush1.msra.mxu0 0.0
        %3772 = vmatprep.subr.mxu0 0.0
        %3773 = vmatpush1.msra.mxu0 0.0
        %3774 = vmatprep.subr.mxu0 0.0
        %3775 = vmatpush1.msra.mxu0 0.0
        %3776 = vmatprep.subr.mxu0 0.0
        %3777 = vmatpush1.msra.mxu0 0.0
        %3778 = vmatprep.subr.mxu0 0.0
        %3779 = vmatpush1.msra.mxu0 0.0
        %3780 = vmatprep.mubr.f32.mxu0 0.0
        %3781 = vmatmul.mubr.f32.gmra.mrb[0].mxu0 %v3714
        %v3782 = vpop.f32.mrb[0].mxu0
        %v3783 = vadd.f32 0.0, %v3782
        %v3784 = vpop.f32.mrb[0].mxu0
        %3785 = vdwg.mxu0
        %v3790 = vsel %vm941, %v3610, %v3603
        %v3791 = vsel %vm944, %v3617, %v3790
        %v3792 = vsel %vm947, %v3624, %v3791
        %v3794 = vmul.f32 %v3783, %v3792
        %v3795 = vadd.f32 %v3794, %v1802
        %3796 = vst [vmem:[%s306] sm:$0xf] %v3795
        %s3797 = sand.u32 %s138, 1
        %s3798 = scalar_lea.sflag [#allocation6], %s3797
        %s3799 = sand.u32 %s138, 1
        %s3800 = smul.addr %s3799, 4
        %s3801 = scalar_lea.vmem [#allocation7], %s3800
        // Predicated region
        $region86: #{tpu_custom_call.1} parent=76 // pred_check
          %p3802 = pneg %p148
        $region87: #{tpu_custom_call.1} parent=76 // pred_check_branch
          %3804 = sbr.rel (%p3802) target = $region89
        $region88: #{tpu_custom_call.1} parent=76 // pred_region
          %s3806 = ssub.s32 64, 64
          %3807 = vsyncadd %s3798, %s3806
          %s3808 = smul.addr %s20, 64
          %s3809 = scalar_lea.hbm %s5, %s3808
          %s3811 = sshll.u32 %s3801, 4
          %s3812 = int_to_ptr.vmem [resolvable:$true] %s3811
          %3814 = dma.vmem_to_hbm [thread:$0]  %s3812, 64, %s3809, %s3798
        $region89: #{tpu_custom_call.1} parent=76 // pred_fallthru
          _
      $region77: #{tpu_custom_call.1} parent=5 // pred_fallthru
        _
      %p3815 = scmp.le.s32.totalorder 2, %s15
      // Predicated region
      $region90: #{tpu_custom_call.1} parent=5 // pred_check
        %p3816 = pneg %p3815
      $region91: #{tpu_custom_call.1} parent=5 // pred_check_branch
        %3818 = sbr.rel (%p3816) target = $region93
      $region92: #{tpu_custom_call.1} parent=5 // pred_region
        %s3819 = ssub.s32 %s15, 2
        // Predicated region
        $region94: #{tpu_custom_call.1} parent=92 // pred_check
          %p3820 = pneg %p154
        $region95: #{tpu_custom_call.1} parent=92 // pred_check_branch
          %3822 = sbr.rel (%p3820) target = $region97
        $region96: #{tpu_custom_call.1} parent=92 // pred_region
          %s3823 = sand.u32 %s139, 1
          %s3824 = scalar_lea.sflag [#allocation6], %s3823
          %s3825 = sand.u32 %s139, 1
          %s3826 = smul.addr %s3825, 4
          %s3827 = scalar_lea.vmem [#allocation7], %s3826
          %3828 = dma.done %s3824, 64
        $region97: #{tpu_custom_call.1} parent=92 // pred_fallthru
          _
      $region93: #{tpu_custom_call.1} parent=5 // pred_fallthru
        _
    $region6: #{tpu_custom_call.1} parent=1 // loop_footer
      %s19 = sadd.s32 1, %s15
    $region7: #{tpu_custom_call.1} parent=1 // loop_footer_branch
      %14 = sbr.rel target = $region3
    $region8: #{tpu_custom_call.1} parent=1 // loop_exit
      _
    %3829 = vsyncpa [#allocation5], 1
    %s3830 = scalar_lea.sflag [#allocation5], 1
    %3831 = vsyncpa %s3830, 1
    %3832 = vsyncpa [#allocation6], 1
    %s3833 = scalar_lea.sflag [#allocation6], 1
    %3834 = vsyncpa %s3833, 1

</llo_original>
